<compile_context>
chip_gen: v5e
topology: v5e:2x2
jax: 0.10.0
libtpu: 0.0.40
codegen_flags: <defaults>
</compile_context>

<pallas_src>
import functools

import jax
import jax.numpy as jnp
from jax import lax
from jax.experimental import pallas as pl
from jax.experimental.pallas import tpu as pltpu


MATMUL_DTYPE = jnp.bfloat16   # MXU operand dtype (f32 accumulation kept)
ACT_DTYPE = jnp.bfloat16      # inter-stage activation storage dtype

_VMEM_LIMIT_CACHE = None


def _vmem_limit_bytes():
    """Per-generation VMEM budget (~45% of capacity, clamped)."""
    global _VMEM_LIMIT_CACHE
    if _VMEM_LIMIT_CACHE is None:
        try:
            cap = int(pltpu.get_tpu_info().vmem_capacity_bytes)
        except Exception:
            cap = 64 * 1024 * 1024          # conservative (v7x-sized) fallback
        _VMEM_LIMIT_CACHE = max(16 << 20, min(int(cap * 0.45), 96 << 20))
    return _VMEM_LIMIT_CACHE


def _compiler_params(*semantics):
    return pltpu.CompilerParams(dimension_semantics=tuple(semantics),
                                vmem_limit_bytes=_vmem_limit_bytes())


def _cost(flops, bytes_accessed):
    return pl.CostEstimate(flops=int(flops), transcendentals=0,
                           bytes_accessed=int(bytes_accessed))


def _round_up(x, m):
    return (x + m - 1) // m * m


def _pick_m_tile(m, cap=1024):
    """Row-tile size: sublane-aligned, bounded for VMEM, and sized so realistic
    M get >=4 grid steps (pipelining + both v7x TensorCores)."""
    t = min(cap, max(128, _round_up(pl.cdiv(m, 4), 128)))
    t = min(t, _round_up(m, 8))
    return max(t, 8)


def _pick_row_tile(h, cap=32):
    """Largest divisor of h <= cap, preferring >=2 row tiles when h allows."""
    cap = max(1, min(cap, h // 2 if h >= 4 else h))
    for t in range(min(cap, h), 0, -1):
        if h % t == 0:
            return t
    return h


# ---------------------------------------------------------------------------
# Pallas kernels
# ---------------------------------------------------------------------------

def _conv1x1_bn_relu_kernel(x_ref, w_ref, s_ref, b_ref, o_ref):
    # x: (tm, Cin) bf16; w: (Cin, Cout) bf16; s/b: (1, Cout) f32
    y = jnp.dot(x_ref[...], w_ref[...], preferred_element_type=jnp.float32)
    y = jnp.maximum(y * s_ref[...] + b_ref[...], 0.0)
    o_ref[...] = y.astype(o_ref.dtype)


def conv1x1_bn_relu(x2d, w, scale, bias, *, out_dtype=ACT_DTYPE):
    M, Cin = x2d.shape
    Cout = w.shape[1]
    tm = _pick_m_tile(M)
    if x2d.dtype != MATMUL_DTYPE:
        x2d = x2d.astype(MATMUL_DTYPE)
    w = w.astype(MATMUL_DTYPE)
    return pl.pallas_call(
        _conv1x1_bn_relu_kernel,
        grid=(pl.cdiv(M, tm),),
        in_specs=[
            pl.BlockSpec((tm, Cin), lambda i: (i, 0)),
            pl.BlockSpec((Cin, Cout), lambda i: (0, 0)),   # weight stays resident
            pl.BlockSpec((1, Cout), lambda i: (0, 0)),
            pl.BlockSpec((1, Cout), lambda i: (0, 0)),
        ],
        out_specs=pl.BlockSpec((tm, Cout), lambda i: (i, 0)),
        out_shape=jax.ShapeDtypeStruct((M, Cout), out_dtype),
        compiler_params=_compiler_params("parallel"),
        cost_estimate=_cost(2 * M * Cin * Cout,
                            2 * M * Cin + 2 * Cin * Cout + 2 * M * Cout + 8 * Cout),
    )(x2d, w, scale, bias)


def _pooled_conv1x1_kernel(x_ref, w_ref, s_ref, b_ref, o_ref):
    # x: (1, tm, Cin) bf16; w: (1, Cin, bp) bf16; s/b: (1, 1, bp) f32
    tm, cin = x_ref.shape[1], x_ref.shape[2]
    bp = w_ref.shape[2]
    y = jnp.dot(x_ref[...].reshape(tm, cin), w_ref[...].reshape(cin, bp),
                preferred_element_type=jnp.float32)
    y = jnp.maximum(y * s_ref[...] + b_ref[...], 0.0)      # -> (1, tm, bp)
    o_ref[...] = y.astype(o_ref.dtype)


def pooled_convs_1x1(pooled, params_list):
    """The four tiny pooled-branch 1x1 convs fused into one pallas_call
    (branch grid axis + M-tile axis); pooled maps are zero-padded to a common
    row count, results are sliced back to their own spatial shapes."""
    Cin = pooled[0].shape[-1]
    bp = params_list[0]['w'].shape[1]
    flats = [p.reshape(-1, Cin) for p in pooled]
    rows = [f.shape[0] for f in flats]
    m_pad = _round_up(max(rows), 8)
    stacked = jnp.stack(
        [jnp.pad(f, ((0, m_pad - r), (0, 0))) for f, r in zip(flats, rows)],
        axis=0)
    if stacked.dtype != MATMUL_DTYPE:
        stacked = stacked.astype(MATMUL_DTYPE)
    w = jnp.stack([p['w'] for p in params_list], 0).astype(MATMUL_DTYPE)
    s = jnp.stack([p['scale'] for p in params_list], 0)
    b = jnp.stack([p['bias'] for p in params_list], 0)
    B = len(pooled)
    tm = _pick_m_tile(m_pad, cap=512)
    out = pl.pallas_call(
        _pooled_conv1x1_kernel,
        grid=(B, pl.cdiv(m_pad, tm)),
        in_specs=[
            pl.BlockSpec((1, tm, Cin), lambda g, i: (g, i, 0)),
            pl.BlockSpec((1, Cin, bp), lambda g, i: (g, 0, 0)),
            pl.BlockSpec((1, 1, bp), lambda g, i: (g, 0, 0)),
            pl.BlockSpec((1, 1, bp), lambda g, i: (g, 0, 0)),
        ],
        out_specs=pl.BlockSpec((1, tm, bp), lambda g, i: (g, i, 0)),
        out_shape=jax.ShapeDtypeStruct((B, m_pad, bp), ACT_DTYPE),
        compiler_params=_compiler_params("parallel", "parallel"),
        cost_estimate=_cost(2 * B * m_pad * Cin * bp,
                            2 * B * m_pad * (Cin + bp) + 2 * B * Cin * bp),
    )(stacked, w, s, b)
    outs = []
    for i, (p, r) in enumerate(zip(pooled, rows)):
        n, h, w_, _ = p.shape
        outs.append(out[i, :r].reshape(n, h, w_, bp))
    return outs


def _conv3x3_bn_relu_kernel(x_ref, w_ref, s_ref, b_ref, o_ref, *, th, W):
    # x: (1, 1, th+2, W+2, Cin) zero-padded row window (bf16)
    # w: (9, Cin, Cout) taps ordered dy*3+dx (bf16); s/b: (1, Cout) f32
    Cin = x_ref.shape[-1]
    Cout = w_ref.shape[-1]
    x = x_ref[...].reshape(th + 2, W + 2, Cin)
    acc = [jnp.zeros((th * (W + 2), Cout), jnp.float32) for _ in range(3)]
    # Per-dy contiguous row slabs (no non-contiguous Cin-wide patch copies);
    # each slab feeds 3 dots (one per dx).
    # TODO(synk): pack the dy taps into one K=3*Cin dot per dx (minor-dim
    # concat) for deeper MXU utilization on v6e/v7x once verified.
    for dy in range(3):
        slab = x[dy:dy + th].reshape(th * (W + 2), Cin)
        for dx in range(3):
            acc[dx] = acc[dx] + jnp.dot(slab, w_ref[dy * 3 + dx],
                                        preferred_element_type=jnp.float32)
    r0, r1, r2 = (a.reshape(th, W + 2, Cout) for a in acc)
    # dx taps combined by shifted adds on the narrow Cout-wide results.
    y = r0[:, 0:W] + r1[:, 1:W + 1] + r2[:, 2:W + 2]
    y = jnp.maximum(y * s_ref[...] + b_ref[...], 0.0)
    o_ref[...] = y.reshape(1, th, W, Cout).astype(o_ref.dtype)


def conv3x3_bn_relu(x, w9, scale, bias):
    """ConvX-3x3 (stride 1, pad 1, no bias) + folded BN + ReLU on NHWC input.
    Row-tiled: grid=(N, H/th) over pre-stacked 1-row-halo windows (halo rows are
    duplicated in HBM so BlockSpec blocks stay non-overlapping; the pad + window
    stacking fuses with the producing add in XLA)."""
    N, H, W, Cin = x.shape
    Cout = w9.shape[2]
    th = _pick_row_tile(H)
    n_t = H // th
    if x.dtype != MATMUL_DTYPE:
        x = x.astype(MATMUL_DTYPE)
    x_p = jnp.pad(x, ((0, 0), (1, 1), (1, 1), (0, 0)))
    wins = [x_p[:, i * th:i * th + th + 2] for i in range(n_t)]
    x_win = jnp.stack(wins, axis=1)                    # (N, n_t, th+2, W+2, Cin)
    w9 = w9.astype(MATMUL_DTYPE)
    kern = functools.partial(_conv3x3_bn_relu_kernel, th=th, W=W)
    return pl.pallas_call(
        kern,
        grid=(N, n_t),
        in_specs=[
            pl.BlockSpec((1, 1, th + 2, W + 2, Cin), lambda n, i: (n, i, 0, 0, 0)),
            pl.BlockSpec((9, Cin, Cout), lambda n, i: (0, 0, 0)),
            pl.BlockSpec((1, Cout), lambda n, i: (0, 0)),
            pl.BlockSpec((1, Cout), lambda n, i: (0, 0)),
        ],
        out_specs=pl.BlockSpec((1, th, W, Cout), lambda n, i: (n, i, 0, 0)),
        out_shape=jax.ShapeDtypeStruct((N, H, W, Cout), ACT_DTYPE),
        compiler_params=_compiler_params("parallel", "parallel"),
        cost_estimate=_cost(2 * 9 * N * H * (W + 2) * Cin * Cout,
                            2 * N * n_t * (th + 2) * (W + 2) * Cin
                            + 2 * 9 * Cin * Cout + 2 * N * H * W * Cout),
    )(x_win, w9, scale, bias)


def _compression_shortcut_kernel(b0_ref, b1_ref, b2_ref, b3_ref, b4_ref, x_ref,
                                 wc_ref, sc_ref, bc_ref, ws_ref, ss_ref, bs_ref,
                                 o_ref):
    # compression(concat(branches)) + shortcut(x); concat done implicitly by
    # accumulating 5 dots against the 5 weight slices (no HBM concat tensor).
    comp = jnp.dot(b0_ref[...], wc_ref[0], preferred_element_type=jnp.float32)
    comp = comp + jnp.dot(b1_ref[...], wc_ref[1], preferred_element_type=jnp.float32)
    comp = comp + jnp.dot(b2_ref[...], wc_ref[2], preferred_element_type=jnp.float32)
    comp = comp + jnp.dot(b3_ref[...], wc_ref[3], preferred_element_type=jnp.float32)
    comp = comp + jnp.dot(b4_ref[...], wc_ref[4], preferred_element_type=jnp.float32)
    comp = jnp.maximum(comp * sc_ref[...] + bc_ref[...], 0.0)
    sc = jnp.dot(x_ref[...], ws_ref[...], preferred_element_type=jnp.float32)
    sc = jnp.maximum(sc * ss_ref[...] + bs_ref[...], 0.0)
    o_ref[...] = (comp + sc).astype(o_ref.dtype)


def compression_plus_shortcut(branches, x2d, pc, ps):
    M, Cin = x2d.shape
    bp = branches[0].shape[1]
    Cout = pc['w'].shape[1]
    tm = _pick_m_tile(M)
    wc = pc['w'].reshape(5, bp, Cout).astype(MATMUL_DTYPE)   # slice per branch
    ws = ps['w'].astype(MATMUL_DTYPE)
    branches = [b if b.dtype == MATMUL_DTYPE else b.astype(MATMUL_DTYPE)
                for b in branches]
    if x2d.dtype != MATMUL_DTYPE:
        x2d = x2d.astype(MATMUL_DTYPE)
    branch_spec = pl.BlockSpec((tm, bp), lambda i: (i, 0))
    vec_spec = pl.BlockSpec((1, Cout), lambda i: (0, 0))
    return pl.pallas_call(
        _compression_shortcut_kernel,
        grid=(pl.cdiv(M, tm),),
        in_specs=[branch_spec] * 5 + [
            pl.BlockSpec((tm, Cin), lambda i: (i, 0)),
            pl.BlockSpec((5, bp, Cout), lambda i: (0, 0, 0)),
            vec_spec, vec_spec,
            pl.BlockSpec((Cin, Cout), lambda i: (0, 0)),
            vec_spec, vec_spec,
        ],
        out_specs=pl.BlockSpec((tm, Cout), lambda i: (i, 0)),
        out_shape=jax.ShapeDtypeStruct((M, Cout), jnp.float32),
        compiler_params=_compiler_params("parallel"),
        cost_estimate=_cost(2 * M * (5 * bp + Cin) * Cout,
                            2 * M * (5 * bp + Cin) + 2 * (5 * bp + Cin) * Cout
                            + 4 * M * Cout),
    )(*branches, x2d, wc, pc['scale'], pc['bias'], ws, ps['scale'], ps['bias'])


# ---------------------------------------------------------------------------
# Plain-JAX glue: pooling + bilinear resize (match PyTorch semantics exactly)
# ---------------------------------------------------------------------------

def avg_pool(x, k, s):
    # nn.AvgPool2d(k, stride=s, padding=1), count_include_pad=True (default)
    summed = lax.reduce_window(x, jnp.array(0, x.dtype), lax.add,
                               (1, k, k, 1), (1, s, s, 1),
                               [(0, 0), (1, 1), (1, 1), (0, 0)])
    return summed / float(k * k)


def bilinear_resize(x, out_h, out_w):
    # F.interpolate(mode='bilinear', align_corners=False); math in f32,
    # output emitted in the activation dtype so the resize->add->pad chain
    # that feeds the 3x3 kernels stays bf16 end-to-end.
    n, h, w, c = x.shape

    def idx(out_size, in_size):
        scale = in_size / out_size
        o = jnp.arange(out_size, dtype=jnp.float32)
        src = jnp.maximum((o + 0.5) * scale - 0.5, 0.0)
        i0 = jnp.minimum(jnp.floor(src).astype(jnp.int32), in_size - 1)
        i1 = jnp.minimum(i0 + 1, in_size - 1)
        lam = src - i0.astype(jnp.float32)
        return i0, i1, lam

    y0, y1, ly = idx(out_h, h)
    x0, x1, lx = idx(out_w, w)
    xf = x.astype(jnp.float32)
    r0 = jnp.take(xf, y0, axis=1)
    r1 = jnp.take(xf, y1, axis=1)
    rows = r0 * (1.0 - ly)[None, :, None, None] + r1 * ly[None, :, None, None]
    c0 = jnp.take(rows, x0, axis=2)
    c1 = jnp.take(rows, x1, axis=2)
    out = c0 * (1.0 - lx)[None, None, :, None] + c1 * lx[None, None, :, None]
    return out.astype(x.dtype)


# ---------------------------------------------------------------------------
# Parameters (deterministic synthetic init; BN folded to scale/bias, eval mode)
# ---------------------------------------------------------------------------

def init_convx(key, cin, cout, k):
    kw, kg, kb = jax.random.split(key, 3)
    if k == 1:
        w = jax.random.normal(kw, (cin, cout), jnp.float32) * 0.2
    else:
        w = jax.random.normal(kw, (k * k, cin, cout), jnp.float32) * 0.1
    gamma = 1.0 + 0.1 * jax.random.normal(kg, (cout,), jnp.float32)
    beta = 0.1 * jax.random.normal(kb, (cout,), jnp.float32)
    running_mean = jnp.zeros((cout,), jnp.float32)
    running_var = jnp.ones((cout,), jnp.float32)
    eps = 1e-5
    scale = gamma / jnp.sqrt(running_var + eps)
    bias = beta - running_mean * scale          # general BN fold
    return dict(w=w, scale=scale.reshape(1, cout), bias=bias.reshape(1, cout))


def init_dappm_params(key, inplanes, bp, outplanes):
    # NOTE: for production, pick bp/outplanes as multiples of 128 (zero-padded
    # weights) so every out_spec is lane-dense; the demo keeps the tiny sizes.
    ks = jax.random.split(key, 11)
    return {
        'scale0': init_convx(ks[0], inplanes, bp, 1),
        'scale1': init_convx(ks[1], inplanes, bp, 1),
        'scale2': init_convx(ks[2], inplanes, bp, 1),
        'scale3': init_convx(ks[3], inplanes, bp, 1),
        'scale4': init_convx(ks[4], inplanes, bp, 1),
        'process1': init_convx(ks[5], bp, bp, 3),
        'process2': init_convx(ks[6], bp, bp, 3),
        'process3': init_convx(ks[7], bp, bp, 3),
        'process4': init_convx(ks[8], bp, bp, 3),  # unused: reference forward reuses process3 for b4
        'shortcut': init_convx(ks[9], inplanes, outplanes, 1),
        'compression': init_convx(ks[10], bp * 5, outplanes, 1),
    }


# ---------------------------------------------------------------------------
# DAPPM forward
# ---------------------------------------------------------------------------

def dappm_forward(x_nchw, params):
    # NCHW -> NHWC and a single cast to the activation dtype (fused by XLA);
    # this bf16 x is reused by scale0, the pools and the shortcut path.
    x = jnp.transpose(x_nchw, (0, 2, 3, 1)).astype(ACT_DTYPE)
    N, H, W, Cin = x.shape
    bp = params['scale0']['w'].shape[1]

    # Full-resolution 1x1 branch.
    p0 = params['scale0']
    scale0 = conv1x1_bn_relu(x.reshape(N * H * W, Cin), p0['w'], p0['scale'],
                             p0['bias']).reshape(N, H, W, bp)

    # Pooled branches: pools in XLA; the four tiny 1x1 convs fused in one call.
    pooled = [
        avg_pool(x, 3, 2),
        avg_pool(x, 5, 4),
        avg_pool(x, 9, 8),
        jnp.mean(x, axis=(1, 2), keepdims=True, dtype=jnp.float32).astype(ACT_DTYPE),
    ]
    s1, s2, s3, s4 = pooled_convs_1x1(
        pooled,
        [params['scale1'], params['scale2'], params['scale3'], params['scale4']])

    p1, p2, p3 = params['process1'], params['process2'], params['process3']
    # (resize + prev) is computed once in XLA in bf16 and fuses into the pad +
    # halo-window stacking that stages the 3x3 kernel input.
    b1 = conv3x3_bn_relu(bilinear_resize(s1, H, W) + scale0, p1['w'], p1['scale'], p1['bias'])
    b2 = conv3x3_bn_relu(bilinear_resize(s2, H, W) + b1, p2['w'], p2['scale'], p2['bias'])
    b3 = conv3x3_bn_relu(bilinear_resize(s3, H, W) + b2, p3['w'], p3['scale'], p3['bias'])
    # s4 is (N,1,1,bp): bilinear upsample of a 1x1 map (align_corners=False) is an
    # exact broadcast; the implicit broadcast-add fuses into the window stacking
    # (no full-res materialize).  Reference forward applies process3 (not
    # process4) to this branch — faithfully reproduced.
    b4 = conv3x3_bn_relu(s4 + b3, p3['w'], p3['scale'], p3['bias'])

    flat = lambda t: t.reshape(N * H * W, t.shape[-1])
    out2d = compression_plus_shortcut(
        [flat(scale0), flat(b1), flat(b2), flat(b3), flat(b4)],
        x.reshape(N * H * W, Cin),
        params['compression'], params['shortcut'])
    out = out2d.reshape(N, H, W, -1)
    # TODO(synk): keep NHWC end-to-end (or fold this transpose into the
    # compression kernel's output indexing) when the surrounding graph allows.
    return jnp.transpose(out, (0, 3, 1, 2))                       # NHWC -> NCHW


# ---------------------------------------------------------------------------

if __name__ == "__main__":
    inplanes, branch_planes, outplanes = 4, 8, 8
    key = jax.random.PRNGKey(0)
    k_x, k_p = jax.random.split(key)
    x = jax.random.normal(k_x, (2, inplanes, 16, 16), jnp.float32)
    params = init_dappm_params(k_p, inplanes, branch_planes, outplanes)

    fwd = jax.jit(dappm_forward)
    out = jax.block_until_ready(fwd(x, params))
    assert out.shape == (2, outplanes, 16, 16), out.shape
    assert jnp.all(jnp.isfinite(out))
    print("KERNEL_OK")
</pallas_src>

<mosaic_0001>
module attributes {stable_mosaic.version = 11 : i64} {
  func.func @_pooled_conv1x1_kernel(%arg0: i32, %arg1: i32, %arg2: memref<1x128x4xbf16, #tpu.memory_space<vmem>>, %arg3: memref<1x4x8xbf16, #tpu.memory_space<vmem>>, %arg4: memref<1x1x8xf32, #tpu.memory_space<vmem>>, %arg5: memref<1x1x8xf32, #tpu.memory_space<vmem>>, %arg6: memref<1x128x8xbf16, #tpu.memory_space<vmem>>) attributes {dimension_semantics = [#tpu.dimension_semantics<parallel>, #tpu.dimension_semantics<parallel>], iteration_bounds = array<i64: 4, 1>, scalar_prefetch = 0 : i64, scratch_operands = 0 : i64, tpu.core_type = #tpu.core_type<tc>, window_params = [{transform_indices = @transform_0, window_bounds = array<i64: 1, 128, 4>}, {transform_indices = @transform_1, window_bounds = array<i64: 1, 4, 8>}, {transform_indices = @transform_2, window_bounds = array<i64: 1, 1, 8>}, {transform_indices = @transform_3, window_bounds = array<i64: 1, 1, 8>}, {transform_indices = @transform_4, window_bounds = array<i64: 1, 128, 8>}]} {
    %c0 = arith.constant 0 : index
    %c0_0 = arith.constant 0 : index
    %c0_1 = arith.constant 0 : index
    %0 = vector.load %arg2[%c0, %c0_0, %c0_1] : memref<1x128x4xbf16, #tpu.memory_space<vmem>>, vector<1x128x4xbf16>
    %1 = vector.shape_cast %0 : vector<1x128x4xbf16> to vector<128x4xbf16>
    %c0_2 = arith.constant 0 : index
    %c0_3 = arith.constant 0 : index
    %c0_4 = arith.constant 0 : index
    %2 = vector.load %arg3[%c0_2, %c0_3, %c0_4] : memref<1x4x8xbf16, #tpu.memory_space<vmem>>, vector<1x4x8xbf16>
    %3 = vector.shape_cast %2 : vector<1x4x8xbf16> to vector<4x8xbf16>
    %cst = arith.constant dense<0.000000e+00> : vector<128x8xf32>
    %4 = tpu.matmul %1, %3, %cst {dimension_numbers = #tpu.dot_dimension_numbers<[1], [0], [0], [1], [0, 0, 1, 1], [], []>} : vector<128x4xbf16>, vector<4x8xbf16>, vector<128x8xf32> -> vector<128x8xf32>
    %c0_5 = arith.constant 0 : index
    %c0_6 = arith.constant 0 : index
    %c0_7 = arith.constant 0 : index
    %5 = vector.load %arg4[%c0_5, %c0_6, %c0_7] : memref<1x1x8xf32, #tpu.memory_space<vmem>>, vector<1x1x8xf32>
    %6 = vector.shape_cast %4 : vector<128x8xf32> to vector<1x128x8xf32>
    %7 = vector.broadcast %5 : vector<1x1x8xf32> to vector<1x128x8xf32>
    %8 = arith.mulf %6, %7 : vector<1x128x8xf32>
    %c0_8 = arith.constant 0 : index
    %c0_9 = arith.constant 0 : index
    %c0_10 = arith.constant 0 : index
    %9 = vector.load %arg5[%c0_8, %c0_9, %c0_10] : memref<1x1x8xf32, #tpu.memory_space<vmem>>, vector<1x1x8xf32>
    %10 = vector.broadcast %9 : vector<1x1x8xf32> to vector<1x128x8xf32>
    %11 = arith.addf %8, %10 : vector<1x128x8xf32>
    %cst_11 = arith.constant 0.000000e+00 : f32
    %12 = vector.broadcast %cst_11 : f32 to vector<1x128x8xf32>
    %13 = arith.maximumf %11, %12 : vector<1x128x8xf32>
    %14 = arith.truncf %13 : vector<1x128x8xf32> to vector<1x128x8xbf16>
    %c0_12 = arith.constant 0 : index
    %c0_13 = arith.constant 0 : index
    %c0_14 = arith.constant 0 : index
    %15 = vector.load %arg6[%c0_12, %c0_13, %c0_14] : memref<1x128x8xbf16, #tpu.memory_space<vmem>>, vector<1x128x8xbf16>
    tpu.vector_store %arg6[%c0_12, %c0_13, %c0_14], %14 {strides = array<i32>} : memref<1x128x8xbf16, #tpu.memory_space<vmem>>, vector<1x128x8xbf16>,
    return
  }
  func.func @transform_0(%arg0: i32, %arg1: i32) -> (i32, i32, i32) {
    %c0_i32 = arith.constant 0 : i32
    %c0_i32_0 = arith.constant 0 : i32
    return %arg0, %arg1, %c0_i32 : i32, i32, i32
  }
  func.func @transform_1(%arg0: i32, %arg1: i32) -> (i32, i32, i32) {
    %c0_i32 = arith.constant 0 : i32
    %c0_i32_0 = arith.constant 0 : i32
    %c0_i32_1 = arith.constant 0 : i32
    return %arg0, %c0_i32, %c0_i32_0 : i32, i32, i32
  }
  func.func @transform_2(%arg0: i32, %arg1: i32) -> (i32, i32, i32) {
    %c0_i32 = arith.constant 0 : i32
    %c0_i32_0 = arith.constant 0 : i32
    %c0_i32_1 = arith.constant 0 : i32
    return %arg0, %c0_i32, %c0_i32_0 : i32, i32, i32
  }
  func.func @transform_3(%arg0: i32, %arg1: i32) -> (i32, i32, i32) {
    %c0_i32 = arith.constant 0 : i32
    %c0_i32_0 = arith.constant 0 : i32
    %c0_i32_1 = arith.constant 0 : i32
    return %arg0, %c0_i32, %c0_i32_0 : i32, i32, i32
  }
  func.func @transform_4(%arg0: i32, %arg1: i32) -> (i32, i32, i32) {
    %c0_i32 = arith.constant 0 : i32
    %c0_i32_0 = arith.constant 0 : i32
    return %arg0, %arg1, %c0_i32 : i32, i32, i32
  }
}

module attributes {stable_mosaic.version = 11 : i64} {
  func.func @_conv1x1_bn_relu_kernel(%arg0: i32, %arg1: memref<128x4xbf16, #tpu.memory_space<vmem>>, %arg2: memref<4x8xbf16, #tpu.memory_space<vmem>>, %arg3: memref<1x8xf32, #tpu.memory_space<vmem>>, %arg4: memref<1x8xf32, #tpu.memory_space<vmem>>, %arg5: memref<128x8xbf16, #tpu.memory_space<vmem>>) attributes {dimension_semantics = [#tpu.dimension_semantics<parallel>], iteration_bounds = array<i64: 4>, scalar_prefetch = 0 : i64, scratch_operands = 0 : i64, tpu.core_type = #tpu.core_type<tc>, window_params = [{transform_indices = @transform_0, window_bounds = array<i64: 128, 4>}, {pipeline_mode = #tpu.pipeline_mode<synchronous>, transform_indices = @transform_1, window_bounds = array<i64: 4, 8>}, {pipeline_mode = #tpu.pipeline_mode<synchronous>, transform_indices = @transform_2, window_bounds = array<i64: 1, 8>}, {pipeline_mode = #tpu.pipeline_mode<synchronous>, transform_indices = @transform_3, window_bounds = array<i64: 1, 8>}, {transform_indices = @transform_4, window_bounds = array<i64: 128, 8>}]} {
    %c0 = arith.constant 0 : index
    %c0_0 = arith.constant 0 : index
    %0 = vector.load %arg1[%c0, %c0_0] : memref<128x4xbf16, #tpu.memory_space<vmem>>, vector<128x4xbf16>
    %c0_1 = arith.constant 0 : index
    %c0_2 = arith.constant 0 : index
    %1 = vector.load %arg2[%c0_1, %c0_2] : memref<4x8xbf16, #tpu.memory_space<vmem>>, vector<4x8xbf16>
    %cst = arith.constant dense<0.000000e+00> : vector<128x8xf32>
    %2 = tpu.matmul %0, %1, %cst {dimension_numbers = #tpu.dot_dimension_numbers<[1], [0], [0], [1], [0, 0, 1, 1], [], []>} : vector<128x4xbf16>, vector<4x8xbf16>, vector<128x8xf32> -> vector<128x8xf32>
    %c0_3 = arith.constant 0 : index
    %c0_4 = arith.constant 0 : index
    %3 = vector.load %arg3[%c0_3, %c0_4] : memref<1x8xf32, #tpu.memory_space<vmem>>, vector<1x8xf32>
    %4 = vector.broadcast %3 : vector<1x8xf32> to vector<128x8xf32>
    %5 = arith.mulf %2, %4 : vector<128x8xf32>
    %c0_5 = arith.constant 0 : index
    %c0_6 = arith.constant 0 : index
    %6 = vector.load %arg4[%c0_5, %c0_6] : memref<1x8xf32, #tpu.memory_space<vmem>>, vector<1x8xf32>
    %7 = vector.broadcast %6 : vector<1x8xf32> to vector<128x8xf32>
    %8 = arith.addf %5, %7 : vector<128x8xf32>
    %cst_7 = arith.constant 0.000000e+00 : f32
    %9 = vector.broadcast %cst_7 : f32 to vector<128x8xf32>
    %10 = arith.maximumf %8, %9 : vector<128x8xf32>
    %11 = arith.truncf %10 : vector<128x8xf32> to vector<128x8xbf16>
    %c0_8 = arith.constant 0 : index
    %c0_9 = arith.constant 0 : index
    %12 = vector.load %arg5[%c0_8, %c0_9] : memref<128x8xbf16, #tpu.memory_space<vmem>>, vector<128x8xbf16>
    tpu.vector_store %arg5[%c0_8, %c0_9], %11 {strides = array<i32>} : memref<128x8xbf16, #tpu.memory_space<vmem>>, vector<128x8xbf16>,
    return
  }
  func.func @transform_0(%arg0: i32) -> (i32, i32) {
    %c0_i32 = arith.constant 0 : i32
    %c0_i32_0 = arith.constant 0 : i32
    return %arg0, %c0_i32 : i32, i32
  }
  func.func @transform_1(%arg0: i32) -> (i32, i32) {
    %c0_i32 = arith.constant 0 : i32
    %c0_i32_0 = arith.constant 0 : i32
    %c0_i32_1 = arith.constant 0 : i32
    return %c0_i32, %c0_i32_0 : i32, i32
  }
  func.func @transform_2(%arg0: i32) -> (i32, i32) {
    %c0_i32 = arith.constant 0 : i32
    %c0_i32_0 = arith.constant 0 : i32
    %c0_i32_1 = arith.constant 0 : i32
    return %c0_i32, %c0_i32_0 : i32, i32
  }
  func.func @transform_3(%arg0: i32) -> (i32, i32) {
    %c0_i32 = arith.constant 0 : i32
    %c0_i32_0 = arith.constant 0 : i32
    %c0_i32_1 = arith.constant 0 : i32
    return %c0_i32, %c0_i32_0 : i32, i32
  }
  func.func @transform_4(%arg0: i32) -> (i32, i32) {
    %c0_i32 = arith.constant 0 : i32
    %c0_i32_0 = arith.constant 0 : i32
    return %arg0, %c0_i32 : i32, i32
  }
}

module attributes {stable_mosaic.version = 11 : i64} {
  func.func @_conv3x3_bn_relu_kernel(%arg0: i32, %arg1: i32, %arg2: memref<1x1x10x18x8xbf16, #tpu.memory_space<vmem>>, %arg3: memref<9x8x8xbf16, #tpu.memory_space<vmem>>, %arg4: memref<1x8xf32, #tpu.memory_space<vmem>>, %arg5: memref<1x8xf32, #tpu.memory_space<vmem>>, %arg6: memref<1x8x16x8xbf16, #tpu.memory_space<vmem>>) attributes {dimension_semantics = [#tpu.dimension_semantics<parallel>, #tpu.dimension_semantics<parallel>], iteration_bounds = array<i64: 2, 2>, scalar_prefetch = 0 : i64, scratch_operands = 0 : i64, tpu.core_type = #tpu.core_type<tc>, window_params = [{transform_indices = @transform_0, window_bounds = array<i64: 1, 1, 10, 18, 8>}, {pipeline_mode = #tpu.pipeline_mode<synchronous>, transform_indices = @transform_1, window_bounds = array<i64: 9, 8, 8>}, {pipeline_mode = #tpu.pipeline_mode<synchronous>, transform_indices = @transform_2, window_bounds = array<i64: 1, 8>}, {pipeline_mode = #tpu.pipeline_mode<synchronous>, transform_indices = @transform_3, window_bounds = array<i64: 1, 8>}, {transform_indices = @transform_4, window_bounds = array<i64: 1, 8, 16, 8>}]} {
    %c0 = arith.constant 0 : index
    %c0_0 = arith.constant 0 : index
    %c0_1 = arith.constant 0 : index
    %c0_2 = arith.constant 0 : index
    %c0_3 = arith.constant 0 : index
    %0 = vector.load %arg2[%c0, %c0_0, %c0_1, %c0_2, %c0_3] : memref<1x1x10x18x8xbf16, #tpu.memory_space<vmem>>, vector<1x1x10x18x8xbf16>
    %1 = vector.shape_cast %0 : vector<1x1x10x18x8xbf16> to vector<10x18x8xbf16>
    %cst = arith.constant 0.000000e+00 : f32
    %2 = vector.broadcast %cst : f32 to vector<144x8xf32>
    %cst_4 = arith.constant 0.000000e+00 : f32
    %3 = vector.broadcast %cst_4 : f32 to vector<144x8xf32>
    %cst_5 = arith.constant 0.000000e+00 : f32
    %4 = vector.broadcast %cst_5 : f32 to vector<144x8xf32>
    %5 = vector.extract_strided_slice %1 {offsets = [0, 0, 0], sizes = [8, 18, 8], strides = [1, 1, 1]} : vector<10x18x8xbf16> to vector<8x18x8xbf16>
    %6 = vector.shape_cast %5 : vector<8x18x8xbf16> to vector<144x8xbf16>
    %c0_6 = arith.constant 0 : index
    %c0_7 = arith.constant 0 : index
    %c0_8 = arith.constant 0 : index
    %7 = vector.load %arg3[%c0_6, %c0_7, %c0_8] : memref<9x8x8xbf16, #tpu.memory_space<vmem>>, vector<1x8x8xbf16>
    %8 = vector.shape_cast %7 : vector<1x8x8xbf16> to vector<8x8xbf16>
    %cst_9 = arith.constant dense<0.000000e+00> : vector<144x8xf32>
    %9 = tpu.matmul %6, %8, %cst_9 {dimension_numbers = #tpu.dot_dimension_numbers<[1], [0], [0], [1], [0, 0, 1, 1], [], []>} : vector<144x8xbf16>, vector<8x8xbf16>, vector<144x8xf32> -> vector<144x8xf32>
    %10 = arith.addf %2, %9 : vector<144x8xf32>
    %c1 = arith.constant 1 : index
    %c0_10 = arith.constant 0 : index
    %c0_11 = arith.constant 0 : index
    %11 = vector.load %arg3[%c1, %c0_10, %c0_11] : memref<9x8x8xbf16, #tpu.memory_space<vmem>>, vector<1x8x8xbf16>
    %12 = vector.shape_cast %11 : vector<1x8x8xbf16> to vector<8x8xbf16>
    %cst_12 = arith.constant dense<0.000000e+00> : vector<144x8xf32>
    %13 = tpu.matmul %6, %12, %cst_12 {dimension_numbers = #tpu.dot_dimension_numbers<[1], [0], [0], [1], [0, 0, 1, 1], [], []>} : vector<144x8xbf16>, vector<8x8xbf16>, vector<144x8xf32> -> vector<144x8xf32>
    %14 = arith.addf %3, %13 : vector<144x8xf32>
    %c2 = arith.constant 2 : index
    %c0_13 = arith.constant 0 : index
    %c0_14 = arith.constant 0 : index
    %15 = vector.load %arg3[%c2, %c0_13, %c0_14] : memref<9x8x8xbf16, #tpu.memory_space<vmem>>, vector<1x8x8xbf16>
    %16 = vector.shape_cast %15 : vector<1x8x8xbf16> to vector<8x8xbf16>
    %cst_15 = arith.constant dense<0.000000e+00> : vector<144x8xf32>
    %17 = tpu.matmul %6, %16, %cst_15 {dimension_numbers = #tpu.dot_dimension_numbers<[1], [0], [0], [1], [0, 0, 1, 1], [], []>} : vector<144x8xbf16>, vector<8x8xbf16>, vector<144x8xf32> -> vector<144x8xf32>
    %18 = arith.addf %4, %17 : vector<144x8xf32>
    %19 = vector.extract_strided_slice %1 {offsets = [1, 0, 0], sizes = [8, 18, 8], strides = [1, 1, 1]} : vector<10x18x8xbf16> to vector<8x18x8xbf16>
    %20 = vector.shape_cast %19 : vector<8x18x8xbf16> to vector<144x8xbf16>
    %c3 = arith.constant 3 : index
    %c0_16 = arith.constant 0 : index
    %c0_17 = arith.constant 0 : index
    %21 = vector.load %arg3[%c3, %c0_16, %c0_17] : memref<9x8x8xbf16, #tpu.memory_space<vmem>>, vector<1x8x8xbf16>
    %22 = vector.shape_cast %21 : vector<1x8x8xbf16> to vector<8x8xbf16>
    %cst_18 = arith.constant dense<0.000000e+00> : vector<144x8xf32>
    %23 = tpu.matmul %20, %22, %cst_18 {dimension_numbers = #tpu.dot_dimension_numbers<[1], [0], [0], [1], [0, 0, 1, 1], [], []>} : vector<144x8xbf16>, vector<8x8xbf16>, vector<144x8xf32> -> vector<144x8xf32>
    %24 = arith.addf %10, %23 : vector<144x8xf32>
    %c4 = arith.constant 4 : index
    %c0_19 = arith.constant 0 : index
    %c0_20 = arith.constant 0 : index
    %25 = vector.load %arg3[%c4, %c0_19, %c0_20] : memref<9x8x8xbf16, #tpu.memory_space<vmem>>, vector<1x8x8xbf16>
    %26 = vector.shape_cast %25 : vector<1x8x8xbf16> to vector<8x8xbf16>
    %cst_21 = arith.constant dense<0.000000e+00> : vector<144x8xf32>
    %27 = tpu.matmul %20, %26, %cst_21 {dimension_numbers = #tpu.dot_dimension_numbers<[1], [0], [0], [1], [0, 0, 1, 1], [], []>} : vector<144x8xbf16>, vector<8x8xbf16>, vector<144x8xf32> -> vector<144x8xf32>
    %28 = arith.addf %14, %27 : vector<144x8xf32>
    %c5 = arith.constant 5 : index
    %c0_22 = arith.constant 0 : index
    %c0_23 = arith.constant 0 : index
    %29 = vector.load %arg3[%c5, %c0_22, %c0_23] : memref<9x8x8xbf16, #tpu.memory_space<vmem>>, vector<1x8x8xbf16>
    %30 = vector.shape_cast %29 : vector<1x8x8xbf16> to vector<8x8xbf16>
    %cst_24 = arith.constant dense<0.000000e+00> : vector<144x8xf32>
    %31 = tpu.matmul %20, %30, %cst_24 {dimension_numbers = #tpu.dot_dimension_numbers<[1], [0], [0], [1], [0, 0, 1, 1], [], []>} : vector<144x8xbf16>, vector<8x8xbf16>, vector<144x8xf32> -> vector<144x8xf32>
    %32 = arith.addf %18, %31 : vector<144x8xf32>
    %33 = vector.extract_strided_slice %1 {offsets = [2, 0, 0], sizes = [8, 18, 8], strides = [1, 1, 1]} : vector<10x18x8xbf16> to vector<8x18x8xbf16>
    %34 = vector.shape_cast %33 : vector<8x18x8xbf16> to vector<144x8xbf16>
    %c6 = arith.constant 6 : index
    %c0_25 = arith.constant 0 : index
    %c0_26 = arith.constant 0 : index
    %35 = vector.load %arg3[%c6, %c0_25, %c0_26] : memref<9x8x8xbf16, #tpu.memory_space<vmem>>, vector<1x8x8xbf16>
    %36 = vector.shape_cast %35 : vector<1x8x8xbf16> to vector<8x8xbf16>
    %cst_27 = arith.constant dense<0.000000e+00> : vector<144x8xf32>
    %37 = tpu.matmul %34, %36, %cst_27 {dimension_numbers = #tpu.dot_dimension_numbers<[1], [0], [0], [1], [0, 0, 1, 1], [], []>} : vector<144x8xbf16>, vector<8x8xbf16>, vector<144x8xf32> -> vector<144x8xf32>
    %38 = arith.addf %24, %37 : vector<144x8xf32>
    %c7 = arith.constant 7 : index
    %c0_28 = arith.constant 0 : index
    %c0_29 = arith.constant 0 : index
    %39 = vector.load %arg3[%c7, %c0_28, %c0_29] : memref<9x8x8xbf16, #tpu.memory_space<vmem>>, vector<1x8x8xbf16>
    %40 = vector.shape_cast %39 : vector<1x8x8xbf16> to vector<8x8xbf16>
    %cst_30 = arith.constant dense<0.000000e+00> : vector<144x8xf32>
    %41 = tpu.matmul %34, %40, %cst_30 {dimension_numbers = #tpu.dot_dimension_numbers<[1], [0], [0], [1], [0, 0, 1, 1], [], []>} : vector<144x8xbf16>, vector<8x8xbf16>, vector<144x8xf32> -> vector<144x8xf32>
    %42 = arith.addf %28, %41 : vector<144x8xf32>
    %c8 = arith.constant 8 : index
    %c0_31 = arith.constant 0 : index
    %c0_32 = arith.constant 0 : index
    %43 = vector.load %arg3[%c8, %c0_31, %c0_32] : memref<9x8x8xbf16, #tpu.memory_space<vmem>>, vector<1x8x8xbf16>
    %44 = vector.shape_cast %43 : vector<1x8x8xbf16> to vector<8x8xbf16>
    %cst_33 = arith.constant dense<0.000000e+00> : vector<144x8xf32>
    %45 = tpu.matmul %34, %44, %cst_33 {dimension_numbers = #tpu.dot_dimension_numbers<[1], [0], [0], [1], [0, 0, 1, 1], [], []>} : vector<144x8xbf16>, vector<8x8xbf16>, vector<144x8xf32> -> vector<144x8xf32>
    %46 = arith.addf %32, %45 : vector<144x8xf32>
    %47 = vector.shape_cast %38 : vector<144x8xf32> to vector<8x18x8xf32>
    %48 = vector.shape_cast %42 : vector<144x8xf32> to vector<8x18x8xf32>
    %49 = vector.shape_cast %46 : vector<144x8xf32> to vector<8x18x8xf32>
    %50 = vector.extract_strided_slice %47 {offsets = [0, 0, 0], sizes = [8, 16, 8], strides = [1, 1, 1]} : vector<8x18x8xf32> to vector<8x16x8xf32>
    %51 = vector.extract_strided_slice %48 {offsets = [0, 1, 0], sizes = [8, 16, 8], strides = [1, 1, 1]} : vector<8x18x8xf32> to vector<8x16x8xf32>
    %52 = arith.addf %50, %51 : vector<8x16x8xf32>
    %53 = vector.extract_strided_slice %49 {offsets = [0, 2, 0], sizes = [8, 16, 8], strides = [1, 1, 1]} : vector<8x18x8xf32> to vector<8x16x8xf32>
    %54 = arith.addf %52, %53 : vector<8x16x8xf32>
    %c0_34 = arith.constant 0 : index
    %c0_35 = arith.constant 0 : index
    %55 = vector.load %arg4[%c0_34, %c0_35] : memref<1x8xf32, #tpu.memory_space<vmem>>, vector<1x8xf32>
    %56 = vector.shape_cast %55 : vector<1x8xf32> to vector<1x1x8xf32>
    %57 = vector.broadcast %56 : vector<1x1x8xf32> to vector<8x16x8xf32>
    %58 = arith.mulf %54, %57 : vector<8x16x8xf32>
    %c0_36 = arith.constant 0 : index
    %c0_37 = arith.constant 0 : index
    %59 = vector.load %arg5[%c0_36, %c0_37] : memref<1x8xf32, #tpu.memory_space<vmem>>, vector<1x8xf32>
    %60 = vector.shape_cast %59 : vector<1x8xf32> to vector<1x1x8xf32>
    %61 = vector.broadcast %60 : vector<1x1x8xf32> to vector<8x16x8xf32>
    %62 = arith.addf %58, %61 : vector<8x16x8xf32>
    %cst_38 = arith.constant 0.000000e+00 : f32
    %63 = vector.broadcast %cst_38 : f32 to vector<8x16x8xf32>
    %64 = arith.maximumf %62, %63 : vector<8x16x8xf32>
    %65 = vector.shape_cast %64 : vector<8x16x8xf32> to vector<1x8x16x8xf32>
    %66 = arith.truncf %65 : vector<1x8x16x8xf32> to vector<1x8x16x8xbf16>
    %c0_39 = arith.constant 0 : index
    %c0_40 = arith.constant 0 : index
    %c0_41 = arith.constant 0 : index
    %c0_42 = arith.constant 0 : index
    %67 = vector.load %arg6[%c0_39, %c0_40, %c0_41, %c0_42] : memref<1x8x16x8xbf16, #tpu.memory_space<vmem>>, vector<1x8x16x8xbf16>
    tpu.vector_store %arg6[%c0_39, %c0_40, %c0_41, %c0_42], %66 {strides = array<i32>} : memref<1x8x16x8xbf16, #tpu.memory_space<vmem>>, vector<1x8x16x8xbf16>,
    return
  }
  func.func @transform_0(%arg0: i32, %arg1: i32) -> (i32, i32, i32, i32, i32) {
    %c0_i32 = arith.constant 0 : i32
    %c0_i32_0 = arith.constant 0 : i32
    %c0_i32_1 = arith.constant 0 : i32
    %c0_i32_2 = arith.constant 0 : i32
    return %arg0, %arg1, %c0_i32, %c0_i32_0, %c0_i32_1 : i32, i32, i32, i32, i32
  }
  func.func @transform_1(%arg0: i32, %arg1: i32) -> (i32, i32, i32) {
    %c0_i32 = arith.constant 0 : i32
    %c0_i32_0 = arith.constant 0 : i32
    %c0_i32_1 = arith.constant 0 : i32
    %c0_i32_2 = arith.constant 0 : i32
    return %c0_i32, %c0_i32_0, %c0_i32_1 : i32, i32, i32
  }
  func.func @transform_2(%arg0: i32, %arg1: i32) -> (i32, i32) {
    %c0_i32 = arith.constant 0 : i32
    %c0_i32_0 = arith.constant 0 : i32
    %c0_i32_1 = arith.constant 0 : i32
    return %c0_i32, %c0_i32_0 : i32, i32
  }
  func.func @transform_3(%arg0: i32, %arg1: i32) -> (i32, i32) {
    %c0_i32 = arith.constant 0 : i32
    %c0_i32_0 = arith.constant 0 : i32
    %c0_i32_1 = arith.constant 0 : i32
    return %c0_i32, %c0_i32_0 : i32, i32
  }
  func.func @transform_4(%arg0: i32, %arg1: i32) -> (i32, i32, i32, i32) {
    %c0_i32 = arith.constant 0 : i32
    %c0_i32_0 = arith.constant 0 : i32
    %c0_i32_1 = arith.constant 0 : i32
    return %arg0, %arg1, %c0_i32, %c0_i32_0 : i32, i32, i32, i32
  }
}

module attributes {stable_mosaic.version = 11 : i64} {
  func.func @_compression_shortcut_kernel(%arg0: i32, %arg1: memref<128x8xbf16, #tpu.memory_space<vmem>>, %arg2: memref<128x8xbf16, #tpu.memory_space<vmem>>, %arg3: memref<128x8xbf16, #tpu.memory_space<vmem>>, %arg4: memref<128x8xbf16, #tpu.memory_space<vmem>>, %arg5: memref<128x8xbf16, #tpu.memory_space<vmem>>, %arg6: memref<128x4xbf16, #tpu.memory_space<vmem>>, %arg7: memref<5x8x8xbf16, #tpu.memory_space<vmem>>, %arg8: memref<1x8xf32, #tpu.memory_space<vmem>>, %arg9: memref<1x8xf32, #tpu.memory_space<vmem>>, %arg10: memref<4x8xbf16, #tpu.memory_space<vmem>>, %arg11: memref<1x8xf32, #tpu.memory_space<vmem>>, %arg12: memref<1x8xf32, #tpu.memory_space<vmem>>, %arg13: memref<128x8xf32, #tpu.memory_space<vmem>>) attributes {dimension_semantics = [#tpu.dimension_semantics<parallel>], iteration_bounds = array<i64: 4>, scalar_prefetch = 0 : i64, scratch_operands = 0 : i64, tpu.core_type = #tpu.core_type<tc>, window_params = [{transform_indices = @transform_0, window_bounds = array<i64: 128, 8>}, {transform_indices = @transform_1, window_bounds = array<i64: 128, 8>}, {transform_indices = @transform_2, window_bounds = array<i64: 128, 8>}, {transform_indices = @transform_3, window_bounds = array<i64: 128, 8>}, {transform_indices = @transform_4, window_bounds = array<i64: 128, 8>}, {transform_indices = @transform_5, window_bounds = array<i64: 128, 4>}, {pipeline_mode = #tpu.pipeline_mode<synchronous>, transform_indices = @transform_6, window_bounds = array<i64: 5, 8, 8>}, {pipeline_mode = #tpu.pipeline_mode<synchronous>, transform_indices = @transform_7, window_bounds = array<i64: 1, 8>}, {pipeline_mode = #tpu.pipeline_mode<synchronous>, transform_indices = @transform_8, window_bounds = array<i64: 1, 8>}, {pipeline_mode = #tpu.pipeline_mode<synchronous>, transform_indices = @transform_9, window_bounds = array<i64: 4, 8>}, {pipeline_mode = #tpu.pipeline_mode<synchronous>, transform_indices = @transform_10, window_bounds = array<i64: 1, 8>}, {pipeline_mode = #tpu.pipeline_mode<synchronous>, transform_indices = @transform_11, window_bounds = array<i64: 1, 8>}, {transform_indices = @transform_12, window_bounds = array<i64: 128, 8>}]} {
    %c0 = arith.constant 0 : index
    %c0_0 = arith.constant 0 : index
    %0 = vector.load %arg1[%c0, %c0_0] : memref<128x8xbf16, #tpu.memory_space<vmem>>, vector<128x8xbf16>
    %c0_1 = arith.constant 0 : index
    %c0_2 = arith.constant 0 : index
    %c0_3 = arith.constant 0 : index
    %1 = vector.load %arg7[%c0_1, %c0_2, %c0_3] : memref<5x8x8xbf16, #tpu.memory_space<vmem>>, vector<1x8x8xbf16>
    %2 = vector.shape_cast %1 : vector<1x8x8xbf16> to vector<8x8xbf16>
    %cst = arith.constant dense<0.000000e+00> : vector<128x8xf32>
    %3 = tpu.matmul %0, %2, %cst {dimension_numbers = #tpu.dot_dimension_numbers<[1], [0], [0], [1], [0, 0, 1, 1], [], []>} : vector<128x8xbf16>, vector<8x8xbf16>, vector<128x8xf32> -> vector<128x8xf32>
    %c0_4 = arith.constant 0 : index
    %c0_5 = arith.constant 0 : index
    %4 = vector.load %arg2[%c0_4, %c0_5] : memref<128x8xbf16, #tpu.memory_space<vmem>>, vector<128x8xbf16>
    %c1 = arith.constant 1 : index
    %c0_6 = arith.constant 0 : index
    %c0_7 = arith.constant 0 : index
    %5 = vector.load %arg7[%c1, %c0_6, %c0_7] : memref<5x8x8xbf16, #tpu.memory_space<vmem>>, vector<1x8x8xbf16>
    %6 = vector.shape_cast %5 : vector<1x8x8xbf16> to vector<8x8xbf16>
    %cst_8 = arith.constant dense<0.000000e+00> : vector<128x8xf32>
    %7 = tpu.matmul %4, %6, %cst_8 {dimension_numbers = #tpu.dot_dimension_numbers<[1], [0], [0], [1], [0, 0, 1, 1], [], []>} : vector<128x8xbf16>, vector<8x8xbf16>, vector<128x8xf32> -> vector<128x8xf32>
    %8 = arith.addf %3, %7 : vector<128x8xf32>
    %c0_9 = arith.constant 0 : index
    %c0_10 = arith.constant 0 : index
    %9 = vector.load %arg3[%c0_9, %c0_10] : memref<128x8xbf16, #tpu.memory_space<vmem>>, vector<128x8xbf16>
    %c2 = arith.constant 2 : index
    %c0_11 = arith.constant 0 : index
    %c0_12 = arith.constant 0 : index
    %10 = vector.load %arg7[%c2, %c0_11, %c0_12] : memref<5x8x8xbf16, #tpu.memory_space<vmem>>, vector<1x8x8xbf16>
    %11 = vector.shape_cast %10 : vector<1x8x8xbf16> to vector<8x8xbf16>
    %cst_13 = arith.constant dense<0.000000e+00> : vector<128x8xf32>
    %12 = tpu.matmul %9, %11, %cst_13 {dimension_numbers = #tpu.dot_dimension_numbers<[1], [0], [0], [1], [0, 0, 1, 1], [], []>} : vector<128x8xbf16>, vector<8x8xbf16>, vector<128x8xf32> -> vector<128x8xf32>
    %13 = arith.addf %8, %12 : vector<128x8xf32>
    %c0_14 = arith.constant 0 : index
    %c0_15 = arith.constant 0 : index
    %14 = vector.load %arg4[%c0_14, %c0_15] : memref<128x8xbf16, #tpu.memory_space<vmem>>, vector<128x8xbf16>
    %c3 = arith.constant 3 : index
    %c0_16 = arith.constant 0 : index
    %c0_17 = arith.constant 0 : index
    %15 = vector.load %arg7[%c3, %c0_16, %c0_17] : memref<5x8x8xbf16, #tpu.memory_space<vmem>>, vector<1x8x8xbf16>
    %16 = vector.shape_cast %15 : vector<1x8x8xbf16> to vector<8x8xbf16>
    %cst_18 = arith.constant dense<0.000000e+00> : vector<128x8xf32>
    %17 = tpu.matmul %14, %16, %cst_18 {dimension_numbers = #tpu.dot_dimension_numbers<[1], [0], [0], [1], [0, 0, 1, 1], [], []>} : vector<128x8xbf16>, vector<8x8xbf16>, vector<128x8xf32> -> vector<128x8xf32>
    %18 = arith.addf %13, %17 : vector<128x8xf32>
    %c0_19 = arith.constant 0 : index
    %c0_20 = arith.constant 0 : index
    %19 = vector.load %arg5[%c0_19, %c0_20] : memref<128x8xbf16, #tpu.memory_space<vmem>>, vector<128x8xbf16>
    %c4 = arith.constant 4 : index
    %c0_21 = arith.constant 0 : index
    %c0_22 = arith.constant 0 : index
    %20 = vector.load %arg7[%c4, %c0_21, %c0_22] : memref<5x8x8xbf16, #tpu.memory_space<vmem>>, vector<1x8x8xbf16>
    %21 = vector.shape_cast %20 : vector<1x8x8xbf16> to vector<8x8xbf16>
    %cst_23 = arith.constant dense<0.000000e+00> : vector<128x8xf32>
    %22 = tpu.matmul %19, %21, %cst_23 {dimension_numbers = #tpu.dot_dimension_numbers<[1], [0], [0], [1], [0, 0, 1, 1], [], []>} : vector<128x8xbf16>, vector<8x8xbf16>, vector<128x8xf32> -> vector<128x8xf32>
    %23 = arith.addf %18, %22 : vector<128x8xf32>
    %c0_24 = arith.constant 0 : index
    %c0_25 = arith.constant 0 : index
    %24 = vector.load %arg8[%c0_24, %c0_25] : memref<1x8xf32, #tpu.memory_space<vmem>>, vector<1x8xf32>
    %25 = vector.broadcast %24 : vector<1x8xf32> to vector<128x8xf32>
    %26 = arith.mulf %23, %25 : vector<128x8xf32>
    %c0_26 = arith.constant 0 : index
    %c0_27 = arith.constant 0 : index
    %27 = vector.load %arg9[%c0_26, %c0_27] : memref<1x8xf32, #tpu.memory_space<vmem>>, vector<1x8xf32>
    %28 = vector.broadcast %27 : vector<1x8xf32> to vector<128x8xf32>
    %29 = arith.addf %26, %28 : vector<128x8xf32>
    %cst_28 = arith.constant 0.000000e+00 : f32
    %30 = vector.broadcast %cst_28 : f32 to vector<128x8xf32>
    %31 = arith.maximumf %29, %30 : vector<128x8xf32>
    %c0_29 = arith.constant 0 : index
    %c0_30 = arith.constant 0 : index
    %32 = vector.load %arg6[%c0_29, %c0_30] : memref<128x4xbf16, #tpu.memory_space<vmem>>, vector<128x4xbf16>
    %c0_31 = arith.constant 0 : index
    %c0_32 = arith.constant 0 : index
    %33 = vector.load %arg10[%c0_31, %c0_32] : memref<4x8xbf16, #tpu.memory_space<vmem>>, vector<4x8xbf16>
    %cst_33 = arith.constant dense<0.000000e+00> : vector<128x8xf32>
    %34 = tpu.matmul %32, %33, %cst_33 {dimension_numbers = #tpu.dot_dimension_numbers<[1], [0], [0], [1], [0, 0, 1, 1], [], []>} : vector<128x4xbf16>, vector<4x8xbf16>, vector<128x8xf32> -> vector<128x8xf32>
    %c0_34 = arith.constant 0 : index
    %c0_35 = arith.constant 0 : index
    %35 = vector.load %arg11[%c0_34, %c0_35] : memref<1x8xf32, #tpu.memory_space<vmem>>, vector<1x8xf32>
    %36 = vector.broadcast %35 : vector<1x8xf32> to vector<128x8xf32>
    %37 = arith.mulf %34, %36 : vector<128x8xf32>
    %c0_36 = arith.constant 0 : index
    %c0_37 = arith.constant 0 : index
    %38 = vector.load %arg12[%c0_36, %c0_37] : memref<1x8xf32, #tpu.memory_space<vmem>>, vector<1x8xf32>
    %39 = vector.broadcast %38 : vector<1x8xf32> to vector<128x8xf32>
    %40 = arith.addf %37, %39 : vector<128x8xf32>
    %cst_38 = arith.constant 0.000000e+00 : f32
    %41 = vector.broadcast %cst_38 : f32 to vector<128x8xf32>
    %42 = arith.maximumf %40, %41 : vector<128x8xf32>
    %43 = arith.addf %31, %42 : vector<128x8xf32>
    %c0_39 = arith.constant 0 : index
    %c0_40 = arith.constant 0 : index
    %44 = vector.load %arg13[%c0_39, %c0_40] : memref<128x8xf32, #tpu.memory_space<vmem>>, vector<128x8xf32>
    tpu.vector_store %arg13[%c0_39, %c0_40], %43 {strides = array<i32>} : memref<128x8xf32, #tpu.memory_space<vmem>>, vector<128x8xf32>,
    return
  }
  func.func @transform_0(%arg0: i32) -> (i32, i32) {
    %c0_i32 = arith.constant 0 : i32
    %c0_i32_0 = arith.constant 0 : i32
    return %arg0, %c0_i32 : i32, i32
  }
  func.func @transform_1(%arg0: i32) -> (i32, i32) {
    %c0_i32 = arith.constant 0 : i32
    %c0_i32_0 = arith.constant 0 : i32
    return %arg0, %c0_i32 : i32, i32
  }
  func.func @transform_2(%arg0: i32) -> (i32, i32) {
    %c0_i32 = arith.constant 0 : i32
    %c0_i32_0 = arith.constant 0 : i32
    return %arg0, %c0_i32 : i32, i32
  }
  func.func @transform_3(%arg0: i32) -> (i32, i32) {
    %c0_i32 = arith.constant 0 : i32
    %c0_i32_0 = arith.constant 0 : i32
    return %arg0, %c0_i32 : i32, i32
  }
  func.func @transform_4(%arg0: i32) -> (i32, i32) {
    %c0_i32 = arith.constant 0 : i32
    %c0_i32_0 = arith.constant 0 : i32
    return %arg0, %c0_i32 : i32, i32
  }
  func.func @transform_5(%arg0: i32) -> (i32, i32) {
    %c0_i32 = arith.constant 0 : i32
    %c0_i32_0 = arith.constant 0 : i32
    return %arg0, %c0_i32 : i32, i32
  }
  func.func @transform_6(%arg0: i32) -> (i32, i32, i32) {
    %c0_i32 = arith.constant 0 : i32
    %c0_i32_0 = arith.constant 0 : i32
    %c0_i32_1 = arith.constant 0 : i32
    %c0_i32_2 = arith.constant 0 : i32
    return %c0_i32, %c0_i32_0, %c0_i32_1 : i32, i32, i32
  }
  func.func @transform_7(%arg0: i32) -> (i32, i32) {
    %c0_i32 = arith.constant 0 : i32
    %c0_i32_0 = arith.constant 0 : i32
    %c0_i32_1 = arith.constant 0 : i32
    return %c0_i32, %c0_i32_0 : i32, i32
  }
  func.func @transform_8(%arg0: i32) -> (i32, i32) {
    %c0_i32 = arith.constant 0 : i32
    %c0_i32_0 = arith.constant 0 : i32
    %c0_i32_1 = arith.constant 0 : i32
    return %c0_i32, %c0_i32_0 : i32, i32
  }
  func.func @transform_9(%arg0: i32) -> (i32, i32) {
    %c0_i32 = arith.constant 0 : i32
    %c0_i32_0 = arith.constant 0 : i32
    %c0_i32_1 = arith.constant 0 : i32
    return %c0_i32, %c0_i32_0 : i32, i32
  }
  func.func @transform_10(%arg0: i32) -> (i32, i32) {
    %c0_i32 = arith.constant 0 : i32
    %c0_i32_0 = arith.constant 0 : i32
    %c0_i32_1 = arith.constant 0 : i32
    return %c0_i32, %c0_i32_0 : i32, i32
  }
  func.func @transform_11(%arg0: i32) -> (i32, i32) {
    %c0_i32 = arith.constant 0 : i32
    %c0_i32_0 = arith.constant 0 : i32
    %c0_i32_1 = arith.constant 0 : i32
    return %c0_i32, %c0_i32_0 : i32, i32
  }
  func.func @transform_12(%arg0: i32) -> (i32, i32) {
    %c0_i32 = arith.constant 0 : i32
    %c0_i32_0 = arith.constant 0 : i32
    return %arg0, %c0_i32 : i32, i32
  }
}

</mosaic_0001>

<llo_original>
// kernel: dappm_forward.8
$region0: #{dappm_forward.8}
  #allocation0 [shape = 'u32[]', space=smem, size = 0x4, offset = 0x4, fixed_abs, tag = 'smem constant byte address 0x4 - core index']
  #allocation1 [shape = 'u32[72,128]{1,0:T(1,128)}', space=vmem, size = 0x9000, scoped, tag = 'internal scratch']
  %s0 = inlined_call_operand.vmem [shape: bf16[4,128,4], index: 0, kind: input, shape index: {}]
  %s1 = inlined_call_operand.vmem [shape: bf16[4,4,8], index: 1, kind: input, shape index: {}]
  %s2 = inlined_call_operand.vmem [shape: f32[4,1,8], index: 2, kind: input, shape index: {}]
  %s3 = inlined_call_operand.vmem [shape: f32[4,1,8], index: 3, kind: input, shape index: {}]
  %s4 = inlined_call_operand.vmem [shape: bf16[4,128,8], index: 4, kind: output, shape index: {}]
  %s5 = sld [smem:[#allocation0]]
  $region49: #{dappm_forward.8} parent=0
    _
  %s7 = ssub.s32 1, %s5
  %s8 = scalar_select 0, %s7, %s5
  loop: start=0, step=1, limit=6
  $region2: #{dappm_forward.8} parent=0 // loop_pre_header
    _
  $region3: #{dappm_forward.8} parent=0 // loop_header
    %s10 = sphi 0, %s14
    %p11 = scmp.ge.s32.totalorder %s10, 6
    %s17 = sphi 0, %s29
    %s18 = sphi 0, %s25
    %s19 = sphi 0, %s17
    %s20 = sphi 0, %s18
    %s21 = sphi 0, %s19
    %s22 = sphi 0, %s20
    %s34 = sphi 0, %s36
    %s37 = sphi 0, %s34
    %s38 = sphi 0, %s37
    %s54 = sphi 0, %s38
    %s60 = sphi 0, %s62
    %s63 = sphi 0, %s60
    %s64 = sphi 0, %s63
    %s80 = sphi 0, %s64
    %s86 = sphi 0, %s88
    %s89 = sphi 0, %s86
    %s90 = sphi 0, %s89
    %s106 = sphi 0, %s90
    %s112 = sphi 0, %s114
    %s115 = sphi 0, %s112
    %s116 = sphi 0, %s115
    %s132 = sphi 0, %s116
    %s140 = sphi 0, %s142
    %s143 = sphi 0, %s140
    %s144 = sphi 0, %s143
    %s160 = sphi 0, %s144
  $region4: #{dappm_forward.8} parent=0 // loop_header_branch
    %13 = sbr.rel (%p11) target = $region8
  $region5: #{dappm_forward.8} parent=0 // loop_body
    %s15 = ssub.s32 %s10, 1
    %s16 = ssub.s32 %s10, 2
    %s23 = sadd.s32 1, %s18
    %p24 = scmp.ge.s32.totalorder %s23, 1
    %s25 = scalar_select %p24, 0, %s23
    %s26 = sadd.s32 1, %s17
    %s27 = scalar_select %p24, %s26, %s17
    %p28 = scmp.ge.s32.totalorder %s27, 4
    %s29 = scalar_select %p28, 0, %s27
    %s30 = ssub.s32 %s17, %s29
    %s31 = ssub.s32 %s18, %s25
    %s32 = sor.u32 %s30, %s31
    %p33 = scmp.eq.s32.totalorder %s32, 0
    %s35 = sadd.s32 %s34, 1
    %s36 = scalar_select %p33, %s34, %s35
    %p39 = pneg %p33
    %p40 = scmp.eq.s32.totalorder %s10, 3
    %p41 = por %p39, %p40
    %p42 = scmp.ne.s32.totalorder %s34, %s37
    %p43 = scmp.eq.s32.totalorder %s10, 0
    %p44 = por %p42, %p43
    %p45 = scmp.ne.s32.totalorder %s34, %s37
    %p46 = scmp.eq.s32.totalorder %s15, 3
    %p47 = por %p45, %p46
    %p48 = scmp.ne.s32.totalorder %s37, %s38
    %p49 = scmp.eq.s32.totalorder %s15, 0
    %p50 = por %p48, %p49
    %p51 = scmp.ne.s32.totalorder %s37, %s38
    %p52 = scmp.eq.s32.totalorder %s16, 3
    %p53 = por %p51, %p52
    %p55 = scmp.ne.s32.totalorder %s38, %s54
    %p56 = scmp.eq.s32.totalorder %s16, 0
    %p57 = por %p55, %p56
    %s58 = ssub.s32 %s17, %s29
    %p59 = scmp.eq.s32.totalorder %s58, 0
    %s61 = sadd.s32 %s60, 1
    %s62 = scalar_select %p59, %s60, %s61
    %p65 = pneg %p59
    %p66 = scmp.eq.s32.totalorder %s10, 3
    %p67 = por %p65, %p66
    %p68 = scmp.ne.s32.totalorder %s60, %s63
    %p69 = scmp.eq.s32.totalorder %s10, 0
    %p70 = por %p68, %p69
    %p71 = scmp.ne.s32.totalorder %s60, %s63
    %p72 = scmp.eq.s32.totalorder %s15, 3
    %p73 = por %p71, %p72
    %p74 = scmp.ne.s32.totalorder %s63, %s64
    %p75 = scmp.eq.s32.totalorder %s15, 0
    %p76 = por %p74, %p75
    %p77 = scmp.ne.s32.totalorder %s63, %s64
    %p78 = scmp.eq.s32.totalorder %s16, 3
    %p79 = por %p77, %p78
    %p81 = scmp.ne.s32.totalorder %s64, %s80
    %p82 = scmp.eq.s32.totalorder %s16, 0
    %p83 = por %p81, %p82
    %s84 = ssub.s32 %s17, %s29
    %p85 = scmp.eq.s32.totalorder %s84, 0
    %s87 = sadd.s32 %s86, 1
    %s88 = scalar_select %p85, %s86, %s87
    %p91 = pneg %p85
    %p92 = scmp.eq.s32.totalorder %s10, 3
    %p93 = por %p91, %p92
    %p94 = scmp.ne.s32.totalorder %s86, %s89
    %p95 = scmp.eq.s32.totalorder %s10, 0
    %p96 = por %p94, %p95
    %p97 = scmp.ne.s32.totalorder %s86, %s89
    %p98 = scmp.eq.s32.totalorder %s15, 3
    %p99 = por %p97, %p98
    %p100 = scmp.ne.s32.totalorder %s89, %s90
    %p101 = scmp.eq.s32.totalorder %s15, 0
    %p102 = por %p100, %p101
    %p103 = scmp.ne.s32.totalorder %s89, %s90
    %p104 = scmp.eq.s32.totalorder %s16, 3
    %p105 = por %p103, %p104
    %p107 = scmp.ne.s32.totalorder %s90, %s106
    %p108 = scmp.eq.s32.totalorder %s16, 0
    %p109 = por %p107, %p108
    %s110 = ssub.s32 %s17, %s29
    %p111 = scmp.eq.s32.totalorder %s110, 0
    %s113 = sadd.s32 %s112, 1
    %s114 = scalar_select %p111, %s112, %s113
    %p117 = pneg %p111
    %p118 = scmp.eq.s32.totalorder %s10, 3
    %p119 = por %p117, %p118
    %p120 = scmp.ne.s32.totalorder %s112, %s115
    %p121 = scmp.eq.s32.totalorder %s10, 0
    %p122 = por %p120, %p121
    %p123 = scmp.ne.s32.totalorder %s112, %s115
    %p124 = scmp.eq.s32.totalorder %s15, 3
    %p125 = por %p123, %p124
    %p126 = scmp.ne.s32.totalorder %s115, %s116
    %p127 = scmp.eq.s32.totalorder %s15, 0
    %p128 = por %p126, %p127
    %p129 = scmp.ne.s32.totalorder %s115, %s116
    %p130 = scmp.eq.s32.totalorder %s16, 3
    %p131 = por %p129, %p130
    %p133 = scmp.ne.s32.totalorder %s116, %s132
    %p134 = scmp.eq.s32.totalorder %s16, 0
    %p135 = por %p133, %p134
    %s136 = ssub.s32 %s17, %s29
    %s137 = ssub.s32 %s18, %s25
    %s138 = sor.u32 %s136, %s137
    %p139 = scmp.eq.s32.totalorder %s138, 0
    %s141 = sadd.s32 %s140, 1
    %s142 = scalar_select %p139, %s140, %s141
    %p145 = pneg %p139
    %p146 = scmp.eq.s32.totalorder %s10, 3
    %p147 = por %p145, %p146
    %p148 = scmp.ne.s32.totalorder %s140, %s143
    %p149 = scmp.eq.s32.totalorder %s10, 0
    %p150 = por %p148, %p149
    %p151 = scmp.ne.s32.totalorder %s140, %s143
    %p152 = scmp.eq.s32.totalorder %s15, 3
    %p153 = por %p151, %p152
    %p154 = scmp.ne.s32.totalorder %s143, %s144
    %p155 = scmp.eq.s32.totalorder %s15, 0
    %p156 = por %p154, %p155
    %p157 = scmp.ne.s32.totalorder %s143, %s144
    %p158 = scmp.eq.s32.totalorder %s16, 3
    %p159 = por %p157, %p158
    %p161 = scmp.ne.s32.totalorder %s144, %s160
    %p162 = scmp.eq.s32.totalorder %s16, 0
    %p163 = por %p161, %p162
    %p164 = scmp.le.s32.totalorder 1, %s10
    %p165 = scmp.lt.s32.totalorder %s10, 5
    %p166 = pnand %p164, %p165
    %p167 = pneg %p166
    // Predicated region
    $region9: #{dappm_forward.8} parent=5 // pred_check
      _
    $region10: #{dappm_forward.8} parent=5 // pred_check_branch
      %169 = sbr.rel (%p166) target = $region12
    $region11: #{dappm_forward.8} parent=5 // pred_region
      %s170 = ssub.s32 %s10, 1
    $region12: #{dappm_forward.8} parent=5 // pred_fallthru
      _
    %p171 = scmp.lt.s32.totalorder %s10, 4
    // Predicated region
    $region13: #{dappm_forward.8} parent=5 // pred_check
      %p172 = pneg %p171
    $region14: #{dappm_forward.8} parent=5 // pred_check_branch
      %174 = sbr.rel (%p172) target = $region16
    $region15: #{dappm_forward.8} parent=5 // pred_region
      // Predicated region
      $region17: #{dappm_forward.8} parent=15 // pred_check
        %p175 = pneg %p44
      $region18: #{dappm_forward.8} parent=15 // pred_check_branch
        %177 = sbr.rel (%p175) target = $region20
      $region19: #{dappm_forward.8} parent=15 // pred_region
        %s178 = smul.u32 16, %s18
        %p179 = scmp.lt.s32.totalorder %s17, 3
        %s180 = scalar_select %p179, %s17, 3
        %p181 = scmp.lt.s32.totalorder %s178, 15
        %s182 = scalar_select %p181, %s178, 15
        %s183 = smul.addr %s180, 16
        %s184 = sadd.s32 %s182, %s183
        %s185 = smul.addr %s184, 4
        %s186 = scalar_lea.vmem %s0, %s185
        %s187 = smul.u32 16, %s18
      $region20: #{dappm_forward.8} parent=15 // pred_fallthru
        _
      // Predicated region
      $region21: #{dappm_forward.8} parent=15 // pred_check
        %p188 = pneg %p70
      $region22: #{dappm_forward.8} parent=15 // pred_check_branch
        %190 = sbr.rel (%p188) target = $region24
      $region23: #{dappm_forward.8} parent=15 // pred_region
        %p191 = scmp.lt.s32.totalorder %s17, 3
        %s192 = scalar_select %p191, %s17, 3
        %s193 = smul.addr %s192, 2
        %s194 = scalar_lea.vmem %s1, %s193
      $region24: #{dappm_forward.8} parent=15 // pred_fallthru
        _
      // Predicated region
      $region25: #{dappm_forward.8} parent=15 // pred_check
        %p195 = pneg %p96
      $region26: #{dappm_forward.8} parent=15 // pred_check_branch
        %197 = sbr.rel (%p195) target = $region28
      $region27: #{dappm_forward.8} parent=15 // pred_region
        %p198 = scmp.lt.s32.totalorder %s17, 3
        %s199 = scalar_select %p198, %s17, 3
        %s200 = scalar_lea.vmem %s2, %s199
      $region28: #{dappm_forward.8} parent=15 // pred_fallthru
        _
      // Predicated region
      $region29: #{dappm_forward.8} parent=15 // pred_check
        %p201 = pneg %p122
      $region30: #{dappm_forward.8} parent=15 // pred_check_branch
        %203 = sbr.rel (%p201) target = $region32
      $region31: #{dappm_forward.8} parent=15 // pred_region
        %p204 = scmp.lt.s32.totalorder %s17, 3
        %s205 = scalar_select %p204, %s17, 3
        %s206 = scalar_lea.vmem %s3, %s205
      $region32: #{dappm_forward.8} parent=15 // pred_fallthru
        _
    $region16: #{dappm_forward.8} parent=5 // pred_fallthru
      _
    %p207 = scmp.le.s32.totalorder 1, %s10
    %p208 = scmp.lt.s32.totalorder %s10, 5
    %p209 = pnand %p207, %p208
    %p210 = pneg %p209
    // Predicated region
    $region33: #{dappm_forward.8} parent=5 // pred_check
      _
    $region34: #{dappm_forward.8} parent=5 // pred_check_branch
      %212 = sbr.rel (%p209) target = $region36
    $region35: #{dappm_forward.8} parent=5 // pred_region
      %s213 = ssub.s32 %s10, 1
      %s214 = smul.u32 16, %s20
      %p215 = scmp.lt.s32.totalorder %s19, 3
      %s216 = scalar_select %p215, %s19, 3
      %p217 = scmp.lt.s32.totalorder %s214, 15
      %s218 = scalar_select %p217, %s214, 15
      %s219 = smul.addr %s216, 16
      %s220 = sadd.s32 %s218, %s219
      %s221 = smul.addr %s220, 4
      %s222 = scalar_lea.vmem %s0, %s221
      %p223 = pneg %p50
      %p224 = pneg %p47
      %p225 = scmp.lt.s32.totalorder %s19, 3
      %s226 = scalar_select %p225, %s19, 3
      %s227 = smul.addr %s226, 2
      %s228 = scalar_lea.vmem %s1, %s227
      %p229 = pneg %p76
      %p230 = pneg %p73
      %p231 = scmp.lt.s32.totalorder %s19, 3
      %s232 = scalar_select %p231, %s19, 3
      %s233 = scalar_lea.vmem %s2, %s232
      %p234 = pneg %p102
      %p235 = pneg %p99
      %p236 = scmp.lt.s32.totalorder %s19, 3
      %s237 = scalar_select %p236, %s19, 3
      %s238 = scalar_lea.vmem %s3, %s237
      %p239 = pneg %p128
      %p240 = pneg %p125
      %p241 = pneg %p156
      %p242 = pneg %p153
      %s243 = smul.u32 16, %s20
      %p244 = scmp.lt.s32.totalorder %s19, 3
      %s245 = scalar_select %p244, %s19, 3
      %p246 = scmp.lt.s32.totalorder %s243, 15
      %s247 = scalar_select %p246, %s243, 15
      %s248 = smul.addr %s245, 16
      %s249 = sadd.s32 %s247, %s248
      %s250 = smul.addr %s249, 4
      %s251 = scalar_lea.vmem %s4, %s250
      %s252 = smul.u32 16, %s20
      %p253 = scmp.lt.s32.totalorder %s19, 3
      %s254 = scalar_select %p253, %s19, 3
      %p255 = scmp.lt.s32.totalorder %s252, 15
      %s256 = scalar_select %p255, %s252, 15
      %s257 = smul.addr %s254, 16
      %s258 = sadd.s32 %s256, %s257
      %s259 = smul.addr %s258, 4
      %s260 = scalar_lea.vmem %s0, %s259
      %s261 = smul.u32 16, %s20
      %p262 = scmp.lt.s32.totalorder %s19, 3
      %s263 = scalar_select %p262, %s19, 3
      %s264 = smul.addr %s263, 2
      %s265 = scalar_lea.vmem %s1, %s264
      %p266 = scmp.lt.s32.totalorder %s19, 3
      %s267 = scalar_select %p266, %s19, 3
      %s268 = scalar_lea.vmem %s2, %s267
      %p269 = scmp.lt.s32.totalorder %s19, 3
      %s270 = scalar_select %p269, %s19, 3
      %s271 = scalar_lea.vmem %s3, %s270
      %s272 = smul.u32 16, %s20
      %p273 = scmp.lt.s32.totalorder %s19, 3
      %s274 = scalar_select %p273, %s19, 3
      %p275 = scmp.lt.s32.totalorder %s272, 15
      %s276 = scalar_select %p275, %s272, 15
      %s277 = smul.addr %s274, 16
      %s278 = sadd.s32 %s276, %s277
      %s279 = smul.addr %s278, 4
      %s280 = scalar_lea.vmem %s4, %s279
      %s281 = smul.u32 16, %s20
      %v283 = vld [vmem:[%s260] sm:$0xf]
      %v284 = vld [vmem:[%s260 + $0x4] sm:$0xf]
      %v285 = vld [vmem:[%s260 + $0x8] sm:$0xf]
      %v286 = vld [vmem:[%s260 + $0xc] sm:$0xf]
      %v287 = vld [vmem:[%s260 + $0x10] sm:$0xf]
      %v288 = vld [vmem:[%s260 + $0x14] sm:$0xf]
      %v289 = vld [vmem:[%s260 + $0x18] sm:$0xf]
      %v290 = vld [vmem:[%s260 + $0x1c] sm:$0xf]
      %v291 = vld [vmem:[%s260 + $0x20] sm:$0xf]
      %v292 = vld [vmem:[%s260 + $0x24] sm:$0xf]
      %v293 = vld [vmem:[%s260 + $0x28] sm:$0xf]
      %v294 = vld [vmem:[%s260 + $0x2c] sm:$0xf]
      %v295 = vld [vmem:[%s260 + $0x30] sm:$0xf]
      %v296 = vld [vmem:[%s260 + $0x34] sm:$0xf]
      %v297 = vld [vmem:[%s260 + $0x38] sm:$0xf]
      %v298 = vld [vmem:[%s260 + $0x3c] sm:$0xf]
      %v299 = vld [vmem:[%s265] sm:$0x3]
      %v316 = vunpack.c.l.b16 %v283
      %v317 = vunpack.c.l.b16 %v284
      %v318 = vunpack.c.l.b16 %v285
      %v319 = vunpack.c.l.b16 %v286
      %v320 = vunpack.c.l.b16 %v287
      %v321 = vunpack.c.l.b16 %v288
      %v322 = vunpack.c.l.b16 %v289
      %v323 = vunpack.c.l.b16 %v290
      %v324 = vunpack.c.l.b16 %v291
      %v325 = vunpack.c.l.b16 %v292
      %v326 = vunpack.c.l.b16 %v293
      %v327 = vunpack.c.l.b16 %v294
      %v328 = vunpack.c.l.b16 %v295
      %v329 = vunpack.c.l.b16 %v296
      %v330 = vunpack.c.l.b16 %v297
      %v331 = vunpack.c.l.b16 %v298
      %v332 = vpack.c.b16 %v317, %v316
      %v333 = vpack.c.b16 %v319, %v318
      %v334 = vpack.c.b16 %v321, %v320
      %v335 = vpack.c.b16 %v323, %v322
      %v336 = vpack.c.b16 %v325, %v324
      %v337 = vpack.c.b16 %v327, %v326
      %v338 = vpack.c.b16 %v329, %v328
      %v339 = vpack.c.b16 %v331, %v330
      %vm340 = vcmask 31744
      %v342 = vsel %vm340, %v332, 0
      %v345 = vsel %vm340, %v333, 0
      %v348 = vsel %vm340, %v334, 0
      %v351 = vsel %vm340, %v335, 0
      %v354 = vsel %vm340, %v336, 0
      %v357 = vsel %vm340, %v337, 0
      %v360 = vsel %vm340, %v338, 0
      %v363 = vsel %vm340, %v339, 0
      %vm365 = vcmask 1041408
      %v367 = vsel %vm365, %v299, 0
      %369 = vmatpush.bf16.msra.mxu0 0
      %370 = vmatpush.bf16.msra.mxu0 0
      %371 = vmatpush.bf16.msra.mxu0 0
      %372 = vmatpush.bf16.msra.mxu0 0
      %373 = vmatpush.bf16.msra.mxu0 0
      %374 = vmatpush.bf16.msra.mxu0 0
      %375 = vmatpush.bf16.msra.mxu0 0
      %376 = vmatpush.bf16.msra.mxu0 %v367
      %377 = vmatmul.bf16.gmra.mxu0 %v342
      %v378 = vpop.f32.mrf.mxu0
      %v379 = vadd.f32 0.0, %v378
      %v380 = vpop.f32.mrf.mxu0
      %v381 = vadd.f32 0.0, %v380
      %382 = vmatmul.bf16.gmra.mxu0 %v345
      %v383 = vpop.f32.mrf.mxu0
      %v384 = vadd.f32 0.0, %v383
      %v385 = vpop.f32.mrf.mxu0
      %v386 = vadd.f32 0.0, %v385
      %387 = vmatmul.bf16.gmra.mxu0 %v348
      %v388 = vpop.f32.mrf.mxu0
      %v389 = vadd.f32 0.0, %v388
      %v390 = vpop.f32.mrf.mxu0
      %v391 = vadd.f32 0.0, %v390
      %392 = vmatmul.bf16.gmra.mxu0 %v351
      %v393 = vpop.f32.mrf.mxu0
      %v394 = vadd.f32 0.0, %v393
      %v395 = vpop.f32.mrf.mxu0
      %v396 = vadd.f32 0.0, %v395
      %397 = vmatmul.bf16.gmra.mxu0 %v354
      %v398 = vpop.f32.mrf.mxu0
      %v399 = vadd.f32 0.0, %v398
      %v400 = vpop.f32.mrf.mxu0
      %v401 = vadd.f32 0.0, %v400
      %402 = vmatmul.bf16.gmra.mxu0 %v357
      %v403 = vpop.f32.mrf.mxu0
      %v404 = vadd.f32 0.0, %v403
      %v405 = vpop.f32.mrf.mxu0
      %v406 = vadd.f32 0.0, %v405
      %407 = vmatmul.bf16.gmra.mxu0 %v360
      %v408 = vpop.f32.mrf.mxu0
      %v409 = vadd.f32 0.0, %v408
      %v410 = vpop.f32.mrf.mxu0
      %v411 = vadd.f32 0.0, %v410
      %412 = vmatmul.bf16.gmra.mxu0 %v363
      %v413 = vpop.f32.mrf.mxu0
      %v414 = vadd.f32 0.0, %v413
      %v415 = vpop.f32.mrf.mxu0
      %v416 = vadd.f32 0.0, %v415
      %417 = vdwg.mxu0
      %v418 = vld [vmem:[%s268] sm:$0x1]
      %v420 = vperm.slane %v418, 0
      %v422 = vmul.f32 %v379, %v420
      %v423 = vmul.f32 %v381, %v420
      %v424 = vmul.f32 %v384, %v420
      %v425 = vmul.f32 %v386, %v420
      %v426 = vmul.f32 %v389, %v420
      %v427 = vmul.f32 %v391, %v420
      %v428 = vmul.f32 %v394, %v420
      %v429 = vmul.f32 %v396, %v420
      %v430 = vmul.f32 %v399, %v420
      %v431 = vmul.f32 %v401, %v420
      %v432 = vmul.f32 %v404, %v420
      %v433 = vmul.f32 %v406, %v420
      %v434 = vmul.f32 %v409, %v420
      %v435 = vmul.f32 %v411, %v420
      %v436 = vmul.f32 %v414, %v420
      %v437 = vmul.f32 %v416, %v420
      %v438 = vld [vmem:[%s271] sm:$0x1]
      %v440 = vperm.slane %v438, 0
      %v442 = vadd.f32 %v422, %v440
      %v443 = vadd.f32 %v423, %v440
      %v444 = vadd.f32 %v424, %v440
      %v445 = vadd.f32 %v425, %v440
      %v446 = vadd.f32 %v426, %v440
      %v447 = vadd.f32 %v427, %v440
      %v448 = vadd.f32 %v428, %v440
      %v449 = vadd.f32 %v429, %v440
      %v450 = vadd.f32 %v430, %v440
      %v451 = vadd.f32 %v431, %v440
      %v452 = vadd.f32 %v432, %v440
      %v453 = vadd.f32 %v433, %v440
      %v454 = vadd.f32 %v434, %v440
      %v455 = vadd.f32 %v435, %v440
      %v456 = vadd.f32 %v436, %v440
      %v457 = vadd.f32 %v437, %v440
      %v458 = vmax.f32 %v442, 0.0
      %v459 = vmax.f32 %v443, 0.0
      %v460 = vmax.f32 %v444, 0.0
      %v461 = vmax.f32 %v445, 0.0
      %v462 = vmax.f32 %v446, 0.0
      %v463 = vmax.f32 %v447, 0.0
      %v464 = vmax.f32 %v448, 0.0
      %v465 = vmax.f32 %v449, 0.0
      %v466 = vmax.f32 %v450, 0.0
      %v467 = vmax.f32 %v451, 0.0
      %v468 = vmax.f32 %v452, 0.0
      %v469 = vmax.f32 %v453, 0.0
      %v470 = vmax.f32 %v454, 0.0
      %v471 = vmax.f32 %v455, 0.0
      %v472 = vmax.f32 %v456, 0.0
      %v473 = vmax.f32 %v457, 0.0
      %v474 = vpack.c.bf16 %v458, %v458
      %v475 = vpack.c.bf16 %v459, %v459
      %v476 = vpack.c.bf16 %v460, %v460
      %v477 = vpack.c.bf16 %v461, %v461
      %v478 = vpack.c.bf16 %v462, %v462
      %v479 = vpack.c.bf16 %v463, %v463
      %v480 = vpack.c.bf16 %v464, %v464
      %v481 = vpack.c.bf16 %v465, %v465
      %v482 = vpack.c.bf16 %v466, %v466
      %v483 = vpack.c.bf16 %v467, %v467
      %v484 = vpack.c.bf16 %v468, %v468
      %v485 = vpack.c.bf16 %v469, %v469
      %v486 = vpack.c.bf16 %v470, %v470
      %v487 = vpack.c.bf16 %v471, %v471
      %v488 = vpack.c.bf16 %v472, %v472
      %v489 = vpack.c.bf16 %v473, %v473
      %vm490 = vcmask 60416
      %491 = vst.msk [vmem:[%s280] sm:$0xf] %vm490, %v474
      %492 = vst.msk [vmem:[%s280 + $0x4] sm:$0xf] %vm490, %v475
      %493 = vst.msk [vmem:[%s280 + $0x8] sm:$0xf] %vm490, %v476
      %494 = vst.msk [vmem:[%s280 + $0xc] sm:$0xf] %vm490, %v477
      %495 = vst.msk [vmem:[%s280 + $0x10] sm:$0xf] %vm490, %v478
      %496 = vst.msk [vmem:[%s280 + $0x14] sm:$0xf] %vm490, %v479
      %497 = vst.msk [vmem:[%s280 + $0x18] sm:$0xf] %vm490, %v480
      %498 = vst.msk [vmem:[%s280 + $0x1c] sm:$0xf] %vm490, %v481
      %499 = vst.msk [vmem:[%s280 + $0x20] sm:$0xf] %vm490, %v482
      %500 = vst.msk [vmem:[%s280 + $0x24] sm:$0xf] %vm490, %v483
      %501 = vst.msk [vmem:[%s280 + $0x28] sm:$0xf] %vm490, %v484
      %502 = vst.msk [vmem:[%s280 + $0x2c] sm:$0xf] %vm490, %v485
      %503 = vst.msk [vmem:[%s280 + $0x30] sm:$0xf] %vm490, %v486
      %504 = vst.msk [vmem:[%s280 + $0x34] sm:$0xf] %vm490, %v487
      %505 = vst.msk [vmem:[%s280 + $0x38] sm:$0xf] %vm490, %v488
      %506 = vst.msk [vmem:[%s280 + $0x3c] sm:$0xf] %vm490, %v489
      %s507 = smul.u32 16, %s20
      %p508 = scmp.lt.s32.totalorder %s19, 3
      %s509 = scalar_select %p508, %s19, 3
      %p510 = scmp.lt.s32.totalorder %s507, 15
      %s511 = scalar_select %p510, %s507, 15
      %s512 = smul.addr %s509, 16
      %s513 = sadd.s32 %s511, %s512
      %s514 = smul.addr %s513, 4
      %s515 = scalar_lea.vmem %s4, %s514
      // Predicated region
      $region37: #{dappm_forward.8} parent=35 // pred_check
        %p516 = pneg %p153
      $region38: #{dappm_forward.8} parent=35 // pred_check_branch
        %518 = sbr.rel (%p516) target = $region40
      $region39: #{dappm_forward.8} parent=35 // pred_region
        %s519 = smul.u32 16, %s20
      $region40: #{dappm_forward.8} parent=35 // pred_fallthru
        _
    $region36: #{dappm_forward.8} parent=5 // pred_fallthru
      _
    %p520 = scmp.le.s32.totalorder 2, %s10
    // Predicated region
    $region41: #{dappm_forward.8} parent=5 // pred_check
      %p521 = pneg %p520
    $region42: #{dappm_forward.8} parent=5 // pred_check_branch
      %523 = sbr.rel (%p521) target = $region44
    $region43: #{dappm_forward.8} parent=5 // pred_region
      %s524 = ssub.s32 %s10, 2
      // Predicated region
      $region45: #{dappm_forward.8} parent=43 // pred_check
        %p525 = pneg %p159
      $region46: #{dappm_forward.8} parent=43 // pred_check_branch
        %527 = sbr.rel (%p525) target = $region48
      $region47: #{dappm_forward.8} parent=43 // pred_region
        %s528 = smul.u32 16, %s22
        %p529 = scmp.lt.s32.totalorder %s21, 3
        %s530 = scalar_select %p529, %s21, 3
        %p531 = scmp.lt.s32.totalorder %s528, 15
        %s532 = scalar_select %p531, %s528, 15
        %s533 = smul.addr %s530, 16
        %s534 = sadd.s32 %s532, %s533
        %s535 = smul.addr %s534, 4
        %s536 = scalar_lea.vmem %s4, %s535
      $region48: #{dappm_forward.8} parent=43 // pred_fallthru
        _
    $region44: #{dappm_forward.8} parent=5 // pred_fallthru
      _
  $region6: #{dappm_forward.8} parent=0 // loop_footer
    %s14 = sadd.s32 1, %s10
  $region7: #{dappm_forward.8} parent=0 // loop_footer_branch
    %9 = sbr.rel target = $region3
  $region8: #{dappm_forward.8} parent=0 // loop_exit
    _

// kernel: dappm_forward.7
$region0: #{dappm_forward.7}
  #allocation0 [shape = 'u32[]', space=smem, size = 0x4, offset = 0x4, fixed_abs, tag = 'smem constant byte address 0x4 - core index']
  #allocation1 [shape = 'u32[72,128]{1,0:T(1,128)}', space=vmem, size = 0x9000, scoped, tag = 'internal scratch']
  %s0 = inlined_call_operand.vmem [shape: bf16[512,4], index: 0, kind: input, shape index: {}]
  %s1 = inlined_call_operand.vmem [shape: bf16[4,8], index: 1, kind: input, shape index: {}]
  %s2 = inlined_call_operand.vmem [shape: f32[1,8], index: 2, kind: input, shape index: {}]
  %s3 = inlined_call_operand.vmem [shape: f32[1,8], index: 3, kind: input, shape index: {}]
  %s4 = inlined_call_operand.vmem [shape: bf16[512,8], index: 4, kind: output, shape index: {}]
  %s5 = sld [smem:[#allocation0]]
  $region49: #{dappm_forward.7} parent=0
    _
  %s7 = ssub.s32 1, %s5
  %s8 = scalar_select 0, %s7, %s5
  loop: start=0, step=1, limit=6
  $region2: #{dappm_forward.7} parent=0 // loop_pre_header
    _
  $region3: #{dappm_forward.7} parent=0 // loop_header
    %s10 = sphi 0, %s14
    %p11 = scmp.ge.s32.totalorder %s10, 6
    %s20 = sphi 0, %s22
    %s23 = sphi 0, %s20
    %s24 = sphi 0, %s23
    %s40 = sphi 0, %s24
    %s44 = sphi 0, %s44
    %s46 = sphi 0, %s44
    %s47 = sphi 0, %s46
    %s61 = sphi 0, %s47
    %s65 = sphi 0, %s65
    %s67 = sphi 0, %s65
    %s68 = sphi 0, %s67
    %s82 = sphi 0, %s68
    %s86 = sphi 0, %s86
    %s88 = sphi 0, %s86
    %s89 = sphi 0, %s88
    %s103 = sphi 0, %s89
    %s109 = sphi 0, %s111
    %s112 = sphi 0, %s109
    %s113 = sphi 0, %s112
    %s129 = sphi 0, %s113
  $region4: #{dappm_forward.7} parent=0 // loop_header_branch
    %13 = sbr.rel (%p11) target = $region8
  $region5: #{dappm_forward.7} parent=0 // loop_body
    %s15 = ssub.s32 %s10, 1
    %s16 = ssub.s32 %s10, 2
    %s17 = sadd.s32 %s10, 1
    %s18 = ssub.s32 %s10, %s17
    %p19 = scmp.eq.s32.totalorder %s18, 0
    %s21 = sadd.s32 %s20, 1
    %s22 = scalar_select %p19, %s20, %s21
    %p25 = pneg %p19
    %p26 = scmp.eq.s32.totalorder %s10, 3
    %p27 = por %p25, %p26
    %p28 = scmp.ne.s32.totalorder %s20, %s23
    %p29 = scmp.eq.s32.totalorder %s10, 0
    %p30 = por %p28, %p29
    %p31 = scmp.ne.s32.totalorder %s20, %s23
    %p32 = scmp.eq.s32.totalorder %s15, 3
    %p33 = por %p31, %p32
    %p34 = scmp.ne.s32.totalorder %s23, %s24
    %p35 = scmp.eq.s32.totalorder %s15, 0
    %p36 = por %p34, %p35
    %p37 = scmp.ne.s32.totalorder %s23, %s24
    %p38 = scmp.eq.s32.totalorder %s16, 3
    %p39 = por %p37, %p38
    %p41 = scmp.ne.s32.totalorder %s24, %s40
    %p42 = scmp.eq.s32.totalorder %s16, 0
    %p43 = por %p41, %p42
    %s45 = sadd.s32 %s44, 1
    %p48 = scmp.eq.s32.totalorder %s10, 3
    %p49 = scmp.ne.s32.totalorder %s44, %s46
    %p50 = scmp.eq.s32.totalorder %s10, 0
    %p51 = por %p49, %p50
    %p52 = scmp.ne.s32.totalorder %s44, %s46
    %p53 = scmp.eq.s32.totalorder %s15, 3
    %p54 = por %p52, %p53
    %p55 = scmp.ne.s32.totalorder %s46, %s47
    %p56 = scmp.eq.s32.totalorder %s15, 0
    %p57 = por %p55, %p56
    %p58 = scmp.ne.s32.totalorder %s46, %s47
    %p59 = scmp.eq.s32.totalorder %s16, 3
    %p60 = por %p58, %p59
    %p62 = scmp.ne.s32.totalorder %s47, %s61
    %p63 = scmp.eq.s32.totalorder %s16, 0
    %p64 = por %p62, %p63
    %s66 = sadd.s32 %s65, 1
    %p69 = scmp.eq.s32.totalorder %s10, 3
    %p70 = scmp.ne.s32.totalorder %s65, %s67
    %p71 = scmp.eq.s32.totalorder %s10, 0
    %p72 = por %p70, %p71
    %p73 = scmp.ne.s32.totalorder %s65, %s67
    %p74 = scmp.eq.s32.totalorder %s15, 3
    %p75 = por %p73, %p74
    %p76 = scmp.ne.s32.totalorder %s67, %s68
    %p77 = scmp.eq.s32.totalorder %s15, 0
    %p78 = por %p76, %p77
    %p79 = scmp.ne.s32.totalorder %s67, %s68
    %p80 = scmp.eq.s32.totalorder %s16, 3
    %p81 = por %p79, %p80
    %p83 = scmp.ne.s32.totalorder %s68, %s82
    %p84 = scmp.eq.s32.totalorder %s16, 0
    %p85 = por %p83, %p84
    %s87 = sadd.s32 %s86, 1
    %p90 = scmp.eq.s32.totalorder %s10, 3
    %p91 = scmp.ne.s32.totalorder %s86, %s88
    %p92 = scmp.eq.s32.totalorder %s10, 0
    %p93 = por %p91, %p92
    %p94 = scmp.ne.s32.totalorder %s86, %s88
    %p95 = scmp.eq.s32.totalorder %s15, 3
    %p96 = por %p94, %p95
    %p97 = scmp.ne.s32.totalorder %s88, %s89
    %p98 = scmp.eq.s32.totalorder %s15, 0
    %p99 = por %p97, %p98
    %p100 = scmp.ne.s32.totalorder %s88, %s89
    %p101 = scmp.eq.s32.totalorder %s16, 3
    %p102 = por %p100, %p101
    %p104 = scmp.ne.s32.totalorder %s89, %s103
    %p105 = scmp.eq.s32.totalorder %s16, 0
    %p106 = por %p104, %p105
    %s107 = ssub.s32 %s10, %s17
    %p108 = scmp.eq.s32.totalorder %s107, 0
    %s110 = sadd.s32 %s109, 1
    %s111 = scalar_select %p108, %s109, %s110
    %p114 = pneg %p108
    %p115 = scmp.eq.s32.totalorder %s10, 3
    %p116 = por %p114, %p115
    %p117 = scmp.ne.s32.totalorder %s109, %s112
    %p118 = scmp.eq.s32.totalorder %s10, 0
    %p119 = por %p117, %p118
    %p120 = scmp.ne.s32.totalorder %s109, %s112
    %p121 = scmp.eq.s32.totalorder %s15, 3
    %p122 = por %p120, %p121
    %p123 = scmp.ne.s32.totalorder %s112, %s113
    %p124 = scmp.eq.s32.totalorder %s15, 0
    %p125 = por %p123, %p124
    %p126 = scmp.ne.s32.totalorder %s112, %s113
    %p127 = scmp.eq.s32.totalorder %s16, 3
    %p128 = por %p126, %p127
    %p130 = scmp.ne.s32.totalorder %s113, %s129
    %p131 = scmp.eq.s32.totalorder %s16, 0
    %p132 = por %p130, %p131
    %p133 = scmp.le.s32.totalorder 1, %s10
    %p134 = scmp.lt.s32.totalorder %s10, 5
    %p135 = pnand %p133, %p134
    %p136 = pneg %p135
    // Predicated region
    $region9: #{dappm_forward.7} parent=5 // pred_check
      _
    $region10: #{dappm_forward.7} parent=5 // pred_check_branch
      %138 = sbr.rel (%p135) target = $region12
    $region11: #{dappm_forward.7} parent=5 // pred_region
      %s139 = ssub.s32 %s10, 1
      // Predicated region
      $region13: #{dappm_forward.7} parent=11 // pred_check
        %p140 = pneg %p57
      $region14: #{dappm_forward.7} parent=11 // pred_check_branch
        %142 = sbr.rel (%p140) target = $region16
      $region15: #{dappm_forward.7} parent=11 // pred_region
        _
      $region16: #{dappm_forward.7} parent=11 // pred_fallthru
        _
      // Predicated region
      $region17: #{dappm_forward.7} parent=11 // pred_check
        %p143 = pneg %p78
      $region18: #{dappm_forward.7} parent=11 // pred_check_branch
        %145 = sbr.rel (%p143) target = $region20
      $region19: #{dappm_forward.7} parent=11 // pred_region
        _
      $region20: #{dappm_forward.7} parent=11 // pred_fallthru
        _
      // Predicated region
      $region21: #{dappm_forward.7} parent=11 // pred_check
        %p146 = pneg %p99
      $region22: #{dappm_forward.7} parent=11 // pred_check_branch
        %148 = sbr.rel (%p146) target = $region24
      $region23: #{dappm_forward.7} parent=11 // pred_region
        _
      $region24: #{dappm_forward.7} parent=11 // pred_fallthru
        _
    $region12: #{dappm_forward.7} parent=5 // pred_fallthru
      _
    %p149 = scmp.lt.s32.totalorder %s10, 4
    // Predicated region
    $region25: #{dappm_forward.7} parent=5 // pred_check
      %p150 = pneg %p149
    $region26: #{dappm_forward.7} parent=5 // pred_check_branch
      %152 = sbr.rel (%p150) target = $region28
    $region27: #{dappm_forward.7} parent=5 // pred_region
      // Predicated region
      $region29: #{dappm_forward.7} parent=27 // pred_check
        %p153 = pneg %p30
      $region30: #{dappm_forward.7} parent=27 // pred_check_branch
        %155 = sbr.rel (%p153) target = $region32
      $region31: #{dappm_forward.7} parent=27 // pred_region
        %s156 = smul.u32 16, %s10
        %p157 = scmp.lt.s32.totalorder %s156, 63
        %s158 = scalar_select %p157, %s156, 63
        %s159 = smul.addr %s158, 4
        %s160 = scalar_lea.vmem %s0, %s159
        %s161 = smul.u32 16, %s10
      $region32: #{dappm_forward.7} parent=27 // pred_fallthru
        _
    $region28: #{dappm_forward.7} parent=5 // pred_fallthru
      _
    %p162 = scmp.le.s32.totalorder 1, %s10
    %p163 = scmp.lt.s32.totalorder %s10, 5
    %p164 = pnand %p162, %p163
    %p165 = pneg %p164
    // Predicated region
    $region33: #{dappm_forward.7} parent=5 // pred_check
      _
    $region34: #{dappm_forward.7} parent=5 // pred_check_branch
      %167 = sbr.rel (%p164) target = $region36
    $region35: #{dappm_forward.7} parent=5 // pred_region
      %s168 = ssub.s32 %s10, 1
      %s169 = smul.u32 16, %s15
      %p170 = scmp.lt.s32.totalorder %s169, 63
      %s171 = scalar_select %p170, %s169, 63
      %s172 = smul.addr %s171, 4
      %s173 = scalar_lea.vmem %s0, %s172
      %p174 = pneg %p36
      %p175 = pneg %p33
      %p176 = pneg %p57
      %p177 = pneg %p54
      %p178 = pneg %p78
      %p179 = pneg %p75
      %p180 = pneg %p99
      %p181 = pneg %p96
      %p182 = pneg %p125
      %p183 = pneg %p122
      %s184 = smul.u32 16, %s15
      %p185 = scmp.lt.s32.totalorder %s184, 63
      %s186 = scalar_select %p185, %s184, 63
      %s187 = smul.addr %s186, 4
      %s188 = scalar_lea.vmem %s4, %s187
      %s189 = smul.u32 16, %s15
      %p190 = scmp.lt.s32.totalorder %s189, 63
      %s191 = scalar_select %p190, %s189, 63
      %s192 = smul.addr %s191, 4
      %s193 = scalar_lea.vmem %s0, %s192
      %s194 = smul.u32 16, %s15
      %s195 = smul.u32 16, %s15
      %p196 = scmp.lt.s32.totalorder %s195, 63
      %s197 = scalar_select %p196, %s195, 63
      %s198 = smul.addr %s197, 4
      %s199 = scalar_lea.vmem %s4, %s198
      %s200 = smul.u32 16, %s15
      %v202 = vld [vmem:[%s193] sm:$0xf]
      %v203 = vld [vmem:[%s193 + $0x4] sm:$0xf]
      %v204 = vld [vmem:[%s193 + $0x8] sm:$0xf]
      %v205 = vld [vmem:[%s193 + $0xc] sm:$0xf]
      %v206 = vld [vmem:[%s193 + $0x10] sm:$0xf]
      %v207 = vld [vmem:[%s193 + $0x14] sm:$0xf]
      %v208 = vld [vmem:[%s193 + $0x18] sm:$0xf]
      %v209 = vld [vmem:[%s193 + $0x1c] sm:$0xf]
      %v210 = vld [vmem:[%s193 + $0x20] sm:$0xf]
      %v211 = vld [vmem:[%s193 + $0x24] sm:$0xf]
      %v212 = vld [vmem:[%s193 + $0x28] sm:$0xf]
      %v213 = vld [vmem:[%s193 + $0x2c] sm:$0xf]
      %v214 = vld [vmem:[%s193 + $0x30] sm:$0xf]
      %v215 = vld [vmem:[%s193 + $0x34] sm:$0xf]
      %v216 = vld [vmem:[%s193 + $0x38] sm:$0xf]
      %v217 = vld [vmem:[%s193 + $0x3c] sm:$0xf]
      %v218 = vld [vmem:[%s1] sm:$0x3]
      %v235 = vunpack.c.l.b16 %v202
      %v236 = vunpack.c.l.b16 %v203
      %v237 = vunpack.c.l.b16 %v204
      %v238 = vunpack.c.l.b16 %v205
      %v239 = vunpack.c.l.b16 %v206
      %v240 = vunpack.c.l.b16 %v207
      %v241 = vunpack.c.l.b16 %v208
      %v242 = vunpack.c.l.b16 %v209
      %v243 = vunpack.c.l.b16 %v210
      %v244 = vunpack.c.l.b16 %v211
      %v245 = vunpack.c.l.b16 %v212
      %v246 = vunpack.c.l.b16 %v213
      %v247 = vunpack.c.l.b16 %v214
      %v248 = vunpack.c.l.b16 %v215
      %v249 = vunpack.c.l.b16 %v216
      %v250 = vunpack.c.l.b16 %v217
      %v251 = vpack.c.b16 %v236, %v235
      %v252 = vpack.c.b16 %v238, %v237
      %v253 = vpack.c.b16 %v240, %v239
      %v254 = vpack.c.b16 %v242, %v241
      %v255 = vpack.c.b16 %v244, %v243
      %v256 = vpack.c.b16 %v246, %v245
      %v257 = vpack.c.b16 %v248, %v247
      %v258 = vpack.c.b16 %v250, %v249
      %vm259 = vcmask 31744
      %v261 = vsel %vm259, %v251, 0
      %v264 = vsel %vm259, %v252, 0
      %v267 = vsel %vm259, %v253, 0
      %v270 = vsel %vm259, %v254, 0
      %v273 = vsel %vm259, %v255, 0
      %v276 = vsel %vm259, %v256, 0
      %v279 = vsel %vm259, %v257, 0
      %v282 = vsel %vm259, %v258, 0
      %vm284 = vcmask 1041408
      %v286 = vsel %vm284, %v218, 0
      %288 = vmatpush.bf16.msra.mxu0 0
      %289 = vmatpush.bf16.msra.mxu0 0
      %290 = vmatpush.bf16.msra.mxu0 0
      %291 = vmatpush.bf16.msra.mxu0 0
      %292 = vmatpush.bf16.msra.mxu0 0
      %293 = vmatpush.bf16.msra.mxu0 0
      %294 = vmatpush.bf16.msra.mxu0 0
      %295 = vmatpush.bf16.msra.mxu0 %v286
      %296 = vmatmul.bf16.gmra.mxu0 %v261
      %v297 = vpop.f32.mrf.mxu0
      %v298 = vadd.f32 0.0, %v297
      %v299 = vpop.f32.mrf.mxu0
      %v300 = vadd.f32 0.0, %v299
      %301 = vmatmul.bf16.gmra.mxu0 %v264
      %v302 = vpop.f32.mrf.mxu0
      %v303 = vadd.f32 0.0, %v302
      %v304 = vpop.f32.mrf.mxu0
      %v305 = vadd.f32 0.0, %v304
      %306 = vmatmul.bf16.gmra.mxu0 %v267
      %v307 = vpop.f32.mrf.mxu0
      %v308 = vadd.f32 0.0, %v307
      %v309 = vpop.f32.mrf.mxu0
      %v310 = vadd.f32 0.0, %v309
      %311 = vmatmul.bf16.gmra.mxu0 %v270
      %v312 = vpop.f32.mrf.mxu0
      %v313 = vadd.f32 0.0, %v312
      %v314 = vpop.f32.mrf.mxu0
      %v315 = vadd.f32 0.0, %v314
      %316 = vmatmul.bf16.gmra.mxu0 %v273
      %v317 = vpop.f32.mrf.mxu0
      %v318 = vadd.f32 0.0, %v317
      %v319 = vpop.f32.mrf.mxu0
      %v320 = vadd.f32 0.0, %v319
      %321 = vmatmul.bf16.gmra.mxu0 %v276
      %v322 = vpop.f32.mrf.mxu0
      %v323 = vadd.f32 0.0, %v322
      %v324 = vpop.f32.mrf.mxu0
      %v325 = vadd.f32 0.0, %v324
      %326 = vmatmul.bf16.gmra.mxu0 %v279
      %v327 = vpop.f32.mrf.mxu0
      %v328 = vadd.f32 0.0, %v327
      %v329 = vpop.f32.mrf.mxu0
      %v330 = vadd.f32 0.0, %v329
      %331 = vmatmul.bf16.gmra.mxu0 %v282
      %v332 = vpop.f32.mrf.mxu0
      %v333 = vadd.f32 0.0, %v332
      %v334 = vpop.f32.mrf.mxu0
      %v335 = vadd.f32 0.0, %v334
      %336 = vdwg.mxu0
      %v337 = vld [vmem:[%s2] sm:$0x1]
      %v339 = vperm.slane %v337, 0
      %v341 = vmul.f32 %v298, %v339
      %v342 = vmul.f32 %v300, %v339
      %v343 = vmul.f32 %v303, %v339
      %v344 = vmul.f32 %v305, %v339
      %v345 = vmul.f32 %v308, %v339
      %v346 = vmul.f32 %v310, %v339
      %v347 = vmul.f32 %v313, %v339
      %v348 = vmul.f32 %v315, %v339
      %v349 = vmul.f32 %v318, %v339
      %v350 = vmul.f32 %v320, %v339
      %v351 = vmul.f32 %v323, %v339
      %v352 = vmul.f32 %v325, %v339
      %v353 = vmul.f32 %v328, %v339
      %v354 = vmul.f32 %v330, %v339
      %v355 = vmul.f32 %v333, %v339
      %v356 = vmul.f32 %v335, %v339
      %v357 = vld [vmem:[%s3] sm:$0x1]
      %v359 = vperm.slane %v357, 0
      %v361 = vadd.f32 %v341, %v359
      %v362 = vadd.f32 %v342, %v359
      %v363 = vadd.f32 %v343, %v359
      %v364 = vadd.f32 %v344, %v359
      %v365 = vadd.f32 %v345, %v359
      %v366 = vadd.f32 %v346, %v359
      %v367 = vadd.f32 %v347, %v359
      %v368 = vadd.f32 %v348, %v359
      %v369 = vadd.f32 %v349, %v359
      %v370 = vadd.f32 %v350, %v359
      %v371 = vadd.f32 %v351, %v359
      %v372 = vadd.f32 %v352, %v359
      %v373 = vadd.f32 %v353, %v359
      %v374 = vadd.f32 %v354, %v359
      %v375 = vadd.f32 %v355, %v359
      %v376 = vadd.f32 %v356, %v359
      %v377 = vmax.f32 %v361, 0.0
      %v378 = vmax.f32 %v362, 0.0
      %v379 = vmax.f32 %v363, 0.0
      %v380 = vmax.f32 %v364, 0.0
      %v381 = vmax.f32 %v365, 0.0
      %v382 = vmax.f32 %v366, 0.0
      %v383 = vmax.f32 %v367, 0.0
      %v384 = vmax.f32 %v368, 0.0
      %v385 = vmax.f32 %v369, 0.0
      %v386 = vmax.f32 %v370, 0.0
      %v387 = vmax.f32 %v371, 0.0
      %v388 = vmax.f32 %v372, 0.0
      %v389 = vmax.f32 %v373, 0.0
      %v390 = vmax.f32 %v374, 0.0
      %v391 = vmax.f32 %v375, 0.0
      %v392 = vmax.f32 %v376, 0.0
      %v393 = vpack.c.bf16 %v377, %v377
      %v394 = vpack.c.bf16 %v378, %v378
      %v395 = vpack.c.bf16 %v379, %v379
      %v396 = vpack.c.bf16 %v380, %v380
      %v397 = vpack.c.bf16 %v381, %v381
      %v398 = vpack.c.bf16 %v382, %v382
      %v399 = vpack.c.bf16 %v383, %v383
      %v400 = vpack.c.bf16 %v384, %v384
      %v401 = vpack.c.bf16 %v385, %v385
      %v402 = vpack.c.bf16 %v386, %v386
      %v403 = vpack.c.bf16 %v387, %v387
      %v404 = vpack.c.bf16 %v388, %v388
      %v405 = vpack.c.bf16 %v389, %v389
      %v406 = vpack.c.bf16 %v390, %v390
      %v407 = vpack.c.bf16 %v391, %v391
      %v408 = vpack.c.bf16 %v392, %v392
      %vm409 = vcmask 60416
      %410 = vst.msk [vmem:[%s199] sm:$0xf] %vm409, %v393
      %411 = vst.msk [vmem:[%s199 + $0x4] sm:$0xf] %vm409, %v394
      %412 = vst.msk [vmem:[%s199 + $0x8] sm:$0xf] %vm409, %v395
      %413 = vst.msk [vmem:[%s199 + $0xc] sm:$0xf] %vm409, %v396
      %414 = vst.msk [vmem:[%s199 + $0x10] sm:$0xf] %vm409, %v397
      %415 = vst.msk [vmem:[%s199 + $0x14] sm:$0xf] %vm409, %v398
      %416 = vst.msk [vmem:[%s199 + $0x18] sm:$0xf] %vm409, %v399
      %417 = vst.msk [vmem:[%s199 + $0x1c] sm:$0xf] %vm409, %v400
      %418 = vst.msk [vmem:[%s199 + $0x20] sm:$0xf] %vm409, %v401
      %419 = vst.msk [vmem:[%s199 + $0x24] sm:$0xf] %vm409, %v402
      %420 = vst.msk [vmem:[%s199 + $0x28] sm:$0xf] %vm409, %v403
      %421 = vst.msk [vmem:[%s199 + $0x2c] sm:$0xf] %vm409, %v404
      %422 = vst.msk [vmem:[%s199 + $0x30] sm:$0xf] %vm409, %v405
      %423 = vst.msk [vmem:[%s199 + $0x34] sm:$0xf] %vm409, %v406
      %424 = vst.msk [vmem:[%s199 + $0x38] sm:$0xf] %vm409, %v407
      %425 = vst.msk [vmem:[%s199 + $0x3c] sm:$0xf] %vm409, %v408
      %s426 = smul.u32 16, %s15
      %p427 = scmp.lt.s32.totalorder %s426, 63
      %s428 = scalar_select %p427, %s426, 63
      %s429 = smul.addr %s428, 4
      %s430 = scalar_lea.vmem %s4, %s429
      // Predicated region
      $region37: #{dappm_forward.7} parent=35 // pred_check
        %p431 = pneg %p122
      $region38: #{dappm_forward.7} parent=35 // pred_check_branch
        %433 = sbr.rel (%p431) target = $region40
      $region39: #{dappm_forward.7} parent=35 // pred_region
        %s434 = smul.u32 16, %s15
      $region40: #{dappm_forward.7} parent=35 // pred_fallthru
        _
    $region36: #{dappm_forward.7} parent=5 // pred_fallthru
      _
    %p435 = scmp.le.s32.totalorder 2, %s10
    // Predicated region
    $region41: #{dappm_forward.7} parent=5 // pred_check
      %p436 = pneg %p435
    $region42: #{dappm_forward.7} parent=5 // pred_check_branch
      %438 = sbr.rel (%p436) target = $region44
    $region43: #{dappm_forward.7} parent=5 // pred_region
      %s439 = ssub.s32 %s10, 2
      // Predicated region
      $region45: #{dappm_forward.7} parent=43 // pred_check
        %p440 = pneg %p128
      $region46: #{dappm_forward.7} parent=43 // pred_check_branch
        %442 = sbr.rel (%p440) target = $region48
      $region47: #{dappm_forward.7} parent=43 // pred_region
        %s443 = smul.u32 16, %s16
        %p444 = scmp.lt.s32.totalorder %s443, 63
        %s445 = scalar_select %p444, %s443, 63
        %s446 = smul.addr %s445, 4
        %s447 = scalar_lea.vmem %s4, %s446
      $region48: #{dappm_forward.7} parent=43 // pred_fallthru
        _
    $region44: #{dappm_forward.7} parent=5 // pred_fallthru
      _
  $region6: #{dappm_forward.7} parent=0 // loop_footer
    %s14 = sadd.s32 1, %s10
  $region7: #{dappm_forward.7} parent=0 // loop_footer_branch
    %9 = sbr.rel target = $region3
  $region8: #{dappm_forward.7} parent=0 // loop_exit
    _

// kernel: dappm_forward.13
$region0: #{dappm_forward.13}
  #allocation0 [shape = 'u32[]', space=smem, size = 0x4, offset = 0x4, fixed_abs, tag = 'smem constant byte address 0x4 - core index']
  #allocation1 [shape = 'u32[72,128]{1,0:T(1,128)}', space=vmem, size = 0x9000, scoped, tag = 'internal scratch']
  %s0 = inlined_call_operand.vmem [shape: bf16[512,8], index: 0, kind: input, shape index: {}]
  %s1 = inlined_call_operand.vmem [shape: bf16[512,8], index: 1, kind: input, shape index: {}]
  %s2 = inlined_call_operand.vmem [shape: bf16[512,8], index: 2, kind: input, shape index: {}]
  %s3 = inlined_call_operand.vmem [shape: bf16[512,8], index: 3, kind: input, shape index: {}]
  %s4 = inlined_call_operand.vmem [shape: bf16[512,8], index: 4, kind: input, shape index: {}]
  %s5 = inlined_call_operand.vmem [shape: bf16[512,4], index: 5, kind: input, shape index: {}]
  %s6 = inlined_call_operand.vmem [shape: bf16[5,8,8], index: 6, kind: input, shape index: {}]
  %s7 = inlined_call_operand.vmem [shape: f32[1,8], index: 7, kind: input, shape index: {}]
  %s8 = inlined_call_operand.vmem [shape: f32[1,8], index: 8, kind: input, shape index: {}]
  %s9 = inlined_call_operand.vmem [shape: bf16[4,8], index: 9, kind: input, shape index: {}]
  %s10 = inlined_call_operand.vmem [shape: f32[1,8], index: 10, kind: input, shape index: {}]
  %s11 = inlined_call_operand.vmem [shape: f32[1,8], index: 11, kind: input, shape index: {}]
  %s12 = inlined_call_operand.vmem [shape: f32[512,8], index: 12, kind: output, shape index: {}]
  %s13 = sld [smem:[#allocation0]]
  $region81: #{dappm_forward.13} parent=0
    _
  %s15 = ssub.s32 1, %s13
  %s16 = scalar_select 0, %s15, %s13
  loop: start=0, step=1, limit=6
  $region2: #{dappm_forward.13} parent=0 // loop_pre_header
    _
  $region3: #{dappm_forward.13} parent=0 // loop_header
    %s18 = sphi 0, %s22
    %p19 = scmp.ge.s32.totalorder %s18, 6
    %s28 = sphi 0, %s30
    %s31 = sphi 0, %s28
    %s32 = sphi 0, %s31
    %s48 = sphi 0, %s32
    %s54 = sphi 0, %s56
    %s57 = sphi 0, %s54
    %s58 = sphi 0, %s57
    %s74 = sphi 0, %s58
    %s80 = sphi 0, %s82
    %s83 = sphi 0, %s80
    %s84 = sphi 0, %s83
    %s100 = sphi 0, %s84
    %s106 = sphi 0, %s108
    %s109 = sphi 0, %s106
    %s110 = sphi 0, %s109
    %s126 = sphi 0, %s110
    %s132 = sphi 0, %s134
    %s135 = sphi 0, %s132
    %s136 = sphi 0, %s135
    %s152 = sphi 0, %s136
    %s158 = sphi 0, %s160
    %s161 = sphi 0, %s158
    %s162 = sphi 0, %s161
    %s178 = sphi 0, %s162
    %s182 = sphi 0, %s182
    %s184 = sphi 0, %s182
    %s185 = sphi 0, %s184
    %s199 = sphi 0, %s185
    %s203 = sphi 0, %s203
    %s205 = sphi 0, %s203
    %s206 = sphi 0, %s205
    %s220 = sphi 0, %s206
    %s224 = sphi 0, %s224
    %s226 = sphi 0, %s224
    %s227 = sphi 0, %s226
    %s241 = sphi 0, %s227
    %s245 = sphi 0, %s245
    %s247 = sphi 0, %s245
    %s248 = sphi 0, %s247
    %s262 = sphi 0, %s248
    %s266 = sphi 0, %s266
    %s268 = sphi 0, %s266
    %s269 = sphi 0, %s268
    %s283 = sphi 0, %s269
    %s287 = sphi 0, %s287
    %s289 = sphi 0, %s287
    %s290 = sphi 0, %s289
    %s304 = sphi 0, %s290
    %s310 = sphi 0, %s312
    %s313 = sphi 0, %s310
    %s314 = sphi 0, %s313
    %s330 = sphi 0, %s314
  $region4: #{dappm_forward.13} parent=0 // loop_header_branch
    %21 = sbr.rel (%p19) target = $region8
  $region5: #{dappm_forward.13} parent=0 // loop_body
    %s23 = ssub.s32 %s18, 1
    %s24 = ssub.s32 %s18, 2
    %s25 = sadd.s32 %s18, 1
    %s26 = ssub.s32 %s18, %s25
    %p27 = scmp.eq.s32.totalorder %s26, 0
    %s29 = sadd.s32 %s28, 1
    %s30 = scalar_select %p27, %s28, %s29
    %p33 = pneg %p27
    %p34 = scmp.eq.s32.totalorder %s18, 3
    %p35 = por %p33, %p34
    %p36 = scmp.ne.s32.totalorder %s28, %s31
    %p37 = scmp.eq.s32.totalorder %s18, 0
    %p38 = por %p36, %p37
    %p39 = scmp.ne.s32.totalorder %s28, %s31
    %p40 = scmp.eq.s32.totalorder %s23, 3
    %p41 = por %p39, %p40
    %p42 = scmp.ne.s32.totalorder %s31, %s32
    %p43 = scmp.eq.s32.totalorder %s23, 0
    %p44 = por %p42, %p43
    %p45 = scmp.ne.s32.totalorder %s31, %s32
    %p46 = scmp.eq.s32.totalorder %s24, 3
    %p47 = por %p45, %p46
    %p49 = scmp.ne.s32.totalorder %s32, %s48
    %p50 = scmp.eq.s32.totalorder %s24, 0
    %p51 = por %p49, %p50
    %s52 = ssub.s32 %s18, %s25
    %p53 = scmp.eq.s32.totalorder %s52, 0
    %s55 = sadd.s32 %s54, 1
    %s56 = scalar_select %p53, %s54, %s55
    %p59 = pneg %p53
    %p60 = scmp.eq.s32.totalorder %s18, 3
    %p61 = por %p59, %p60
    %p62 = scmp.ne.s32.totalorder %s54, %s57
    %p63 = scmp.eq.s32.totalorder %s18, 0
    %p64 = por %p62, %p63
    %p65 = scmp.ne.s32.totalorder %s54, %s57
    %p66 = scmp.eq.s32.totalorder %s23, 3
    %p67 = por %p65, %p66
    %p68 = scmp.ne.s32.totalorder %s57, %s58
    %p69 = scmp.eq.s32.totalorder %s23, 0
    %p70 = por %p68, %p69
    %p71 = scmp.ne.s32.totalorder %s57, %s58
    %p72 = scmp.eq.s32.totalorder %s24, 3
    %p73 = por %p71, %p72
    %p75 = scmp.ne.s32.totalorder %s58, %s74
    %p76 = scmp.eq.s32.totalorder %s24, 0
    %p77 = por %p75, %p76
    %s78 = ssub.s32 %s18, %s25
    %p79 = scmp.eq.s32.totalorder %s78, 0
    %s81 = sadd.s32 %s80, 1
    %s82 = scalar_select %p79, %s80, %s81
    %p85 = pneg %p79
    %p86 = scmp.eq.s32.totalorder %s18, 3
    %p87 = por %p85, %p86
    %p88 = scmp.ne.s32.totalorder %s80, %s83
    %p89 = scmp.eq.s32.totalorder %s18, 0
    %p90 = por %p88, %p89
    %p91 = scmp.ne.s32.totalorder %s80, %s83
    %p92 = scmp.eq.s32.totalorder %s23, 3
    %p93 = por %p91, %p92
    %p94 = scmp.ne.s32.totalorder %s83, %s84
    %p95 = scmp.eq.s32.totalorder %s23, 0
    %p96 = por %p94, %p95
    %p97 = scmp.ne.s32.totalorder %s83, %s84
    %p98 = scmp.eq.s32.totalorder %s24, 3
    %p99 = por %p97, %p98
    %p101 = scmp.ne.s32.totalorder %s84, %s100
    %p102 = scmp.eq.s32.totalorder %s24, 0
    %p103 = por %p101, %p102
    %s104 = ssub.s32 %s18, %s25
    %p105 = scmp.eq.s32.totalorder %s104, 0
    %s107 = sadd.s32 %s106, 1
    %s108 = scalar_select %p105, %s106, %s107
    %p111 = pneg %p105
    %p112 = scmp.eq.s32.totalorder %s18, 3
    %p113 = por %p111, %p112
    %p114 = scmp.ne.s32.totalorder %s106, %s109
    %p115 = scmp.eq.s32.totalorder %s18, 0
    %p116 = por %p114, %p115
    %p117 = scmp.ne.s32.totalorder %s106, %s109
    %p118 = scmp.eq.s32.totalorder %s23, 3
    %p119 = por %p117, %p118
    %p120 = scmp.ne.s32.totalorder %s109, %s110
    %p121 = scmp.eq.s32.totalorder %s23, 0
    %p122 = por %p120, %p121
    %p123 = scmp.ne.s32.totalorder %s109, %s110
    %p124 = scmp.eq.s32.totalorder %s24, 3
    %p125 = por %p123, %p124
    %p127 = scmp.ne.s32.totalorder %s110, %s126
    %p128 = scmp.eq.s32.totalorder %s24, 0
    %p129 = por %p127, %p128
    %s130 = ssub.s32 %s18, %s25
    %p131 = scmp.eq.s32.totalorder %s130, 0
    %s133 = sadd.s32 %s132, 1
    %s134 = scalar_select %p131, %s132, %s133
    %p137 = pneg %p131
    %p138 = scmp.eq.s32.totalorder %s18, 3
    %p139 = por %p137, %p138
    %p140 = scmp.ne.s32.totalorder %s132, %s135
    %p141 = scmp.eq.s32.totalorder %s18, 0
    %p142 = por %p140, %p141
    %p143 = scmp.ne.s32.totalorder %s132, %s135
    %p144 = scmp.eq.s32.totalorder %s23, 3
    %p145 = por %p143, %p144
    %p146 = scmp.ne.s32.totalorder %s135, %s136
    %p147 = scmp.eq.s32.totalorder %s23, 0
    %p148 = por %p146, %p147
    %p149 = scmp.ne.s32.totalorder %s135, %s136
    %p150 = scmp.eq.s32.totalorder %s24, 3
    %p151 = por %p149, %p150
    %p153 = scmp.ne.s32.totalorder %s136, %s152
    %p154 = scmp.eq.s32.totalorder %s24, 0
    %p155 = por %p153, %p154
    %s156 = ssub.s32 %s18, %s25
    %p157 = scmp.eq.s32.totalorder %s156, 0
    %s159 = sadd.s32 %s158, 1
    %s160 = scalar_select %p157, %s158, %s159
    %p163 = pneg %p157
    %p164 = scmp.eq.s32.totalorder %s18, 3
    %p165 = por %p163, %p164
    %p166 = scmp.ne.s32.totalorder %s158, %s161
    %p167 = scmp.eq.s32.totalorder %s18, 0
    %p168 = por %p166, %p167
    %p169 = scmp.ne.s32.totalorder %s158, %s161
    %p170 = scmp.eq.s32.totalorder %s23, 3
    %p171 = por %p169, %p170
    %p172 = scmp.ne.s32.totalorder %s161, %s162
    %p173 = scmp.eq.s32.totalorder %s23, 0
    %p174 = por %p172, %p173
    %p175 = scmp.ne.s32.totalorder %s161, %s162
    %p176 = scmp.eq.s32.totalorder %s24, 3
    %p177 = por %p175, %p176
    %p179 = scmp.ne.s32.totalorder %s162, %s178
    %p180 = scmp.eq.s32.totalorder %s24, 0
    %p181 = por %p179, %p180
    %s183 = sadd.s32 %s182, 1
    %p186 = scmp.eq.s32.totalorder %s18, 3
    %p187 = scmp.ne.s32.totalorder %s182, %s184
    %p188 = scmp.eq.s32.totalorder %s18, 0
    %p189 = por %p187, %p188
    %p190 = scmp.ne.s32.totalorder %s182, %s184
    %p191 = scmp.eq.s32.totalorder %s23, 3
    %p192 = por %p190, %p191
    %p193 = scmp.ne.s32.totalorder %s184, %s185
    %p194 = scmp.eq.s32.totalorder %s23, 0
    %p195 = por %p193, %p194
    %p196 = scmp.ne.s32.totalorder %s184, %s185
    %p197 = scmp.eq.s32.totalorder %s24, 3
    %p198 = por %p196, %p197
    %p200 = scmp.ne.s32.totalorder %s185, %s199
    %p201 = scmp.eq.s32.totalorder %s24, 0
    %p202 = por %p200, %p201
    %s204 = sadd.s32 %s203, 1
    %p207 = scmp.eq.s32.totalorder %s18, 3
    %p208 = scmp.ne.s32.totalorder %s203, %s205
    %p209 = scmp.eq.s32.totalorder %s18, 0
    %p210 = por %p208, %p209
    %p211 = scmp.ne.s32.totalorder %s203, %s205
    %p212 = scmp.eq.s32.totalorder %s23, 3
    %p213 = por %p211, %p212
    %p214 = scmp.ne.s32.totalorder %s205, %s206
    %p215 = scmp.eq.s32.totalorder %s23, 0
    %p216 = por %p214, %p215
    %p217 = scmp.ne.s32.totalorder %s205, %s206
    %p218 = scmp.eq.s32.totalorder %s24, 3
    %p219 = por %p217, %p218
    %p221 = scmp.ne.s32.totalorder %s206, %s220
    %p222 = scmp.eq.s32.totalorder %s24, 0
    %p223 = por %p221, %p222
    %s225 = sadd.s32 %s224, 1
    %p228 = scmp.eq.s32.totalorder %s18, 3
    %p229 = scmp.ne.s32.totalorder %s224, %s226
    %p230 = scmp.eq.s32.totalorder %s18, 0
    %p231 = por %p229, %p230
    %p232 = scmp.ne.s32.totalorder %s224, %s226
    %p233 = scmp.eq.s32.totalorder %s23, 3
    %p234 = por %p232, %p233
    %p235 = scmp.ne.s32.totalorder %s226, %s227
    %p236 = scmp.eq.s32.totalorder %s23, 0
    %p237 = por %p235, %p236
    %p238 = scmp.ne.s32.totalorder %s226, %s227
    %p239 = scmp.eq.s32.totalorder %s24, 3
    %p240 = por %p238, %p239
    %p242 = scmp.ne.s32.totalorder %s227, %s241
    %p243 = scmp.eq.s32.totalorder %s24, 0
    %p244 = por %p242, %p243
    %s246 = sadd.s32 %s245, 1
    %p249 = scmp.eq.s32.totalorder %s18, 3
    %p250 = scmp.ne.s32.totalorder %s245, %s247
    %p251 = scmp.eq.s32.totalorder %s18, 0
    %p252 = por %p250, %p251
    %p253 = scmp.ne.s32.totalorder %s245, %s247
    %p254 = scmp.eq.s32.totalorder %s23, 3
    %p255 = por %p253, %p254
    %p256 = scmp.ne.s32.totalorder %s247, %s248
    %p257 = scmp.eq.s32.totalorder %s23, 0
    %p258 = por %p256, %p257
    %p259 = scmp.ne.s32.totalorder %s247, %s248
    %p260 = scmp.eq.s32.totalorder %s24, 3
    %p261 = por %p259, %p260
    %p263 = scmp.ne.s32.totalorder %s248, %s262
    %p264 = scmp.eq.s32.totalorder %s24, 0
    %p265 = por %p263, %p264
    %s267 = sadd.s32 %s266, 1
    %p270 = scmp.eq.s32.totalorder %s18, 3
    %p271 = scmp.ne.s32.totalorder %s266, %s268
    %p272 = scmp.eq.s32.totalorder %s18, 0
    %p273 = por %p271, %p272
    %p274 = scmp.ne.s32.totalorder %s266, %s268
    %p275 = scmp.eq.s32.totalorder %s23, 3
    %p276 = por %p274, %p275
    %p277 = scmp.ne.s32.totalorder %s268, %s269
    %p278 = scmp.eq.s32.totalorder %s23, 0
    %p279 = por %p277, %p278
    %p280 = scmp.ne.s32.totalorder %s268, %s269
    %p281 = scmp.eq.s32.totalorder %s24, 3
    %p282 = por %p280, %p281
    %p284 = scmp.ne.s32.totalorder %s269, %s283
    %p285 = scmp.eq.s32.totalorder %s24, 0
    %p286 = por %p284, %p285
    %s288 = sadd.s32 %s287, 1
    %p291 = scmp.eq.s32.totalorder %s18, 3
    %p292 = scmp.ne.s32.totalorder %s287, %s289
    %p293 = scmp.eq.s32.totalorder %s18, 0
    %p294 = por %p292, %p293
    %p295 = scmp.ne.s32.totalorder %s287, %s289
    %p296 = scmp.eq.s32.totalorder %s23, 3
    %p297 = por %p295, %p296
    %p298 = scmp.ne.s32.totalorder %s289, %s290
    %p299 = scmp.eq.s32.totalorder %s23, 0
    %p300 = por %p298, %p299
    %p301 = scmp.ne.s32.totalorder %s289, %s290
    %p302 = scmp.eq.s32.totalorder %s24, 3
    %p303 = por %p301, %p302
    %p305 = scmp.ne.s32.totalorder %s290, %s304
    %p306 = scmp.eq.s32.totalorder %s24, 0
    %p307 = por %p305, %p306
    %s308 = ssub.s32 %s18, %s25
    %p309 = scmp.eq.s32.totalorder %s308, 0
    %s311 = sadd.s32 %s310, 1
    %s312 = scalar_select %p309, %s310, %s311
    %p315 = pneg %p309
    %p316 = scmp.eq.s32.totalorder %s18, 3
    %p317 = por %p315, %p316
    %p318 = scmp.ne.s32.totalorder %s310, %s313
    %p319 = scmp.eq.s32.totalorder %s18, 0
    %p320 = por %p318, %p319
    %p321 = scmp.ne.s32.totalorder %s310, %s313
    %p322 = scmp.eq.s32.totalorder %s23, 3
    %p323 = por %p321, %p322
    %p324 = scmp.ne.s32.totalorder %s313, %s314
    %p325 = scmp.eq.s32.totalorder %s23, 0
    %p326 = por %p324, %p325
    %p327 = scmp.ne.s32.totalorder %s313, %s314
    %p328 = scmp.eq.s32.totalorder %s24, 3
    %p329 = por %p327, %p328
    %p331 = scmp.ne.s32.totalorder %s314, %s330
    %p332 = scmp.eq.s32.totalorder %s24, 0
    %p333 = por %p331, %p332
    %p334 = scmp.le.s32.totalorder 1, %s18
    %p335 = scmp.lt.s32.totalorder %s18, 5
    %p336 = pnand %p334, %p335
    %p337 = pneg %p336
    // Predicated region
    $region9: #{dappm_forward.13} parent=5 // pred_check
      _
    $region10: #{dappm_forward.13} parent=5 // pred_check_branch
      %339 = sbr.rel (%p336) target = $region12
    $region11: #{dappm_forward.13} parent=5 // pred_region
      %s340 = ssub.s32 %s18, 1
      // Predicated region
      $region13: #{dappm_forward.13} parent=11 // pred_check
        %p341 = pneg %p195
      $region14: #{dappm_forward.13} parent=11 // pred_check_branch
        %343 = sbr.rel (%p341) target = $region16
      $region15: #{dappm_forward.13} parent=11 // pred_region
        _
      $region16: #{dappm_forward.13} parent=11 // pred_fallthru
        _
      // Predicated region
      $region17: #{dappm_forward.13} parent=11 // pred_check
        %p344 = pneg %p216
      $region18: #{dappm_forward.13} parent=11 // pred_check_branch
        %346 = sbr.rel (%p344) target = $region20
      $region19: #{dappm_forward.13} parent=11 // pred_region
        _
      $region20: #{dappm_forward.13} parent=11 // pred_fallthru
        _
      // Predicated region
      $region21: #{dappm_forward.13} parent=11 // pred_check
        %p347 = pneg %p237
      $region22: #{dappm_forward.13} parent=11 // pred_check_branch
        %349 = sbr.rel (%p347) target = $region24
      $region23: #{dappm_forward.13} parent=11 // pred_region
        _
      $region24: #{dappm_forward.13} parent=11 // pred_fallthru
        _
      // Predicated region
      $region25: #{dappm_forward.13} parent=11 // pred_check
        %p350 = pneg %p258
      $region26: #{dappm_forward.13} parent=11 // pred_check_branch
        %352 = sbr.rel (%p350) target = $region28
      $region27: #{dappm_forward.13} parent=11 // pred_region
        _
      $region28: #{dappm_forward.13} parent=11 // pred_fallthru
        _
      // Predicated region
      $region29: #{dappm_forward.13} parent=11 // pred_check
        %p353 = pneg %p279
      $region30: #{dappm_forward.13} parent=11 // pred_check_branch
        %355 = sbr.rel (%p353) target = $region32
      $region31: #{dappm_forward.13} parent=11 // pred_region
        _
      $region32: #{dappm_forward.13} parent=11 // pred_fallthru
        _
      // Predicated region
      $region33: #{dappm_forward.13} parent=11 // pred_check
        %p356 = pneg %p300
      $region34: #{dappm_forward.13} parent=11 // pred_check_branch
        %358 = sbr.rel (%p356) target = $region36
      $region35: #{dappm_forward.13} parent=11 // pred_region
        _
      $region36: #{dappm_forward.13} parent=11 // pred_fallthru
        _
    $region12: #{dappm_forward.13} parent=5 // pred_fallthru
      _
    %p359 = scmp.lt.s32.totalorder %s18, 4
    // Predicated region
    $region37: #{dappm_forward.13} parent=5 // pred_check
      %p360 = pneg %p359
    $region38: #{dappm_forward.13} parent=5 // pred_check_branch
      %362 = sbr.rel (%p360) target = $region40
    $region39: #{dappm_forward.13} parent=5 // pred_region
      // Predicated region
      $region41: #{dappm_forward.13} parent=39 // pred_check
        %p363 = pneg %p38
      $region42: #{dappm_forward.13} parent=39 // pred_check_branch
        %365 = sbr.rel (%p363) target = $region44
      $region43: #{dappm_forward.13} parent=39 // pred_region
        %s366 = smul.u32 16, %s18
        %p367 = scmp.lt.s32.totalorder %s366, 63
        %s368 = scalar_select %p367, %s366, 63
        %s369 = smul.addr %s368, 4
        %s370 = scalar_lea.vmem %s0, %s369
        %s371 = smul.u32 16, %s18
      $region44: #{dappm_forward.13} parent=39 // pred_fallthru
        _
      // Predicated region
      $region45: #{dappm_forward.13} parent=39 // pred_check
        %p372 = pneg %p64
      $region46: #{dappm_forward.13} parent=39 // pred_check_branch
        %374 = sbr.rel (%p372) target = $region48
      $region47: #{dappm_forward.13} parent=39 // pred_region
        %s375 = smul.u32 16, %s18
        %p376 = scmp.lt.s32.totalorder %s375, 63
        %s377 = scalar_select %p376, %s375, 63
        %s378 = smul.addr %s377, 4
        %s379 = scalar_lea.vmem %s1, %s378
        %s380 = smul.u32 16, %s18
      $region48: #{dappm_forward.13} parent=39 // pred_fallthru
        _
      // Predicated region
      $region49: #{dappm_forward.13} parent=39 // pred_check
        %p381 = pneg %p90
      $region50: #{dappm_forward.13} parent=39 // pred_check_branch
        %383 = sbr.rel (%p381) target = $region52
      $region51: #{dappm_forward.13} parent=39 // pred_region
        %s384 = smul.u32 16, %s18
        %p385 = scmp.lt.s32.totalorder %s384, 63
        %s386 = scalar_select %p385, %s384, 63
        %s387 = smul.addr %s386, 4
        %s388 = scalar_lea.vmem %s2, %s387
        %s389 = smul.u32 16, %s18
      $region52: #{dappm_forward.13} parent=39 // pred_fallthru
        _
      // Predicated region
      $region53: #{dappm_forward.13} parent=39 // pred_check
        %p390 = pneg %p116
      $region54: #{dappm_forward.13} parent=39 // pred_check_branch
        %392 = sbr.rel (%p390) target = $region56
      $region55: #{dappm_forward.13} parent=39 // pred_region
        %s393 = smul.u32 16, %s18
        %p394 = scmp.lt.s32.totalorder %s393, 63
        %s395 = scalar_select %p394, %s393, 63
        %s396 = smul.addr %s395, 4
        %s397 = scalar_lea.vmem %s3, %s396
        %s398 = smul.u32 16, %s18
      $region56: #{dappm_forward.13} parent=39 // pred_fallthru
        _
      // Predicated region
      $region57: #{dappm_forward.13} parent=39 // pred_check
        %p399 = pneg %p142
      $region58: #{dappm_forward.13} parent=39 // pred_check_branch
        %401 = sbr.rel (%p399) target = $region60
      $region59: #{dappm_forward.13} parent=39 // pred_region
        %s402 = smul.u32 16, %s18
        %p403 = scmp.lt.s32.totalorder %s402, 63
        %s404 = scalar_select %p403, %s402, 63
        %s405 = smul.addr %s404, 4
        %s406 = scalar_lea.vmem %s4, %s405
        %s407 = smul.u32 16, %s18
      $region60: #{dappm_forward.13} parent=39 // pred_fallthru
        _
      // Predicated region
      $region61: #{dappm_forward.13} parent=39 // pred_check
        %p408 = pneg %p168
      $region62: #{dappm_forward.13} parent=39 // pred_check_branch
        %410 = sbr.rel (%p408) target = $region64
      $region63: #{dappm_forward.13} parent=39 // pred_region
        %s411 = smul.u32 16, %s18
        %p412 = scmp.lt.s32.totalorder %s411, 63
        %s413 = scalar_select %p412, %s411, 63
        %s414 = smul.addr %s413, 4
        %s415 = scalar_lea.vmem %s5, %s414
        %s416 = smul.u32 16, %s18
      $region64: #{dappm_forward.13} parent=39 // pred_fallthru
        _
    $region40: #{dappm_forward.13} parent=5 // pred_fallthru
      _
    %p417 = scmp.le.s32.totalorder 1, %s18
    %p418 = scmp.lt.s32.totalorder %s18, 5
    %p419 = pnand %p417, %p418
    %p420 = pneg %p419
    // Predicated region
    $region65: #{dappm_forward.13} parent=5 // pred_check
      _
    $region66: #{dappm_forward.13} parent=5 // pred_check_branch
      %422 = sbr.rel (%p419) target = $region68
    $region67: #{dappm_forward.13} parent=5 // pred_region
      %s423 = ssub.s32 %s18, 1
      %s424 = smul.u32 16, %s23
      %p425 = scmp.lt.s32.totalorder %s424, 63
      %s426 = scalar_select %p425, %s424, 63
      %s427 = smul.addr %s426, 4
      %s428 = scalar_lea.vmem %s0, %s427
      %p429 = pneg %p44
      %p430 = pneg %p41
      %s431 = smul.u32 16, %s23
      %p432 = scmp.lt.s32.totalorder %s431, 63
      %s433 = scalar_select %p432, %s431, 63
      %s434 = smul.addr %s433, 4
      %s435 = scalar_lea.vmem %s1, %s434
      %p436 = pneg %p70
      %p437 = pneg %p67
      %s438 = smul.u32 16, %s23
      %p439 = scmp.lt.s32.totalorder %s438, 63
      %s440 = scalar_select %p439, %s438, 63
      %s441 = smul.addr %s440, 4
      %s442 = scalar_lea.vmem %s2, %s441
      %p443 = pneg %p96
      %p444 = pneg %p93
      %s445 = smul.u32 16, %s23
      %p446 = scmp.lt.s32.totalorder %s445, 63
      %s447 = scalar_select %p446, %s445, 63
      %s448 = smul.addr %s447, 4
      %s449 = scalar_lea.vmem %s3, %s448
      %p450 = pneg %p122
      %p451 = pneg %p119
      %s452 = smul.u32 16, %s23
      %p453 = scmp.lt.s32.totalorder %s452, 63
      %s454 = scalar_select %p453, %s452, 63
      %s455 = smul.addr %s454, 4
      %s456 = scalar_lea.vmem %s4, %s455
      %p457 = pneg %p148
      %p458 = pneg %p145
      %s459 = smul.u32 16, %s23
      %p460 = scmp.lt.s32.totalorder %s459, 63
      %s461 = scalar_select %p460, %s459, 63
      %s462 = smul.addr %s461, 4
      %s463 = scalar_lea.vmem %s5, %s462
      %p464 = pneg %p174
      %p465 = pneg %p171
      %p466 = pneg %p195
      %p467 = pneg %p192
      %p468 = pneg %p216
      %p469 = pneg %p213
      %p470 = pneg %p237
      %p471 = pneg %p234
      %p472 = pneg %p258
      %p473 = pneg %p255
      %p474 = pneg %p279
      %p475 = pneg %p276
      %p476 = pneg %p300
      %p477 = pneg %p297
      %p478 = pneg %p326
      %p479 = pneg %p323
      %s480 = smul.u32 16, %s23
      %p481 = scmp.lt.s32.totalorder %s480, 63
      %s482 = scalar_select %p481, %s480, 63
      %s483 = smul.addr %s482, 8
      %s484 = scalar_lea.vmem %s12, %s483
      %s485 = smul.u32 16, %s23
      %p486 = scmp.lt.s32.totalorder %s485, 63
      %s487 = scalar_select %p486, %s485, 63
      %s488 = smul.addr %s487, 4
      %s489 = scalar_lea.vmem %s0, %s488
      %s490 = smul.u32 16, %s23
      %s491 = smul.u32 16, %s23
      %p492 = scmp.lt.s32.totalorder %s491, 63
      %s493 = scalar_select %p492, %s491, 63
      %s494 = smul.addr %s493, 4
      %s495 = scalar_lea.vmem %s1, %s494
      %s496 = smul.u32 16, %s23
      %s497 = smul.u32 16, %s23
      %p498 = scmp.lt.s32.totalorder %s497, 63
      %s499 = scalar_select %p498, %s497, 63
      %s500 = smul.addr %s499, 4
      %s501 = scalar_lea.vmem %s2, %s500
      %s502 = smul.u32 16, %s23
      %s503 = smul.u32 16, %s23
      %p504 = scmp.lt.s32.totalorder %s503, 63
      %s505 = scalar_select %p504, %s503, 63
      %s506 = smul.addr %s505, 4
      %s507 = scalar_lea.vmem %s3, %s506
      %s508 = smul.u32 16, %s23
      %s509 = smul.u32 16, %s23
      %p510 = scmp.lt.s32.totalorder %s509, 63
      %s511 = scalar_select %p510, %s509, 63
      %s512 = smul.addr %s511, 4
      %s513 = scalar_lea.vmem %s4, %s512
      %s514 = smul.u32 16, %s23
      %s515 = smul.u32 16, %s23
      %p516 = scmp.lt.s32.totalorder %s515, 63
      %s517 = scalar_select %p516, %s515, 63
      %s518 = smul.addr %s517, 4
      %s519 = scalar_lea.vmem %s5, %s518
      %s520 = smul.u32 16, %s23
      %s521 = smul.u32 16, %s23
      %p522 = scmp.lt.s32.totalorder %s521, 63
      %s523 = scalar_select %p522, %s521, 63
      %s524 = smul.addr %s523, 8
      %s525 = scalar_lea.vmem %s12, %s524
      %s526 = smul.u32 16, %s23
      %v528 = vld [vmem:[%s489] sm:$0xf]
      %v529 = vld [vmem:[%s489 + $0x4] sm:$0xf]
      %v530 = vld [vmem:[%s489 + $0x8] sm:$0xf]
      %v531 = vld [vmem:[%s489 + $0xc] sm:$0xf]
      %v532 = vld [vmem:[%s489 + $0x10] sm:$0xf]
      %v533 = vld [vmem:[%s489 + $0x14] sm:$0xf]
      %v534 = vld [vmem:[%s489 + $0x18] sm:$0xf]
      %v535 = vld [vmem:[%s489 + $0x1c] sm:$0xf]
      %v536 = vld [vmem:[%s489 + $0x20] sm:$0xf]
      %v537 = vld [vmem:[%s489 + $0x24] sm:$0xf]
      %v538 = vld [vmem:[%s489 + $0x28] sm:$0xf]
      %v539 = vld [vmem:[%s489 + $0x2c] sm:$0xf]
      %v540 = vld [vmem:[%s489 + $0x30] sm:$0xf]
      %v541 = vld [vmem:[%s489 + $0x34] sm:$0xf]
      %v542 = vld [vmem:[%s489 + $0x38] sm:$0xf]
      %v543 = vld [vmem:[%s489 + $0x3c] sm:$0xf]
      %v544 = vld [vmem:[%s6] sm:$0xf]
      %v545 = vld [vmem:[%s495] sm:$0xf]
      %v546 = vld [vmem:[%s495 + $0x4] sm:$0xf]
      %v547 = vld [vmem:[%s495 + $0x8] sm:$0xf]
      %v548 = vld [vmem:[%s495 + $0xc] sm:$0xf]
      %v549 = vld [vmem:[%s495 + $0x10] sm:$0xf]
      %v550 = vld [vmem:[%s495 + $0x14] sm:$0xf]
      %v551 = vld [vmem:[%s495 + $0x18] sm:$0xf]
      %v552 = vld [vmem:[%s495 + $0x1c] sm:$0xf]
      %v553 = vld [vmem:[%s495 + $0x20] sm:$0xf]
      %v554 = vld [vmem:[%s495 + $0x24] sm:$0xf]
      %v555 = vld [vmem:[%s495 + $0x28] sm:$0xf]
      %v556 = vld [vmem:[%s495 + $0x2c] sm:$0xf]
      %v557 = vld [vmem:[%s495 + $0x30] sm:$0xf]
      %v558 = vld [vmem:[%s495 + $0x34] sm:$0xf]
      %v559 = vld [vmem:[%s495 + $0x38] sm:$0xf]
      %v560 = vld [vmem:[%s495 + $0x3c] sm:$0xf]
      %s561 = scalar_lea.vmem %s6, 4
      %v562 = vld [vmem:[%s561] sm:$0xf]
      %v579 = vunpack.c.l.b16 %v545
      %v580 = vunpack.c.l.b16 %v546
      %v581 = vunpack.c.l.b16 %v547
      %v582 = vunpack.c.l.b16 %v548
      %v583 = vunpack.c.l.b16 %v549
      %v584 = vunpack.c.l.b16 %v550
      %v585 = vunpack.c.l.b16 %v551
      %v586 = vunpack.c.l.b16 %v552
      %v587 = vunpack.c.l.b16 %v553
      %v588 = vunpack.c.l.b16 %v554
      %v589 = vunpack.c.l.b16 %v555
      %v590 = vunpack.c.l.b16 %v556
      %v591 = vunpack.c.l.b16 %v557
      %v592 = vunpack.c.l.b16 %v558
      %v593 = vunpack.c.l.b16 %v559
      %v594 = vunpack.c.l.b16 %v560
      %v595 = vpack.c.b16 %v580, %v579
      %v596 = vpack.c.b16 %v582, %v581
      %v597 = vpack.c.b16 %v584, %v583
      %v598 = vpack.c.b16 %v586, %v585
      %v599 = vpack.c.b16 %v588, %v587
      %v600 = vpack.c.b16 %v590, %v589
      %v601 = vpack.c.b16 %v592, %v591
      %v602 = vpack.c.b16 %v594, %v593
      %vm603 = vcmask 64512
      %v605 = vsel %vm603, %v595, 0
      %v608 = vsel %vm603, %v596, 0
      %v611 = vsel %vm603, %v597, 0
      %v614 = vsel %vm603, %v598, 0
      %v617 = vsel %vm603, %v599, 0
      %v620 = vsel %vm603, %v600, 0
      %v623 = vsel %vm603, %v601, 0
      %v626 = vsel %vm603, %v602, 0
      %vm628 = vcmask 1043456
      %v630 = vsel %vm628, %v562, 0
      %632 = vmatpush.bf16.msra.mxu0 0
      %633 = vmatpush.bf16.msra.mxu0 0
      %634 = vmatpush.bf16.msra.mxu0 0
      %635 = vmatpush.bf16.msra.mxu0 0
      %636 = vmatpush.bf16.msra.mxu0 0
      %637 = vmatpush.bf16.msra.mxu0 0
      %638 = vmatpush.bf16.msra.mxu0 0
      %639 = vmatpush.bf16.msra.mxu0 %v630
      %640 = vmatmul.bf16.gmra.mxu0 %v605
      %v641 = vpop.f32.mrf.mxu0
      %v642 = vadd.f32 0.0, %v641
      %v643 = vpop.f32.mrf.mxu0
      %v644 = vadd.f32 0.0, %v643
      %645 = vmatmul.bf16.gmra.mxu0 %v608
      %v646 = vpop.f32.mrf.mxu0
      %v647 = vadd.f32 0.0, %v646
      %v648 = vpop.f32.mrf.mxu0
      %v649 = vadd.f32 0.0, %v648
      %650 = vmatmul.bf16.gmra.mxu0 %v611
      %v651 = vpop.f32.mrf.mxu0
      %v652 = vadd.f32 0.0, %v651
      %v653 = vpop.f32.mrf.mxu0
      %v654 = vadd.f32 0.0, %v653
      %655 = vmatmul.bf16.gmra.mxu0 %v614
      %v656 = vpop.f32.mrf.mxu0
      %v657 = vadd.f32 0.0, %v656
      %v658 = vpop.f32.mrf.mxu0
      %v659 = vadd.f32 0.0, %v658
      %660 = vmatmul.bf16.gmra.mxu0 %v617
      %v661 = vpop.f32.mrf.mxu0
      %v662 = vadd.f32 0.0, %v661
      %v663 = vpop.f32.mrf.mxu0
      %v664 = vadd.f32 0.0, %v663
      %665 = vmatmul.bf16.gmra.mxu0 %v620
      %v666 = vpop.f32.mrf.mxu0
      %v667 = vadd.f32 0.0, %v666
      %v668 = vpop.f32.mrf.mxu0
      %v669 = vadd.f32 0.0, %v668
      %670 = vmatmul.bf16.gmra.mxu0 %v623
      %v671 = vpop.f32.mrf.mxu0
      %v672 = vadd.f32 0.0, %v671
      %v673 = vpop.f32.mrf.mxu0
      %v674 = vadd.f32 0.0, %v673
      %675 = vmatmul.bf16.gmra.mxu0 %v626
      %v676 = vpop.f32.mrf.mxu0
      %v677 = vadd.f32 0.0, %v676
      %v678 = vpop.f32.mrf.mxu0
      %v679 = vadd.f32 0.0, %v678
      %680 = vdwg.mxu0
      %v697 = vunpack.c.l.b16 %v528
      %v698 = vunpack.c.l.b16 %v529
      %v699 = vunpack.c.l.b16 %v530
      %v700 = vunpack.c.l.b16 %v531
      %v701 = vunpack.c.l.b16 %v532
      %v702 = vunpack.c.l.b16 %v533
      %v703 = vunpack.c.l.b16 %v534
      %v704 = vunpack.c.l.b16 %v535
      %v705 = vunpack.c.l.b16 %v536
      %v706 = vunpack.c.l.b16 %v537
      %v707 = vunpack.c.l.b16 %v538
      %v708 = vunpack.c.l.b16 %v539
      %v709 = vunpack.c.l.b16 %v540
      %v710 = vunpack.c.l.b16 %v541
      %v711 = vunpack.c.l.b16 %v542
      %v712 = vunpack.c.l.b16 %v543
      %v713 = vpack.c.b16 %v698, %v697
      %v714 = vpack.c.b16 %v700, %v699
      %v715 = vpack.c.b16 %v702, %v701
      %v716 = vpack.c.b16 %v704, %v703
      %v717 = vpack.c.b16 %v706, %v705
      %v718 = vpack.c.b16 %v708, %v707
      %v719 = vpack.c.b16 %v710, %v709
      %v720 = vpack.c.b16 %v712, %v711
      %v722 = vsel %vm603, %v713, 0
      %v725 = vsel %vm603, %v714, 0
      %v728 = vsel %vm603, %v715, 0
      %v731 = vsel %vm603, %v716, 0
      %v734 = vsel %vm603, %v717, 0
      %v737 = vsel %vm603, %v718, 0
      %v740 = vsel %vm603, %v719, 0
      %v743 = vsel %vm603, %v720, 0
      %v746 = vsel %vm628, %v544, 0
      %748 = vmatpush.bf16.msra.mxu0 0
      %749 = vmatpush.bf16.msra.mxu0 0
      %750 = vmatpush.bf16.msra.mxu0 0
      %751 = vmatpush.bf16.msra.mxu0 0
      %752 = vmatpush.bf16.msra.mxu0 0
      %753 = vmatpush.bf16.msra.mxu0 0
      %754 = vmatpush.bf16.msra.mxu0 0
      %755 = vmatpush.bf16.msra.mxu0 %v746
      %756 = vmatmul.bf16.gmra.mxu0 %v722
      %v757 = vpop.f32.mrf.mxu0
      %v758 = vadd.f32 %v642, %v757
      %v759 = vpop.f32.mrf.mxu0
      %v760 = vadd.f32 %v644, %v759
      %761 = vmatmul.bf16.gmra.mxu0 %v725
      %v762 = vpop.f32.mrf.mxu0
      %v763 = vadd.f32 %v647, %v762
      %v764 = vpop.f32.mrf.mxu0
      %v765 = vadd.f32 %v649, %v764
      %766 = vmatmul.bf16.gmra.mxu0 %v728
      %v767 = vpop.f32.mrf.mxu0
      %v768 = vadd.f32 %v652, %v767
      %v769 = vpop.f32.mrf.mxu0
      %v770 = vadd.f32 %v654, %v769
      %771 = vmatmul.bf16.gmra.mxu0 %v731
      %v772 = vpop.f32.mrf.mxu0
      %v773 = vadd.f32 %v657, %v772
      %v774 = vpop.f32.mrf.mxu0
      %v775 = vadd.f32 %v659, %v774
      %776 = vmatmul.bf16.gmra.mxu0 %v734
      %v777 = vpop.f32.mrf.mxu0
      %v778 = vadd.f32 %v662, %v777
      %v779 = vpop.f32.mrf.mxu0
      %v780 = vadd.f32 %v664, %v779
      %781 = vmatmul.bf16.gmra.mxu0 %v737
      %v782 = vpop.f32.mrf.mxu0
      %v783 = vadd.f32 %v667, %v782
      %v784 = vpop.f32.mrf.mxu0
      %v785 = vadd.f32 %v669, %v784
      %786 = vmatmul.bf16.gmra.mxu0 %v740
      %v787 = vpop.f32.mrf.mxu0
      %v788 = vadd.f32 %v672, %v787
      %v789 = vpop.f32.mrf.mxu0
      %v790 = vadd.f32 %v674, %v789
      %791 = vmatmul.bf16.gmra.mxu0 %v743
      %v792 = vpop.f32.mrf.mxu0
      %v793 = vadd.f32 %v677, %v792
      %v794 = vpop.f32.mrf.mxu0
      %v795 = vadd.f32 %v679, %v794
      %796 = vdwg.mxu0
      %v797 = vld [vmem:[%s501] sm:$0xf]
      %v798 = vld [vmem:[%s501 + $0x4] sm:$0xf]
      %v799 = vld [vmem:[%s501 + $0x8] sm:$0xf]
      %v800 = vld [vmem:[%s501 + $0xc] sm:$0xf]
      %v801 = vld [vmem:[%s501 + $0x10] sm:$0xf]
      %v802 = vld [vmem:[%s501 + $0x14] sm:$0xf]
      %v803 = vld [vmem:[%s501 + $0x18] sm:$0xf]
      %v804 = vld [vmem:[%s501 + $0x1c] sm:$0xf]
      %v805 = vld [vmem:[%s501 + $0x20] sm:$0xf]
      %v806 = vld [vmem:[%s501 + $0x24] sm:$0xf]
      %v807 = vld [vmem:[%s501 + $0x28] sm:$0xf]
      %v808 = vld [vmem:[%s501 + $0x2c] sm:$0xf]
      %v809 = vld [vmem:[%s501 + $0x30] sm:$0xf]
      %v810 = vld [vmem:[%s501 + $0x34] sm:$0xf]
      %v811 = vld [vmem:[%s501 + $0x38] sm:$0xf]
      %v812 = vld [vmem:[%s501 + $0x3c] sm:$0xf]
      %s813 = scalar_lea.vmem %s6, 8
      %v814 = vld [vmem:[%s813] sm:$0xf]
      %v831 = vunpack.c.l.b16 %v797
      %v832 = vunpack.c.l.b16 %v798
      %v833 = vunpack.c.l.b16 %v799
      %v834 = vunpack.c.l.b16 %v800
      %v835 = vunpack.c.l.b16 %v801
      %v836 = vunpack.c.l.b16 %v802
      %v837 = vunpack.c.l.b16 %v803
      %v838 = vunpack.c.l.b16 %v804
      %v839 = vunpack.c.l.b16 %v805
      %v840 = vunpack.c.l.b16 %v806
      %v841 = vunpack.c.l.b16 %v807
      %v842 = vunpack.c.l.b16 %v808
      %v843 = vunpack.c.l.b16 %v809
      %v844 = vunpack.c.l.b16 %v810
      %v845 = vunpack.c.l.b16 %v811
      %v846 = vunpack.c.l.b16 %v812
      %v847 = vpack.c.b16 %v832, %v831
      %v848 = vpack.c.b16 %v834, %v833
      %v849 = vpack.c.b16 %v836, %v835
      %v850 = vpack.c.b16 %v838, %v837
      %v851 = vpack.c.b16 %v840, %v839
      %v852 = vpack.c.b16 %v842, %v841
      %v853 = vpack.c.b16 %v844, %v843
      %v854 = vpack.c.b16 %v846, %v845
      %v856 = vsel %vm603, %v847, 0
      %v859 = vsel %vm603, %v848, 0
      %v862 = vsel %vm603, %v849, 0
      %v865 = vsel %vm603, %v850, 0
      %v868 = vsel %vm603, %v851, 0
      %v871 = vsel %vm603, %v852, 0
      %v874 = vsel %vm603, %v853, 0
      %v877 = vsel %vm603, %v854, 0
      %v880 = vsel %vm628, %v814, 0
      %882 = vmatpush.bf16.msra.mxu0 0
      %883 = vmatpush.bf16.msra.mxu0 0
      %884 = vmatpush.bf16.msra.mxu0 0
      %885 = vmatpush.bf16.msra.mxu0 0
      %886 = vmatpush.bf16.msra.mxu0 0
      %887 = vmatpush.bf16.msra.mxu0 0
      %888 = vmatpush.bf16.msra.mxu0 0
      %889 = vmatpush.bf16.msra.mxu0 %v880
      %890 = vmatmul.bf16.gmra.mxu0 %v856
      %v891 = vpop.f32.mrf.mxu0
      %v892 = vadd.f32 0.0, %v891
      %v893 = vpop.f32.mrf.mxu0
      %v894 = vadd.f32 0.0, %v893
      %895 = vmatmul.bf16.gmra.mxu0 %v859
      %v896 = vpop.f32.mrf.mxu0
      %v897 = vadd.f32 0.0, %v896
      %v898 = vpop.f32.mrf.mxu0
      %v899 = vadd.f32 0.0, %v898
      %900 = vmatmul.bf16.gmra.mxu0 %v862
      %v901 = vpop.f32.mrf.mxu0
      %v902 = vadd.f32 0.0, %v901
      %v903 = vpop.f32.mrf.mxu0
      %v904 = vadd.f32 0.0, %v903
      %905 = vmatmul.bf16.gmra.mxu0 %v865
      %v906 = vpop.f32.mrf.mxu0
      %v907 = vadd.f32 0.0, %v906
      %v908 = vpop.f32.mrf.mxu0
      %v909 = vadd.f32 0.0, %v908
      %910 = vmatmul.bf16.gmra.mxu0 %v868
      %v911 = vpop.f32.mrf.mxu0
      %v912 = vadd.f32 0.0, %v911
      %v913 = vpop.f32.mrf.mxu0
      %v914 = vadd.f32 0.0, %v913
      %915 = vmatmul.bf16.gmra.mxu0 %v871
      %v916 = vpop.f32.mrf.mxu0
      %v917 = vadd.f32 0.0, %v916
      %v918 = vpop.f32.mrf.mxu0
      %v919 = vadd.f32 0.0, %v918
      %920 = vmatmul.bf16.gmra.mxu0 %v874
      %v921 = vpop.f32.mrf.mxu0
      %v922 = vadd.f32 0.0, %v921
      %v923 = vpop.f32.mrf.mxu0
      %v924 = vadd.f32 0.0, %v923
      %925 = vmatmul.bf16.gmra.mxu0 %v877
      %v926 = vpop.f32.mrf.mxu0
      %v927 = vadd.f32 0.0, %v926
      %v928 = vpop.f32.mrf.mxu0
      %v929 = vadd.f32 0.0, %v928
      %930 = vdwg.mxu0
      %v931 = vadd.f32 %v758, %v892
      %v932 = vadd.f32 %v760, %v894
      %v933 = vadd.f32 %v763, %v897
      %v934 = vadd.f32 %v765, %v899
      %v935 = vadd.f32 %v768, %v902
      %v936 = vadd.f32 %v770, %v904
      %v937 = vadd.f32 %v773, %v907
      %v938 = vadd.f32 %v775, %v909
      %v939 = vadd.f32 %v778, %v912
      %v940 = vadd.f32 %v780, %v914
      %v941 = vadd.f32 %v783, %v917
      %v942 = vadd.f32 %v785, %v919
      %v943 = vadd.f32 %v788, %v922
      %v944 = vadd.f32 %v790, %v924
      %v945 = vadd.f32 %v793, %v927
      %v946 = vadd.f32 %v795, %v929
      %v947 = vld [vmem:[%s507] sm:$0xf]
      %v948 = vld [vmem:[%s507 + $0x4] sm:$0xf]
      %v949 = vld [vmem:[%s507 + $0x8] sm:$0xf]
      %v950 = vld [vmem:[%s507 + $0xc] sm:$0xf]
      %v951 = vld [vmem:[%s507 + $0x10] sm:$0xf]
      %v952 = vld [vmem:[%s507 + $0x14] sm:$0xf]
      %v953 = vld [vmem:[%s507 + $0x18] sm:$0xf]
      %v954 = vld [vmem:[%s507 + $0x1c] sm:$0xf]
      %v955 = vld [vmem:[%s507 + $0x20] sm:$0xf]
      %v956 = vld [vmem:[%s507 + $0x24] sm:$0xf]
      %v957 = vld [vmem:[%s507 + $0x28] sm:$0xf]
      %v958 = vld [vmem:[%s507 + $0x2c] sm:$0xf]
      %v959 = vld [vmem:[%s507 + $0x30] sm:$0xf]
      %v960 = vld [vmem:[%s507 + $0x34] sm:$0xf]
      %v961 = vld [vmem:[%s507 + $0x38] sm:$0xf]
      %v962 = vld [vmem:[%s507 + $0x3c] sm:$0xf]
      %s963 = scalar_lea.vmem %s6, 12
      %v964 = vld [vmem:[%s963] sm:$0xf]
      %v981 = vunpack.c.l.b16 %v947
      %v982 = vunpack.c.l.b16 %v948
      %v983 = vunpack.c.l.b16 %v949
      %v984 = vunpack.c.l.b16 %v950
      %v985 = vunpack.c.l.b16 %v951
      %v986 = vunpack.c.l.b16 %v952
      %v987 = vunpack.c.l.b16 %v953
      %v988 = vunpack.c.l.b16 %v954
      %v989 = vunpack.c.l.b16 %v955
      %v990 = vunpack.c.l.b16 %v956
      %v991 = vunpack.c.l.b16 %v957
      %v992 = vunpack.c.l.b16 %v958
      %v993 = vunpack.c.l.b16 %v959
      %v994 = vunpack.c.l.b16 %v960
      %v995 = vunpack.c.l.b16 %v961
      %v996 = vunpack.c.l.b16 %v962
      %v997 = vpack.c.b16 %v982, %v981
      %v998 = vpack.c.b16 %v984, %v983
      %v999 = vpack.c.b16 %v986, %v985
      %v1000 = vpack.c.b16 %v988, %v987
      %v1001 = vpack.c.b16 %v990, %v989
      %v1002 = vpack.c.b16 %v992, %v991
      %v1003 = vpack.c.b16 %v994, %v993
      %v1004 = vpack.c.b16 %v996, %v995
      %v1006 = vsel %vm603, %v997, 0
      %v1009 = vsel %vm603, %v998, 0
      %v1012 = vsel %vm603, %v999, 0
      %v1015 = vsel %vm603, %v1000, 0
      %v1018 = vsel %vm603, %v1001, 0
      %v1021 = vsel %vm603, %v1002, 0
      %v1024 = vsel %vm603, %v1003, 0
      %v1027 = vsel %vm603, %v1004, 0
      %v1030 = vsel %vm628, %v964, 0
      %1032 = vmatpush.bf16.msra.mxu0 0
      %1033 = vmatpush.bf16.msra.mxu0 0
      %1034 = vmatpush.bf16.msra.mxu0 0
      %1035 = vmatpush.bf16.msra.mxu0 0
      %1036 = vmatpush.bf16.msra.mxu0 0
      %1037 = vmatpush.bf16.msra.mxu0 0
      %1038 = vmatpush.bf16.msra.mxu0 0
      %1039 = vmatpush.bf16.msra.mxu0 %v1030
      %1040 = vmatmul.bf16.gmra.mxu0 %v1006
      %v1041 = vpop.f32.mrf.mxu0
      %v1042 = vadd.f32 0.0, %v1041
      %v1043 = vpop.f32.mrf.mxu0
      %v1044 = vadd.f32 0.0, %v1043
      %1045 = vmatmul.bf16.gmra.mxu0 %v1009
      %v1046 = vpop.f32.mrf.mxu0
      %v1047 = vadd.f32 0.0, %v1046
      %v1048 = vpop.f32.mrf.mxu0
      %v1049 = vadd.f32 0.0, %v1048
      %1050 = vmatmul.bf16.gmra.mxu0 %v1012
      %v1051 = vpop.f32.mrf.mxu0
      %v1052 = vadd.f32 0.0, %v1051
      %v1053 = vpop.f32.mrf.mxu0
      %v1054 = vadd.f32 0.0, %v1053
      %1055 = vmatmul.bf16.gmra.mxu0 %v1015
      %v1056 = vpop.f32.mrf.mxu0
      %v1057 = vadd.f32 0.0, %v1056
      %v1058 = vpop.f32.mrf.mxu0
      %v1059 = vadd.f32 0.0, %v1058
      %1060 = vmatmul.bf16.gmra.mxu0 %v1018
      %v1061 = vpop.f32.mrf.mxu0
      %v1062 = vadd.f32 0.0, %v1061
      %v1063 = vpop.f32.mrf.mxu0
      %v1064 = vadd.f32 0.0, %v1063
      %1065 = vmatmul.bf16.gmra.mxu0 %v1021
      %v1066 = vpop.f32.mrf.mxu0
      %v1067 = vadd.f32 0.0, %v1066
      %v1068 = vpop.f32.mrf.mxu0
      %v1069 = vadd.f32 0.0, %v1068
      %1070 = vmatmul.bf16.gmra.mxu0 %v1024
      %v1071 = vpop.f32.mrf.mxu0
      %v1072 = vadd.f32 0.0, %v1071
      %v1073 = vpop.f32.mrf.mxu0
      %v1074 = vadd.f32 0.0, %v1073
      %1075 = vmatmul.bf16.gmra.mxu0 %v1027
      %v1076 = vpop.f32.mrf.mxu0
      %v1077 = vadd.f32 0.0, %v1076
      %v1078 = vpop.f32.mrf.mxu0
      %v1079 = vadd.f32 0.0, %v1078
      %1080 = vdwg.mxu0
      %v1081 = vadd.f32 %v931, %v1042
      %v1082 = vadd.f32 %v932, %v1044
      %v1083 = vadd.f32 %v933, %v1047
      %v1084 = vadd.f32 %v934, %v1049
      %v1085 = vadd.f32 %v935, %v1052
      %v1086 = vadd.f32 %v936, %v1054
      %v1087 = vadd.f32 %v937, %v1057
      %v1088 = vadd.f32 %v938, %v1059
      %v1089 = vadd.f32 %v939, %v1062
      %v1090 = vadd.f32 %v940, %v1064
      %v1091 = vadd.f32 %v941, %v1067
      %v1092 = vadd.f32 %v942, %v1069
      %v1093 = vadd.f32 %v943, %v1072
      %v1094 = vadd.f32 %v944, %v1074
      %v1095 = vadd.f32 %v945, %v1077
      %v1096 = vadd.f32 %v946, %v1079
      %v1097 = vld [vmem:[%s513] sm:$0xf]
      %v1098 = vld [vmem:[%s513 + $0x4] sm:$0xf]
      %v1099 = vld [vmem:[%s513 + $0x8] sm:$0xf]
      %v1100 = vld [vmem:[%s513 + $0xc] sm:$0xf]
      %v1101 = vld [vmem:[%s513 + $0x10] sm:$0xf]
      %v1102 = vld [vmem:[%s513 + $0x14] sm:$0xf]
      %v1103 = vld [vmem:[%s513 + $0x18] sm:$0xf]
      %v1104 = vld [vmem:[%s513 + $0x1c] sm:$0xf]
      %v1105 = vld [vmem:[%s513 + $0x20] sm:$0xf]
      %v1106 = vld [vmem:[%s513 + $0x24] sm:$0xf]
      %v1107 = vld [vmem:[%s513 + $0x28] sm:$0xf]
      %v1108 = vld [vmem:[%s513 + $0x2c] sm:$0xf]
      %v1109 = vld [vmem:[%s513 + $0x30] sm:$0xf]
      %v1110 = vld [vmem:[%s513 + $0x34] sm:$0xf]
      %v1111 = vld [vmem:[%s513 + $0x38] sm:$0xf]
      %v1112 = vld [vmem:[%s513 + $0x3c] sm:$0xf]
      %s1113 = scalar_lea.vmem %s6, 16
      %v1114 = vld [vmem:[%s1113] sm:$0xf]
      %v1131 = vunpack.c.l.b16 %v1097
      %v1132 = vunpack.c.l.b16 %v1098
      %v1133 = vunpack.c.l.b16 %v1099
      %v1134 = vunpack.c.l.b16 %v1100
      %v1135 = vunpack.c.l.b16 %v1101
      %v1136 = vunpack.c.l.b16 %v1102
      %v1137 = vunpack.c.l.b16 %v1103
      %v1138 = vunpack.c.l.b16 %v1104
      %v1139 = vunpack.c.l.b16 %v1105
      %v1140 = vunpack.c.l.b16 %v1106
      %v1141 = vunpack.c.l.b16 %v1107
      %v1142 = vunpack.c.l.b16 %v1108
      %v1143 = vunpack.c.l.b16 %v1109
      %v1144 = vunpack.c.l.b16 %v1110
      %v1145 = vunpack.c.l.b16 %v1111
      %v1146 = vunpack.c.l.b16 %v1112
      %v1147 = vpack.c.b16 %v1132, %v1131
      %v1148 = vpack.c.b16 %v1134, %v1133
      %v1149 = vpack.c.b16 %v1136, %v1135
      %v1150 = vpack.c.b16 %v1138, %v1137
      %v1151 = vpack.c.b16 %v1140, %v1139
      %v1152 = vpack.c.b16 %v1142, %v1141
      %v1153 = vpack.c.b16 %v1144, %v1143
      %v1154 = vpack.c.b16 %v1146, %v1145
      %v1156 = vsel %vm603, %v1147, 0
      %v1159 = vsel %vm603, %v1148, 0
      %v1162 = vsel %vm603, %v1149, 0
      %v1165 = vsel %vm603, %v1150, 0
      %v1168 = vsel %vm603, %v1151, 0
      %v1171 = vsel %vm603, %v1152, 0
      %v1174 = vsel %vm603, %v1153, 0
      %v1177 = vsel %vm603, %v1154, 0
      %v1180 = vsel %vm628, %v1114, 0
      %1182 = vmatpush.bf16.msra.mxu0 0
      %1183 = vmatpush.bf16.msra.mxu0 0
      %1184 = vmatpush.bf16.msra.mxu0 0
      %1185 = vmatpush.bf16.msra.mxu0 0
      %1186 = vmatpush.bf16.msra.mxu0 0
      %1187 = vmatpush.bf16.msra.mxu0 0
      %1188 = vmatpush.bf16.msra.mxu0 0
      %1189 = vmatpush.bf16.msra.mxu0 %v1180
      %1190 = vmatmul.bf16.gmra.mxu0 %v1156
      %v1191 = vpop.f32.mrf.mxu0
      %v1192 = vadd.f32 0.0, %v1191
      %v1193 = vpop.f32.mrf.mxu0
      %v1194 = vadd.f32 0.0, %v1193
      %1195 = vmatmul.bf16.gmra.mxu0 %v1159
      %v1196 = vpop.f32.mrf.mxu0
      %v1197 = vadd.f32 0.0, %v1196
      %v1198 = vpop.f32.mrf.mxu0
      %v1199 = vadd.f32 0.0, %v1198
      %1200 = vmatmul.bf16.gmra.mxu0 %v1162
      %v1201 = vpop.f32.mrf.mxu0
      %v1202 = vadd.f32 0.0, %v1201
      %v1203 = vpop.f32.mrf.mxu0
      %v1204 = vadd.f32 0.0, %v1203
      %1205 = vmatmul.bf16.gmra.mxu0 %v1165
      %v1206 = vpop.f32.mrf.mxu0
      %v1207 = vadd.f32 0.0, %v1206
      %v1208 = vpop.f32.mrf.mxu0
      %v1209 = vadd.f32 0.0, %v1208
      %1210 = vmatmul.bf16.gmra.mxu0 %v1168
      %v1211 = vpop.f32.mrf.mxu0
      %v1212 = vadd.f32 0.0, %v1211
      %v1213 = vpop.f32.mrf.mxu0
      %v1214 = vadd.f32 0.0, %v1213
      %1215 = vmatmul.bf16.gmra.mxu0 %v1171
      %v1216 = vpop.f32.mrf.mxu0
      %v1217 = vadd.f32 0.0, %v1216
      %v1218 = vpop.f32.mrf.mxu0
      %v1219 = vadd.f32 0.0, %v1218
      %1220 = vmatmul.bf16.gmra.mxu0 %v1174
      %v1221 = vpop.f32.mrf.mxu0
      %v1222 = vadd.f32 0.0, %v1221
      %v1223 = vpop.f32.mrf.mxu0
      %v1224 = vadd.f32 0.0, %v1223
      %1225 = vmatmul.bf16.gmra.mxu0 %v1177
      %v1226 = vpop.f32.mrf.mxu0
      %v1227 = vadd.f32 0.0, %v1226
      %v1228 = vpop.f32.mrf.mxu0
      %v1229 = vadd.f32 0.0, %v1228
      %1230 = vdwg.mxu0
      %v1231 = vadd.f32 %v1081, %v1192
      %v1232 = vadd.f32 %v1082, %v1194
      %v1233 = vadd.f32 %v1083, %v1197
      %v1234 = vadd.f32 %v1084, %v1199
      %v1235 = vadd.f32 %v1085, %v1202
      %v1236 = vadd.f32 %v1086, %v1204
      %v1237 = vadd.f32 %v1087, %v1207
      %v1238 = vadd.f32 %v1088, %v1209
      %v1239 = vadd.f32 %v1089, %v1212
      %v1240 = vadd.f32 %v1090, %v1214
      %v1241 = vadd.f32 %v1091, %v1217
      %v1242 = vadd.f32 %v1092, %v1219
      %v1243 = vadd.f32 %v1093, %v1222
      %v1244 = vadd.f32 %v1094, %v1224
      %v1245 = vadd.f32 %v1095, %v1227
      %v1246 = vadd.f32 %v1096, %v1229
      %v1247 = vld [vmem:[%s7] sm:$0x1]
      %v1249 = vperm.slane %v1247, 0
      %v1251 = vmul.f32 %v1231, %v1249
      %v1252 = vmul.f32 %v1232, %v1249
      %v1253 = vmul.f32 %v1233, %v1249
      %v1254 = vmul.f32 %v1234, %v1249
      %v1255 = vmul.f32 %v1235, %v1249
      %v1256 = vmul.f32 %v1236, %v1249
      %v1257 = vmul.f32 %v1237, %v1249
      %v1258 = vmul.f32 %v1238, %v1249
      %v1259 = vmul.f32 %v1239, %v1249
      %v1260 = vmul.f32 %v1240, %v1249
      %v1261 = vmul.f32 %v1241, %v1249
      %v1262 = vmul.f32 %v1242, %v1249
      %v1263 = vmul.f32 %v1243, %v1249
      %v1264 = vmul.f32 %v1244, %v1249
      %v1265 = vmul.f32 %v1245, %v1249
      %v1266 = vmul.f32 %v1246, %v1249
      %v1267 = vld [vmem:[%s8] sm:$0x1]
      %v1269 = vperm.slane %v1267, 0
      %v1271 = vadd.f32 %v1251, %v1269
      %v1272 = vadd.f32 %v1252, %v1269
      %v1273 = vadd.f32 %v1253, %v1269
      %v1274 = vadd.f32 %v1254, %v1269
      %v1275 = vadd.f32 %v1255, %v1269
      %v1276 = vadd.f32 %v1256, %v1269
      %v1277 = vadd.f32 %v1257, %v1269
      %v1278 = vadd.f32 %v1258, %v1269
      %v1279 = vadd.f32 %v1259, %v1269
      %v1280 = vadd.f32 %v1260, %v1269
      %v1281 = vadd.f32 %v1261, %v1269
      %v1282 = vadd.f32 %v1262, %v1269
      %v1283 = vadd.f32 %v1263, %v1269
      %v1284 = vadd.f32 %v1264, %v1269
      %v1285 = vadd.f32 %v1265, %v1269
      %v1286 = vadd.f32 %v1266, %v1269
      %v1287 = vmax.f32 %v1271, 0.0
      %v1288 = vmax.f32 %v1272, 0.0
      %v1289 = vmax.f32 %v1273, 0.0
      %v1290 = vmax.f32 %v1274, 0.0
      %v1291 = vmax.f32 %v1275, 0.0
      %v1292 = vmax.f32 %v1276, 0.0
      %v1293 = vmax.f32 %v1277, 0.0
      %v1294 = vmax.f32 %v1278, 0.0
      %v1295 = vmax.f32 %v1279, 0.0
      %v1296 = vmax.f32 %v1280, 0.0
      %v1297 = vmax.f32 %v1281, 0.0
      %v1298 = vmax.f32 %v1282, 0.0
      %v1299 = vmax.f32 %v1283, 0.0
      %v1300 = vmax.f32 %v1284, 0.0
      %v1301 = vmax.f32 %v1285, 0.0
      %v1302 = vmax.f32 %v1286, 0.0
      %v1303 = vld [vmem:[%s519] sm:$0xf]
      %v1304 = vld [vmem:[%s519 + $0x4] sm:$0xf]
      %v1305 = vld [vmem:[%s519 + $0x8] sm:$0xf]
      %v1306 = vld [vmem:[%s519 + $0xc] sm:$0xf]
      %v1307 = vld [vmem:[%s519 + $0x10] sm:$0xf]
      %v1308 = vld [vmem:[%s519 + $0x14] sm:$0xf]
      %v1309 = vld [vmem:[%s519 + $0x18] sm:$0xf]
      %v1310 = vld [vmem:[%s519 + $0x1c] sm:$0xf]
      %v1311 = vld [vmem:[%s519 + $0x20] sm:$0xf]
      %v1312 = vld [vmem:[%s519 + $0x24] sm:$0xf]
      %v1313 = vld [vmem:[%s519 + $0x28] sm:$0xf]
      %v1314 = vld [vmem:[%s519 + $0x2c] sm:$0xf]
      %v1315 = vld [vmem:[%s519 + $0x30] sm:$0xf]
      %v1316 = vld [vmem:[%s519 + $0x34] sm:$0xf]
      %v1317 = vld [vmem:[%s519 + $0x38] sm:$0xf]
      %v1318 = vld [vmem:[%s519 + $0x3c] sm:$0xf]
      %v1319 = vld [vmem:[%s9] sm:$0x3]
      %v1336 = vunpack.c.l.b16 %v1303
      %v1337 = vunpack.c.l.b16 %v1304
      %v1338 = vunpack.c.l.b16 %v1305
      %v1339 = vunpack.c.l.b16 %v1306
      %v1340 = vunpack.c.l.b16 %v1307
      %v1341 = vunpack.c.l.b16 %v1308
      %v1342 = vunpack.c.l.b16 %v1309
      %v1343 = vunpack.c.l.b16 %v1310
      %v1344 = vunpack.c.l.b16 %v1311
      %v1345 = vunpack.c.l.b16 %v1312
      %v1346 = vunpack.c.l.b16 %v1313
      %v1347 = vunpack.c.l.b16 %v1314
      %v1348 = vunpack.c.l.b16 %v1315
      %v1349 = vunpack.c.l.b16 %v1316
      %v1350 = vunpack.c.l.b16 %v1317
      %v1351 = vunpack.c.l.b16 %v1318
      %v1352 = vpack.c.b16 %v1337, %v1336
      %v1353 = vpack.c.b16 %v1339, %v1338
      %v1354 = vpack.c.b16 %v1341, %v1340
      %v1355 = vpack.c.b16 %v1343, %v1342
      %v1356 = vpack.c.b16 %v1345, %v1344
      %v1357 = vpack.c.b16 %v1347, %v1346
      %v1358 = vpack.c.b16 %v1349, %v1348
      %v1359 = vpack.c.b16 %v1351, %v1350
      %vm1360 = vcmask 31744
      %v1362 = vsel %vm1360, %v1352, 0
      %v1365 = vsel %vm1360, %v1353, 0
      %v1368 = vsel %vm1360, %v1354, 0
      %v1371 = vsel %vm1360, %v1355, 0
      %v1374 = vsel %vm1360, %v1356, 0
      %v1377 = vsel %vm1360, %v1357, 0
      %v1380 = vsel %vm1360, %v1358, 0
      %v1383 = vsel %vm1360, %v1359, 0
      %vm1385 = vcmask 1041408
      %v1387 = vsel %vm1385, %v1319, 0
      %1389 = vmatpush.bf16.msra.mxu0 0
      %1390 = vmatpush.bf16.msra.mxu0 0
      %1391 = vmatpush.bf16.msra.mxu0 0
      %1392 = vmatpush.bf16.msra.mxu0 0
      %1393 = vmatpush.bf16.msra.mxu0 0
      %1394 = vmatpush.bf16.msra.mxu0 0
      %1395 = vmatpush.bf16.msra.mxu0 0
      %1396 = vmatpush.bf16.msra.mxu0 %v1387
      %1397 = vmatmul.bf16.gmra.mxu0 %v1362
      %v1398 = vpop.f32.mrf.mxu0
      %v1399 = vadd.f32 0.0, %v1398
      %v1400 = vpop.f32.mrf.mxu0
      %v1401 = vadd.f32 0.0, %v1400
      %1402 = vmatmul.bf16.gmra.mxu0 %v1365
      %v1403 = vpop.f32.mrf.mxu0
      %v1404 = vadd.f32 0.0, %v1403
      %v1405 = vpop.f32.mrf.mxu0
      %v1406 = vadd.f32 0.0, %v1405
      %1407 = vmatmul.bf16.gmra.mxu0 %v1368
      %v1408 = vpop.f32.mrf.mxu0
      %v1409 = vadd.f32 0.0, %v1408
      %v1410 = vpop.f32.mrf.mxu0
      %v1411 = vadd.f32 0.0, %v1410
      %1412 = vmatmul.bf16.gmra.mxu0 %v1371
      %v1413 = vpop.f32.mrf.mxu0
      %v1414 = vadd.f32 0.0, %v1413
      %v1415 = vpop.f32.mrf.mxu0
      %v1416 = vadd.f32 0.0, %v1415
      %1417 = vmatmul.bf16.gmra.mxu0 %v1374
      %v1418 = vpop.f32.mrf.mxu0
      %v1419 = vadd.f32 0.0, %v1418
      %v1420 = vpop.f32.mrf.mxu0
      %v1421 = vadd.f32 0.0, %v1420
      %1422 = vmatmul.bf16.gmra.mxu0 %v1377
      %v1423 = vpop.f32.mrf.mxu0
      %v1424 = vadd.f32 0.0, %v1423
      %v1425 = vpop.f32.mrf.mxu0
      %v1426 = vadd.f32 0.0, %v1425
      %1427 = vmatmul.bf16.gmra.mxu0 %v1380
      %v1428 = vpop.f32.mrf.mxu0
      %v1429 = vadd.f32 0.0, %v1428
      %v1430 = vpop.f32.mrf.mxu0
      %v1431 = vadd.f32 0.0, %v1430
      %1432 = vmatmul.bf16.gmra.mxu0 %v1383
      %v1433 = vpop.f32.mrf.mxu0
      %v1434 = vadd.f32 0.0, %v1433
      %v1435 = vpop.f32.mrf.mxu0
      %v1436 = vadd.f32 0.0, %v1435
      %1437 = vdwg.mxu0
      %v1438 = vld [vmem:[%s10] sm:$0x1]
      %v1440 = vperm.slane %v1438, 0
      %v1442 = vmul.f32 %v1399, %v1440
      %v1443 = vmul.f32 %v1401, %v1440
      %v1444 = vmul.f32 %v1404, %v1440
      %v1445 = vmul.f32 %v1406, %v1440
      %v1446 = vmul.f32 %v1409, %v1440
      %v1447 = vmul.f32 %v1411, %v1440
      %v1448 = vmul.f32 %v1414, %v1440
      %v1449 = vmul.f32 %v1416, %v1440
      %v1450 = vmul.f32 %v1419, %v1440
      %v1451 = vmul.f32 %v1421, %v1440
      %v1452 = vmul.f32 %v1424, %v1440
      %v1453 = vmul.f32 %v1426, %v1440
      %v1454 = vmul.f32 %v1429, %v1440
      %v1455 = vmul.f32 %v1431, %v1440
      %v1456 = vmul.f32 %v1434, %v1440
      %v1457 = vmul.f32 %v1436, %v1440
      %v1458 = vld [vmem:[%s11] sm:$0x1]
      %v1460 = vperm.slane %v1458, 0
      %v1462 = vadd.f32 %v1442, %v1460
      %v1463 = vadd.f32 %v1443, %v1460
      %v1464 = vadd.f32 %v1444, %v1460
      %v1465 = vadd.f32 %v1445, %v1460
      %v1466 = vadd.f32 %v1446, %v1460
      %v1467 = vadd.f32 %v1447, %v1460
      %v1468 = vadd.f32 %v1448, %v1460
      %v1469 = vadd.f32 %v1449, %v1460
      %v1470 = vadd.f32 %v1450, %v1460
      %v1471 = vadd.f32 %v1451, %v1460
      %v1472 = vadd.f32 %v1452, %v1460
      %v1473 = vadd.f32 %v1453, %v1460
      %v1474 = vadd.f32 %v1454, %v1460
      %v1475 = vadd.f32 %v1455, %v1460
      %v1476 = vadd.f32 %v1456, %v1460
      %v1477 = vadd.f32 %v1457, %v1460
      %v1478 = vmax.f32 %v1462, 0.0
      %v1479 = vmax.f32 %v1463, 0.0
      %v1480 = vmax.f32 %v1464, 0.0
      %v1481 = vmax.f32 %v1465, 0.0
      %v1482 = vmax.f32 %v1466, 0.0
      %v1483 = vmax.f32 %v1467, 0.0
      %v1484 = vmax.f32 %v1468, 0.0
      %v1485 = vmax.f32 %v1469, 0.0
      %v1486 = vmax.f32 %v1470, 0.0
      %v1487 = vmax.f32 %v1471, 0.0
      %v1488 = vmax.f32 %v1472, 0.0
      %v1489 = vmax.f32 %v1473, 0.0
      %v1490 = vmax.f32 %v1474, 0.0
      %v1491 = vmax.f32 %v1475, 0.0
      %v1492 = vmax.f32 %v1476, 0.0
      %v1493 = vmax.f32 %v1477, 0.0
      %v1494 = vadd.f32 %v1287, %v1478
      %v1495 = vadd.f32 %v1288, %v1479
      %v1496 = vadd.f32 %v1289, %v1480
      %v1497 = vadd.f32 %v1290, %v1481
      %v1498 = vadd.f32 %v1291, %v1482
      %v1499 = vadd.f32 %v1292, %v1483
      %v1500 = vadd.f32 %v1293, %v1484
      %v1501 = vadd.f32 %v1294, %v1485
      %v1502 = vadd.f32 %v1295, %v1486
      %v1503 = vadd.f32 %v1296, %v1487
      %v1504 = vadd.f32 %v1297, %v1488
      %v1505 = vadd.f32 %v1298, %v1489
      %v1506 = vadd.f32 %v1299, %v1490
      %v1507 = vadd.f32 %v1300, %v1491
      %v1508 = vadd.f32 %v1301, %v1492
      %v1509 = vadd.f32 %v1302, %v1493
      %1510 = vst.msk [vmem:[%s525] sm:$0xff] %vm603, %v1494
      %1511 = vst.msk [vmem:[%s525 + $0x8] sm:$0xff] %vm603, %v1495
      %1512 = vst.msk [vmem:[%s525 + $0x10] sm:$0xff] %vm603, %v1496
      %1513 = vst.msk [vmem:[%s525 + $0x18] sm:$0xff] %vm603, %v1497
      %1514 = vst.msk [vmem:[%s525 + $0x20] sm:$0xff] %vm603, %v1498
      %1515 = vst.msk [vmem:[%s525 + $0x28] sm:$0xff] %vm603, %v1499
      %1516 = vst.msk [vmem:[%s525 + $0x30] sm:$0xff] %vm603, %v1500
      %1517 = vst.msk [vmem:[%s525 + $0x38] sm:$0xff] %vm603, %v1501
      %1518 = vst.msk [vmem:[%s525 + $0x40] sm:$0xff] %vm603, %v1502
      %1519 = vst.msk [vmem:[%s525 + $0x48] sm:$0xff] %vm603, %v1503
      %1520 = vst.msk [vmem:[%s525 + $0x50] sm:$0xff] %vm603, %v1504
      %1521 = vst.msk [vmem:[%s525 + $0x58] sm:$0xff] %vm603, %v1505
      %1522 = vst.msk [vmem:[%s525 + $0x60] sm:$0xff] %vm603, %v1506
      %1523 = vst.msk [vmem:[%s525 + $0x68] sm:$0xff] %vm603, %v1507
      %1524 = vst.msk [vmem:[%s525 + $0x70] sm:$0xff] %vm603, %v1508
      %1525 = vst.msk [vmem:[%s525 + $0x78] sm:$0xff] %vm603, %v1509
      %s1526 = smul.u32 16, %s23
      %p1527 = scmp.lt.s32.totalorder %s1526, 63
      %s1528 = scalar_select %p1527, %s1526, 63
      %s1529 = smul.addr %s1528, 8
      %s1530 = scalar_lea.vmem %s12, %s1529
      // Predicated region
      $region69: #{dappm_forward.13} parent=67 // pred_check
        %p1531 = pneg %p323
      $region70: #{dappm_forward.13} parent=67 // pred_check_branch
        %1533 = sbr.rel (%p1531) target = $region72
      $region71: #{dappm_forward.13} parent=67 // pred_region
        %s1534 = smul.u32 16, %s23
      $region72: #{dappm_forward.13} parent=67 // pred_fallthru
        _
    $region68: #{dappm_forward.13} parent=5 // pred_fallthru
      _
    %p1535 = scmp.le.s32.totalorder 2, %s18
    // Predicated region
    $region73: #{dappm_forward.13} parent=5 // pred_check
      %p1536 = pneg %p1535
    $region74: #{dappm_forward.13} parent=5 // pred_check_branch
      %1538 = sbr.rel (%p1536) target = $region76
    $region75: #{dappm_forward.13} parent=5 // pred_region
      %s1539 = ssub.s32 %s18, 2
      // Predicated region
      $region77: #{dappm_forward.13} parent=75 // pred_check
        %p1540 = pneg %p329
      $region78: #{dappm_forward.13} parent=75 // pred_check_branch
        %1542 = sbr.rel (%p1540) target = $region80
      $region79: #{dappm_forward.13} parent=75 // pred_region
        %s1543 = smul.u32 16, %s24
        %p1544 = scmp.lt.s32.totalorder %s1543, 63
        %s1545 = scalar_select %p1544, %s1543, 63
        %s1546 = smul.addr %s1545, 8
        %s1547 = scalar_lea.vmem %s12, %s1546
      $region80: #{dappm_forward.13} parent=75 // pred_fallthru
        _
    $region76: #{dappm_forward.13} parent=5 // pred_fallthru
      _
  $region6: #{dappm_forward.13} parent=0 // loop_footer
    %s22 = sadd.s32 1, %s18
  $region7: #{dappm_forward.13} parent=0 // loop_footer_branch
    %17 = sbr.rel target = $region3
  $region8: #{dappm_forward.13} parent=0 // loop_exit
    _

// kernel: dappm_forward.9
$region0: #{dappm_forward.9}
  #allocation0 [shape = 'u32[]', space=smem, size = 0x4, offset = 0x4, fixed_abs, tag = 'smem constant byte address 0x4 - core index']
  #allocation1 [shape = 'u32[72,128]{1,0:T(1,128)}', space=vmem, size = 0x9000, scoped, tag = 'internal scratch']
  %s0 = inlined_call_operand.vmem [shape: bf16[2,2,10,18,8], index: 0, kind: input, shape index: {}]
  %s1 = inlined_call_operand.vmem [shape: bf16[9,8,8], index: 1, kind: input, shape index: {}]
  %s2 = inlined_call_operand.vmem [shape: f32[1,8], index: 2, kind: input, shape index: {}]
  %s3 = inlined_call_operand.vmem [shape: f32[1,8], index: 3, kind: input, shape index: {}]
  %s4 = inlined_call_operand.vmem [shape: bf16[2,16,16,8], index: 4, kind: output, shape index: {}]
  %s5 = sld [smem:[#allocation0]]
  $region49: #{dappm_forward.9} parent=0
    _
  %s7 = ssub.s32 1, %s5
  %s8 = scalar_select 0, %s7, %s5
  loop: start=0, step=1, limit=6
  $region2: #{dappm_forward.9} parent=0 // loop_pre_header
    _
  $region3: #{dappm_forward.9} parent=0 // loop_header
    %s10 = sphi 0, %s14
    %p11 = scmp.ge.s32.totalorder %s10, 6
    %s17 = sphi 0, %s29
    %s18 = sphi 0, %s25
    %s19 = sphi 0, %s17
    %s20 = sphi 0, %s18
    %s21 = sphi 0, %s19
    %s22 = sphi 0, %s20
    %s34 = sphi 0, %s36
    %s37 = sphi 0, %s34
    %s38 = sphi 0, %s37
    %s54 = sphi 0, %s38
    %s58 = sphi 0, %s58
    %s60 = sphi 0, %s58
    %s61 = sphi 0, %s60
    %s75 = sphi 0, %s61
    %s79 = sphi 0, %s79
    %s81 = sphi 0, %s79
    %s82 = sphi 0, %s81
    %s96 = sphi 0, %s82
    %s100 = sphi 0, %s100
    %s102 = sphi 0, %s100
    %s103 = sphi 0, %s102
    %s117 = sphi 0, %s103
    %s125 = sphi 0, %s127
    %s128 = sphi 0, %s125
    %s129 = sphi 0, %s128
    %s145 = sphi 0, %s129
  $region4: #{dappm_forward.9} parent=0 // loop_header_branch
    %13 = sbr.rel (%p11) target = $region8
  $region5: #{dappm_forward.9} parent=0 // loop_body
    %s15 = ssub.s32 %s10, 1
    %s16 = ssub.s32 %s10, 2
    %s23 = sadd.s32 1, %s18
    %p24 = scmp.ge.s32.totalorder %s23, 2
    %s25 = scalar_select %p24, 0, %s23
    %s26 = sadd.s32 1, %s17
    %s27 = scalar_select %p24, %s26, %s17
    %p28 = scmp.ge.s32.totalorder %s27, 2
    %s29 = scalar_select %p28, 0, %s27
    %s30 = ssub.s32 %s17, %s29
    %s31 = ssub.s32 %s18, %s25
    %s32 = sor.u32 %s30, %s31
    %p33 = scmp.eq.s32.totalorder %s32, 0
    %s35 = sadd.s32 %s34, 1
    %s36 = scalar_select %p33, %s34, %s35
    %p39 = pneg %p33
    %p40 = scmp.eq.s32.totalorder %s10, 3
    %p41 = por %p39, %p40
    %p42 = scmp.ne.s32.totalorder %s34, %s37
    %p43 = scmp.eq.s32.totalorder %s10, 0
    %p44 = por %p42, %p43
    %p45 = scmp.ne.s32.totalorder %s34, %s37
    %p46 = scmp.eq.s32.totalorder %s15, 3
    %p47 = por %p45, %p46
    %p48 = scmp.ne.s32.totalorder %s37, %s38
    %p49 = scmp.eq.s32.totalorder %s15, 0
    %p50 = por %p48, %p49
    %p51 = scmp.ne.s32.totalorder %s37, %s38
    %p52 = scmp.eq.s32.totalorder %s16, 3
    %p53 = por %p51, %p52
    %p55 = scmp.ne.s32.totalorder %s38, %s54
    %p56 = scmp.eq.s32.totalorder %s16, 0
    %p57 = por %p55, %p56
    %s59 = sadd.s32 %s58, 1
    %p62 = scmp.eq.s32.totalorder %s10, 3
    %p63 = scmp.ne.s32.totalorder %s58, %s60
    %p64 = scmp.eq.s32.totalorder %s10, 0
    %p65 = por %p63, %p64
    %p66 = scmp.ne.s32.totalorder %s58, %s60
    %p67 = scmp.eq.s32.totalorder %s15, 3
    %p68 = por %p66, %p67
    %p69 = scmp.ne.s32.totalorder %s60, %s61
    %p70 = scmp.eq.s32.totalorder %s15, 0
    %p71 = por %p69, %p70
    %p72 = scmp.ne.s32.totalorder %s60, %s61
    %p73 = scmp.eq.s32.totalorder %s16, 3
    %p74 = por %p72, %p73
    %p76 = scmp.ne.s32.totalorder %s61, %s75
    %p77 = scmp.eq.s32.totalorder %s16, 0
    %p78 = por %p76, %p77
    %s80 = sadd.s32 %s79, 1
    %p83 = scmp.eq.s32.totalorder %s10, 3
    %p84 = scmp.ne.s32.totalorder %s79, %s81
    %p85 = scmp.eq.s32.totalorder %s10, 0
    %p86 = por %p84, %p85
    %p87 = scmp.ne.s32.totalorder %s79, %s81
    %p88 = scmp.eq.s32.totalorder %s15, 3
    %p89 = por %p87, %p88
    %p90 = scmp.ne.s32.totalorder %s81, %s82
    %p91 = scmp.eq.s32.totalorder %s15, 0
    %p92 = por %p90, %p91
    %p93 = scmp.ne.s32.totalorder %s81, %s82
    %p94 = scmp.eq.s32.totalorder %s16, 3
    %p95 = por %p93, %p94
    %p97 = scmp.ne.s32.totalorder %s82, %s96
    %p98 = scmp.eq.s32.totalorder %s16, 0
    %p99 = por %p97, %p98
    %s101 = sadd.s32 %s100, 1
    %p104 = scmp.eq.s32.totalorder %s10, 3
    %p105 = scmp.ne.s32.totalorder %s100, %s102
    %p106 = scmp.eq.s32.totalorder %s10, 0
    %p107 = por %p105, %p106
    %p108 = scmp.ne.s32.totalorder %s100, %s102
    %p109 = scmp.eq.s32.totalorder %s15, 3
    %p110 = por %p108, %p109
    %p111 = scmp.ne.s32.totalorder %s102, %s103
    %p112 = scmp.eq.s32.totalorder %s15, 0
    %p113 = por %p111, %p112
    %p114 = scmp.ne.s32.totalorder %s102, %s103
    %p115 = scmp.eq.s32.totalorder %s16, 3
    %p116 = por %p114, %p115
    %p118 = scmp.ne.s32.totalorder %s103, %s117
    %p119 = scmp.eq.s32.totalorder %s16, 0
    %p120 = por %p118, %p119
    %s121 = ssub.s32 %s17, %s29
    %s122 = ssub.s32 %s18, %s25
    %s123 = sor.u32 %s121, %s122
    %p124 = scmp.eq.s32.totalorder %s123, 0
    %s126 = sadd.s32 %s125, 1
    %s127 = scalar_select %p124, %s125, %s126
    %p130 = pneg %p124
    %p131 = scmp.eq.s32.totalorder %s10, 3
    %p132 = por %p130, %p131
    %p133 = scmp.ne.s32.totalorder %s125, %s128
    %p134 = scmp.eq.s32.totalorder %s10, 0
    %p135 = por %p133, %p134
    %p136 = scmp.ne.s32.totalorder %s125, %s128
    %p137 = scmp.eq.s32.totalorder %s15, 3
    %p138 = por %p136, %p137
    %p139 = scmp.ne.s32.totalorder %s128, %s129
    %p140 = scmp.eq.s32.totalorder %s15, 0
    %p141 = por %p139, %p140
    %p142 = scmp.ne.s32.totalorder %s128, %s129
    %p143 = scmp.eq.s32.totalorder %s16, 3
    %p144 = por %p142, %p143
    %p146 = scmp.ne.s32.totalorder %s129, %s145
    %p147 = scmp.eq.s32.totalorder %s16, 0
    %p148 = por %p146, %p147
    %p149 = scmp.le.s32.totalorder 1, %s10
    %p150 = scmp.lt.s32.totalorder %s10, 5
    %p151 = pnand %p149, %p150
    %p152 = pneg %p151
    // Predicated region
    $region9: #{dappm_forward.9} parent=5 // pred_check
      _
    $region10: #{dappm_forward.9} parent=5 // pred_check_branch
      %154 = sbr.rel (%p151) target = $region12
    $region11: #{dappm_forward.9} parent=5 // pred_region
      %s155 = ssub.s32 %s10, 1
      // Predicated region
      $region13: #{dappm_forward.9} parent=11 // pred_check
        %p156 = pneg %p71
      $region14: #{dappm_forward.9} parent=11 // pred_check_branch
        %158 = sbr.rel (%p156) target = $region16
      $region15: #{dappm_forward.9} parent=11 // pred_region
        _
      $region16: #{dappm_forward.9} parent=11 // pred_fallthru
        _
      // Predicated region
      $region17: #{dappm_forward.9} parent=11 // pred_check
        %p159 = pneg %p92
      $region18: #{dappm_forward.9} parent=11 // pred_check_branch
        %161 = sbr.rel (%p159) target = $region20
      $region19: #{dappm_forward.9} parent=11 // pred_region
        _
      $region20: #{dappm_forward.9} parent=11 // pred_fallthru
        _
      // Predicated region
      $region21: #{dappm_forward.9} parent=11 // pred_check
        %p162 = pneg %p113
      $region22: #{dappm_forward.9} parent=11 // pred_check_branch
        %164 = sbr.rel (%p162) target = $region24
      $region23: #{dappm_forward.9} parent=11 // pred_region
        _
      $region24: #{dappm_forward.9} parent=11 // pred_fallthru
        _
    $region12: #{dappm_forward.9} parent=5 // pred_fallthru
      _
    %p165 = scmp.lt.s32.totalorder %s10, 4
    // Predicated region
    $region25: #{dappm_forward.9} parent=5 // pred_check
      %p166 = pneg %p165
    $region26: #{dappm_forward.9} parent=5 // pred_check_branch
      %168 = sbr.rel (%p166) target = $region28
    $region27: #{dappm_forward.9} parent=5 // pred_region
      // Predicated region
      $region29: #{dappm_forward.9} parent=27 // pred_check
        %p169 = pneg %p44
      $region30: #{dappm_forward.9} parent=27 // pred_check_branch
        %171 = sbr.rel (%p169) target = $region32
      $region31: #{dappm_forward.9} parent=27 // pred_region
        %p172 = scmp.lt.s32.totalorder %s17, 1
        %s173 = scalar_select %p172, %s17, 1
        %p174 = scmp.lt.s32.totalorder %s18, 1
        %s175 = scalar_select %p174, %s18, 1
        %s176 = smul.addr %s175, 30
        %s177 = smul.addr %s173, 60
        %s178 = sadd.s32 %s176, %s177
        %s179 = smul.addr %s178, 4
        %s180 = scalar_lea.vmem %s0, %s179
      $region32: #{dappm_forward.9} parent=27 // pred_fallthru
        _
    $region28: #{dappm_forward.9} parent=5 // pred_fallthru
      _
    %p181 = scmp.le.s32.totalorder 1, %s10
    %p182 = scmp.lt.s32.totalorder %s10, 5
    %p183 = pnand %p181, %p182
    %p184 = pneg %p183
    // Predicated region
    $region33: #{dappm_forward.9} parent=5 // pred_check
      _
    $region34: #{dappm_forward.9} parent=5 // pred_check_branch
      %186 = sbr.rel (%p183) target = $region36
    $region35: #{dappm_forward.9} parent=5 // pred_region
      %s187 = ssub.s32 %s10, 1
      %p188 = scmp.lt.s32.totalorder %s19, 1
      %s189 = scalar_select %p188, %s19, 1
      %p190 = scmp.lt.s32.totalorder %s20, 1
      %s191 = scalar_select %p190, %s20, 1
      %s192 = smul.addr %s191, 30
      %s193 = smul.addr %s189, 60
      %s194 = sadd.s32 %s192, %s193
      %s195 = smul.addr %s194, 4
      %s196 = scalar_lea.vmem %s0, %s195
      %p197 = pneg %p50
      %p198 = pneg %p47
      %p199 = pneg %p71
      %p200 = pneg %p68
      %p201 = pneg %p92
      %p202 = pneg %p89
      %p203 = pneg %p113
      %p204 = pneg %p110
      %p205 = pneg %p141
      %p206 = pneg %p138
      %s207 = smul.u32 8, %s20
      %p208 = scmp.lt.s32.totalorder %s19, 1
      %s209 = scalar_select %p208, %s19, 1
      %p210 = scmp.lt.s32.totalorder %s207, 15
      %s211 = scalar_select %p210, %s207, 15
      %s212 = smul.addr %s211, 2
      %s213 = smul.addr %s209, 32
      %s214 = sadd.s32 %s212, %s213
      %s215 = smul.addr %s214, 4
      %s216 = scalar_lea.vmem %s4, %s215
      %p217 = scmp.lt.s32.totalorder %s19, 1
      %s218 = scalar_select %p217, %s19, 1
      %p219 = scmp.lt.s32.totalorder %s20, 1
      %s220 = scalar_select %p219, %s20, 1
      %s221 = smul.addr %s220, 30
      %s222 = smul.addr %s218, 60
      %s223 = sadd.s32 %s221, %s222
      %s224 = smul.addr %s223, 4
      %s225 = scalar_lea.vmem %s0, %s224
      %s226 = smul.u32 8, %s20
      %p227 = scmp.lt.s32.totalorder %s19, 1
      %s228 = scalar_select %p227, %s19, 1
      %p229 = scmp.lt.s32.totalorder %s226, 15
      %s230 = scalar_select %p229, %s226, 15
      %s231 = smul.addr %s230, 2
      %s232 = smul.addr %s228, 32
      %s233 = sadd.s32 %s231, %s232
      %s234 = smul.addr %s233, 4
      %s235 = scalar_lea.vmem %s4, %s234
      %s236 = smul.u32 8, %s20
      %v238 = vld [vmem:[%s225] sm:$0xf]
      %v239 = vld [vmem:[%s225 + $0x4] sm:$0xf]
      %v240 = vld [vmem:[%s225 + $0x8] sm:$0x1]
      %v241 = vld [vmem:[%s225 + $0xc] sm:$0xf]
      %v242 = vld [vmem:[%s225 + $0x10] sm:$0xf]
      %v243 = vld [vmem:[%s225 + $0x14] sm:$0x1]
      %v244 = vld [vmem:[%s225 + $0x18] sm:$0xf]
      %v245 = vld [vmem:[%s225 + $0x1c] sm:$0xf]
      %v246 = vld [vmem:[%s225 + $0x20] sm:$0x1]
      %v247 = vld [vmem:[%s225 + $0x24] sm:$0xf]
      %v248 = vld [vmem:[%s225 + $0x28] sm:$0xf]
      %v249 = vld [vmem:[%s225 + $0x2c] sm:$0x1]
      %v250 = vld [vmem:[%s225 + $0x30] sm:$0xf]
      %v251 = vld [vmem:[%s225 + $0x34] sm:$0xf]
      %v252 = vld [vmem:[%s225 + $0x38] sm:$0x1]
      %v253 = vld [vmem:[%s225 + $0x3c] sm:$0xf]
      %v254 = vld [vmem:[%s225 + $0x40] sm:$0xf]
      %v255 = vld [vmem:[%s225 + $0x44] sm:$0x1]
      %v256 = vld [vmem:[%s225 + $0x48] sm:$0xf]
      %v257 = vld [vmem:[%s225 + $0x4c] sm:$0xf]
      %v258 = vld [vmem:[%s225 + $0x50] sm:$0x1]
      %v259 = vld [vmem:[%s225 + $0x54] sm:$0xf]
      %v260 = vld [vmem:[%s225 + $0x58] sm:$0xf]
      %v261 = vld [vmem:[%s225 + $0x5c] sm:$0x1]
      %v262 = vld [vmem:[%s225 + $0x60] sm:$0xf]
      %v263 = vld [vmem:[%s225 + $0x64] sm:$0xf]
      %v264 = vld [vmem:[%s225 + $0x68] sm:$0x1]
      %v265 = vld [vmem:[%s225 + $0x6c] sm:$0xf]
      %v266 = vld [vmem:[%s225 + $0x70] sm:$0xf]
      %v267 = vld [vmem:[%s225 + $0x74] sm:$0x1]
      %v292 = vrot.slane %v238, 3
      %v293 = vrot.slane %v239, 3
      %v294 = vrot.slane %v240, 3
      %v295 = vrot.slane %v241, 3
      %v296 = vrot.slane %v242, 3
      %v297 = vrot.slane %v243, 3
      %v298 = vrot.slane %v244, 3
      %v299 = vrot.slane %v245, 3
      %v300 = vrot.slane %v246, 3
      %v301 = vrot.slane %v247, 3
      %v302 = vrot.slane %v248, 3
      %v303 = vrot.slane %v249, 3
      %v304 = vrot.slane %v250, 3
      %v305 = vrot.slane %v251, 3
      %v306 = vrot.slane %v252, 3
      %v307 = vrot.slane %v253, 3
      %v308 = vrot.slane %v254, 3
      %v309 = vrot.slane %v255, 3
      %v310 = vrot.slane %v256, 3
      %v311 = vrot.slane %v257, 3
      %v312 = vrot.slane %v258, 3
      %v313 = vrot.slane %v259, 3
      %v314 = vrot.slane %v260, 3
      %v315 = vrot.slane %v261, 3
      %vm316 = vcmask 1040384
      %v319 = vsel %vm316, %v238, %v292
      %vm320 = vcmask 1041409
      %v321 = vsel %vm320, %v238, %v292
      %v323 = vrot.slane %v321, 1
      %vm324 = vcmask 1042434
      %v325 = vsel %vm324, %v238, %v292
      %v327 = vrot.slane %v325, 2
      %vm328 = vcmask 1043459
      %v329 = vsel %vm328, %v238, %v292
      %v331 = vrot.slane %v329, 3
      %v334 = vsel %vm316, %v239, %v293
      %v335 = vsel %vm320, %v239, %v293
      %v337 = vrot.slane %v335, 1
      %v338 = vsel %vm324, %v239, %v293
      %v340 = vrot.slane %v338, 2
      %v341 = vsel %vm328, %v239, %v293
      %v343 = vrot.slane %v341, 3
      %v346 = vsel %vm316, %v240, %v294
      %v349 = vsel %vm316, %v241, %v295
      %v350 = vsel %vm320, %v241, %v295
      %v352 = vrot.slane %v350, 1
      %v353 = vsel %vm324, %v241, %v295
      %v355 = vrot.slane %v353, 2
      %v356 = vsel %vm328, %v241, %v295
      %v358 = vrot.slane %v356, 3
      %v361 = vsel %vm316, %v242, %v296
      %v362 = vsel %vm320, %v242, %v296
      %v364 = vrot.slane %v362, 1
      %v365 = vsel %vm324, %v242, %v296
      %v367 = vrot.slane %v365, 2
      %v368 = vsel %vm328, %v242, %v296
      %v370 = vrot.slane %v368, 3
      %v373 = vsel %vm316, %v243, %v297
      %v376 = vsel %vm316, %v244, %v298
      %v377 = vsel %vm320, %v244, %v298
      %v379 = vrot.slane %v377, 1
      %v380 = vsel %vm324, %v244, %v298
      %v382 = vrot.slane %v380, 2
      %v383 = vsel %vm328, %v244, %v298
      %v385 = vrot.slane %v383, 3
      %v388 = vsel %vm316, %v245, %v299
      %v389 = vsel %vm320, %v245, %v299
      %v391 = vrot.slane %v389, 1
      %v392 = vsel %vm324, %v245, %v299
      %v394 = vrot.slane %v392, 2
      %v395 = vsel %vm328, %v245, %v299
      %v397 = vrot.slane %v395, 3
      %v400 = vsel %vm316, %v246, %v300
      %v403 = vsel %vm316, %v247, %v301
      %v404 = vsel %vm320, %v247, %v301
      %v406 = vrot.slane %v404, 1
      %v407 = vsel %vm324, %v247, %v301
      %v409 = vrot.slane %v407, 2
      %v410 = vsel %vm328, %v247, %v301
      %v412 = vrot.slane %v410, 3
      %v415 = vsel %vm316, %v248, %v302
      %v416 = vsel %vm320, %v248, %v302
      %v418 = vrot.slane %v416, 1
      %v419 = vsel %vm324, %v248, %v302
      %v421 = vrot.slane %v419, 2
      %v422 = vsel %vm328, %v248, %v302
      %v424 = vrot.slane %v422, 3
      %v427 = vsel %vm316, %v249, %v303
      %v430 = vsel %vm316, %v250, %v304
      %v431 = vsel %vm320, %v250, %v304
      %v433 = vrot.slane %v431, 1
      %v434 = vsel %vm324, %v250, %v304
      %v436 = vrot.slane %v434, 2
      %v437 = vsel %vm328, %v250, %v304
      %v439 = vrot.slane %v437, 3
      %v442 = vsel %vm316, %v251, %v305
      %v443 = vsel %vm320, %v251, %v305
      %v445 = vrot.slane %v443, 1
      %v446 = vsel %vm324, %v251, %v305
      %v448 = vrot.slane %v446, 2
      %v449 = vsel %vm328, %v251, %v305
      %v451 = vrot.slane %v449, 3
      %v454 = vsel %vm316, %v252, %v306
      %v457 = vsel %vm316, %v253, %v307
      %v458 = vsel %vm320, %v253, %v307
      %v460 = vrot.slane %v458, 1
      %v461 = vsel %vm324, %v253, %v307
      %v463 = vrot.slane %v461, 2
      %v464 = vsel %vm328, %v253, %v307
      %v466 = vrot.slane %v464, 3
      %v469 = vsel %vm316, %v254, %v308
      %v470 = vsel %vm320, %v254, %v308
      %v472 = vrot.slane %v470, 1
      %v473 = vsel %vm324, %v254, %v308
      %v475 = vrot.slane %v473, 2
      %v476 = vsel %vm328, %v254, %v308
      %v478 = vrot.slane %v476, 3
      %v481 = vsel %vm316, %v255, %v309
      %v484 = vsel %vm316, %v256, %v310
      %v485 = vsel %vm320, %v256, %v310
      %v487 = vrot.slane %v485, 1
      %v488 = vsel %vm324, %v256, %v310
      %v490 = vrot.slane %v488, 2
      %v491 = vsel %vm328, %v256, %v310
      %v493 = vrot.slane %v491, 3
      %v496 = vsel %vm316, %v257, %v311
      %v497 = vsel %vm320, %v257, %v311
      %v499 = vrot.slane %v497, 1
      %v500 = vsel %vm324, %v257, %v311
      %v502 = vrot.slane %v500, 2
      %v503 = vsel %vm328, %v257, %v311
      %v505 = vrot.slane %v503, 3
      %v508 = vsel %vm316, %v258, %v312
      %v511 = vsel %vm316, %v259, %v313
      %v512 = vsel %vm320, %v259, %v313
      %v514 = vrot.slane %v512, 1
      %v515 = vsel %vm324, %v259, %v313
      %v517 = vrot.slane %v515, 2
      %v518 = vsel %vm328, %v259, %v313
      %v520 = vrot.slane %v518, 3
      %v523 = vsel %vm316, %v260, %v314
      %v524 = vsel %vm320, %v260, %v314
      %v526 = vrot.slane %v524, 1
      %v527 = vsel %vm324, %v260, %v314
      %v529 = vrot.slane %v527, 2
      %v530 = vsel %vm328, %v260, %v314
      %v532 = vrot.slane %v530, 3
      %v535 = vsel %vm316, %v261, %v315
      %v536 = vld [vmem:[%s1] sm:$0xf]
      %s537 = scalar_lea.vmem %s1, 4
      %v538 = vld [vmem:[%s537] sm:$0xf]
      %s539 = scalar_lea.vmem %s1, 8
      %v540 = vld [vmem:[%s539] sm:$0xf]
      %v544 = vrot.slane %v262, 3
      %v545 = vrot.slane %v263, 3
      %v546 = vrot.slane %v264, 3
      %v549 = vsel %vm316, %v262, %v544
      %v550 = vsel %vm320, %v262, %v544
      %v552 = vrot.slane %v550, 1
      %v553 = vsel %vm324, %v262, %v544
      %v555 = vrot.slane %v553, 2
      %v556 = vsel %vm328, %v262, %v544
      %v558 = vrot.slane %v556, 3
      %v561 = vsel %vm316, %v263, %v545
      %v562 = vsel %vm320, %v263, %v545
      %v564 = vrot.slane %v562, 1
      %v565 = vsel %vm324, %v263, %v545
      %v567 = vrot.slane %v565, 2
      %v568 = vsel %vm328, %v263, %v545
      %v570 = vrot.slane %v568, 3
      %v573 = vsel %vm316, %v264, %v546
      %s574 = scalar_lea.vmem %s1, 12
      %v575 = vld [vmem:[%s574] sm:$0xf]
      %576 = vst [vmem:[#allocation1] ss:$9 sm:$0xff] %v349
      %s578 = scalar_lea.vmem [#allocation1], 1
      %579 = vst [vmem:[%s578] ss:$9 sm:$0xff] %v352
      %s581 = scalar_lea.vmem [#allocation1], 2
      %582 = vst [vmem:[%s581] ss:$9 sm:$0xff] %v355
      %s584 = scalar_lea.vmem [#allocation1], 3
      %585 = vst [vmem:[%s584] ss:$9 sm:$0xff] %v358
      %s586 = scalar_lea.vmem [#allocation1], 4
      %587 = vst [vmem:[%s586] ss:$9 sm:$0xff] %v361
      %s589 = scalar_lea.vmem [#allocation1], 5
      %590 = vst [vmem:[%s589] ss:$9 sm:$0xff] %v364
      %s592 = scalar_lea.vmem [#allocation1], 6
      %593 = vst [vmem:[%s592] ss:$9 sm:$0xff] %v367
      %s595 = scalar_lea.vmem [#allocation1], 7
      %596 = vst [vmem:[%s595] ss:$9 sm:$0xff] %v370
      %v597 = vld [vmem:[#allocation1] sm:$0xff]
      %598 = vst [vmem:[#allocation1] ss:$9 sm:$0xff] %v373
      %599 = vst [vmem:[%s578] ss:$9 sm:$0xff] %v376
      %601 = vst [vmem:[%s581] ss:$9 sm:$0xff] %v379
      %603 = vst [vmem:[%s584] ss:$9 sm:$0xff] %v382
      %605 = vst [vmem:[%s586] ss:$9 sm:$0xff] %v385
      %606 = vst [vmem:[%s589] ss:$9 sm:$0xff] %v388
      %608 = vst [vmem:[%s592] ss:$9 sm:$0xff] %v391
      %610 = vst [vmem:[%s595] ss:$9 sm:$0xff] %v394
      %v611 = vld [vmem:[#allocation1] sm:$0xff]
      %613 = vst [vmem:[#allocation1] ss:$9 sm:$0xff] %v397
      %614 = vst [vmem:[%s578] ss:$9 sm:$0xff] %v400
      %615 = vst [vmem:[%s581] ss:$9 sm:$0xff] %v403
      %617 = vst [vmem:[%s584] ss:$9 sm:$0xff] %v406
      %619 = vst [vmem:[%s586] ss:$9 sm:$0xff] %v409
      %621 = vst [vmem:[%s589] ss:$9 sm:$0xff] %v412
      %622 = vst [vmem:[%s592] ss:$9 sm:$0xff] %v415
      %624 = vst [vmem:[%s595] ss:$9 sm:$0xff] %v418
      %v625 = vld [vmem:[#allocation1] sm:$0xff]
      %627 = vst [vmem:[#allocation1] ss:$9 sm:$0xff] %v421
      %629 = vst [vmem:[%s578] ss:$9 sm:$0xff] %v424
      %630 = vst [vmem:[%s581] ss:$9 sm:$0xff] %v427
      %631 = vst [vmem:[%s584] ss:$9 sm:$0xff] %v430
      %633 = vst [vmem:[%s586] ss:$9 sm:$0xff] %v433
      %635 = vst [vmem:[%s589] ss:$9 sm:$0xff] %v436
      %637 = vst [vmem:[%s592] ss:$9 sm:$0xff] %v439
      %638 = vst [vmem:[%s595] ss:$9 sm:$0xff] %v442
      %v639 = vld [vmem:[#allocation1] sm:$0xff]
      %641 = vst [vmem:[#allocation1] ss:$9 sm:$0xff] %v445
      %643 = vst [vmem:[%s578] ss:$9 sm:$0xff] %v448
      %645 = vst [vmem:[%s581] ss:$9 sm:$0xff] %v451
      %646 = vst [vmem:[%s584] ss:$9 sm:$0xff] %v454
      %647 = vst [vmem:[%s586] ss:$9 sm:$0xff] %v457
      %649 = vst [vmem:[%s589] ss:$9 sm:$0xff] %v460
      %651 = vst [vmem:[%s592] ss:$9 sm:$0xff] %v463
      %653 = vst [vmem:[%s595] ss:$9 sm:$0xff] %v466
      %v654 = vld [vmem:[#allocation1] sm:$0xff]
      %655 = vst [vmem:[#allocation1] ss:$9 sm:$0xff] %v469
      %657 = vst [vmem:[%s578] ss:$9 sm:$0xff] %v472
      %659 = vst [vmem:[%s581] ss:$9 sm:$0xff] %v475
      %661 = vst [vmem:[%s584] ss:$9 sm:$0xff] %v478
      %662 = vst [vmem:[%s586] ss:$9 sm:$0xff] %v481
      %663 = vst [vmem:[%s589] ss:$9 sm:$0xff] %v484
      %665 = vst [vmem:[%s592] ss:$9 sm:$0xff] %v487
      %667 = vst [vmem:[%s595] ss:$9 sm:$0xff] %v490
      %v668 = vld [vmem:[#allocation1] sm:$0xff]
      %670 = vst [vmem:[#allocation1] ss:$9 sm:$0xff] %v493
      %671 = vst [vmem:[%s578] ss:$9 sm:$0xff] %v496
      %673 = vst [vmem:[%s581] ss:$9 sm:$0xff] %v499
      %675 = vst [vmem:[%s584] ss:$9 sm:$0xff] %v502
      %677 = vst [vmem:[%s586] ss:$9 sm:$0xff] %v505
      %678 = vst [vmem:[%s589] ss:$9 sm:$0xff] %v508
      %679 = vst [vmem:[%s592] ss:$9 sm:$0xff] %v511
      %681 = vst [vmem:[%s595] ss:$9 sm:$0xff] %v514
      %v682 = vld [vmem:[#allocation1] sm:$0xff]
      %684 = vst [vmem:[#allocation1] ss:$9 sm:$0xff] %v517
      %686 = vst [vmem:[%s578] ss:$9 sm:$0xff] %v520
      %687 = vst [vmem:[%s581] ss:$9 sm:$0xff] %v523
      %689 = vst [vmem:[%s584] ss:$9 sm:$0xff] %v526
      %691 = vst [vmem:[%s586] ss:$9 sm:$0xff] %v529
      %693 = vst [vmem:[%s589] ss:$9 sm:$0xff] %v532
      %694 = vst [vmem:[%s592] ss:$9 sm:$0xff] %v535
      %695 = vst [vmem:[%s595] ss:$9 sm:$0xff] %v549
      %v696 = vld [vmem:[#allocation1] sm:$0xff]
      %698 = vst [vmem:[#allocation1] ss:$9 sm:$0xff] %v552
      %700 = vst [vmem:[%s578] ss:$9 sm:$0xff] %v555
      %702 = vst [vmem:[%s581] ss:$9 sm:$0xff] %v558
      %703 = vst [vmem:[%s584] ss:$9 sm:$0xff] %v561
      %705 = vst [vmem:[%s586] ss:$9 sm:$0xff] %v564
      %707 = vst [vmem:[%s589] ss:$9 sm:$0xff] %v567
      %709 = vst [vmem:[%s592] ss:$9 sm:$0xff] %v570
      %710 = vst [vmem:[%s595] ss:$9 sm:$0xff] %v573
      %v711 = vld [vmem:[#allocation1] sm:$0xff]
      %vm712 = vcmask 64512
      %v713 = vsel %vm712, %v597, 0
      %v715 = vsel %vm712, %v611, 0
      %v717 = vsel %vm712, %v625, 0
      %v719 = vsel %vm712, %v639, 0
      %v721 = vsel %vm712, %v654, 0
      %v723 = vsel %vm712, %v668, 0
      %v725 = vsel %vm712, %v682, 0
      %v727 = vsel %vm712, %v696, 0
      %v729 = vsel %vm712, %v711, 0
      %vm731 = vcmask 1043456
      %v733 = vsel %vm731, %v575, 0
      %735 = vmatpush.bf16.msra.mxu0 0
      %736 = vmatpush.bf16.msra.mxu0 0
      %737 = vmatpush.bf16.msra.mxu0 0
      %738 = vmatpush.bf16.msra.mxu0 0
      %739 = vmatpush.bf16.msra.mxu0 0
      %740 = vmatpush.bf16.msra.mxu0 0
      %741 = vmatpush.bf16.msra.mxu0 0
      %742 = vmatpush.bf16.msra.mxu0 %v733
      %743 = vmatmul.bf16.gmra.mxu0 %v713
      %v744 = vpop.f32.mrf.mxu0
      %v745 = vadd.f32 0.0, %v744
      %v746 = vpop.f32.mrf.mxu0
      %v747 = vadd.f32 0.0, %v746
      %748 = vmatmul.bf16.gmra.mxu0 %v715
      %v749 = vpop.f32.mrf.mxu0
      %v750 = vadd.f32 0.0, %v749
      %v751 = vpop.f32.mrf.mxu0
      %v752 = vadd.f32 0.0, %v751
      %753 = vmatmul.bf16.gmra.mxu0 %v717
      %v754 = vpop.f32.mrf.mxu0
      %v755 = vadd.f32 0.0, %v754
      %v756 = vpop.f32.mrf.mxu0
      %v757 = vadd.f32 0.0, %v756
      %758 = vmatmul.bf16.gmra.mxu0 %v719
      %v759 = vpop.f32.mrf.mxu0
      %v760 = vadd.f32 0.0, %v759
      %v761 = vpop.f32.mrf.mxu0
      %v762 = vadd.f32 0.0, %v761
      %763 = vmatmul.bf16.gmra.mxu0 %v721
      %v764 = vpop.f32.mrf.mxu0
      %v765 = vadd.f32 0.0, %v764
      %v766 = vpop.f32.mrf.mxu0
      %v767 = vadd.f32 0.0, %v766
      %768 = vmatmul.bf16.gmra.mxu0 %v723
      %v769 = vpop.f32.mrf.mxu0
      %v770 = vadd.f32 0.0, %v769
      %v771 = vpop.f32.mrf.mxu0
      %v772 = vadd.f32 0.0, %v771
      %773 = vmatmul.bf16.gmra.mxu0 %v725
      %v774 = vpop.f32.mrf.mxu0
      %v775 = vadd.f32 0.0, %v774
      %v776 = vpop.f32.mrf.mxu0
      %v777 = vadd.f32 0.0, %v776
      %778 = vmatmul.bf16.gmra.mxu0 %v727
      %v779 = vpop.f32.mrf.mxu0
      %v780 = vadd.f32 0.0, %v779
      %v781 = vpop.f32.mrf.mxu0
      %v782 = vadd.f32 0.0, %v781
      %783 = vmatmul.bf16.gmra.mxu0 %v729
      %v784 = vpop.f32.mrf.mxu0
      %v785 = vadd.f32 0.0, %v784
      %v786 = vpop.f32.mrf.mxu0
      %v787 = vadd.f32 0.0, %v786
      %788 = vdwg.mxu0
      %789 = vst [vmem:[#allocation1] ss:$9 sm:$0xff] %v319
      %s791 = scalar_lea.vmem [#allocation1], 1
      %792 = vst [vmem:[%s791] ss:$9 sm:$0xff] %v323
      %s794 = scalar_lea.vmem [#allocation1], 2
      %795 = vst [vmem:[%s794] ss:$9 sm:$0xff] %v327
      %s797 = scalar_lea.vmem [#allocation1], 3
      %798 = vst [vmem:[%s797] ss:$9 sm:$0xff] %v331
      %s799 = scalar_lea.vmem [#allocation1], 4
      %800 = vst [vmem:[%s799] ss:$9 sm:$0xff] %v334
      %s802 = scalar_lea.vmem [#allocation1], 5
      %803 = vst [vmem:[%s802] ss:$9 sm:$0xff] %v337
      %s805 = scalar_lea.vmem [#allocation1], 6
      %806 = vst [vmem:[%s805] ss:$9 sm:$0xff] %v340
      %s808 = scalar_lea.vmem [#allocation1], 7
      %809 = vst [vmem:[%s808] ss:$9 sm:$0xff] %v343
      %v810 = vld [vmem:[#allocation1] sm:$0xff]
      %811 = vst [vmem:[#allocation1] ss:$9 sm:$0xff] %v346
      %812 = vst [vmem:[%s791] ss:$9 sm:$0xff] %v349
      %813 = vst [vmem:[%s794] ss:$9 sm:$0xff] %v352
      %814 = vst [vmem:[%s797] ss:$9 sm:$0xff] %v355
      %815 = vst [vmem:[%s799] ss:$9 sm:$0xff] %v358
      %816 = vst [vmem:[%s802] ss:$9 sm:$0xff] %v361
      %817 = vst [vmem:[%s805] ss:$9 sm:$0xff] %v364
      %818 = vst [vmem:[%s808] ss:$9 sm:$0xff] %v367
      %v819 = vld [vmem:[#allocation1] sm:$0xff]
      %820 = vst [vmem:[#allocation1] ss:$9 sm:$0xff] %v370
      %821 = vst [vmem:[%s791] ss:$9 sm:$0xff] %v373
      %822 = vst [vmem:[%s794] ss:$9 sm:$0xff] %v376
      %823 = vst [vmem:[%s797] ss:$9 sm:$0xff] %v379
      %824 = vst [vmem:[%s799] ss:$9 sm:$0xff] %v382
      %825 = vst [vmem:[%s802] ss:$9 sm:$0xff] %v385
      %826 = vst [vmem:[%s805] ss:$9 sm:$0xff] %v388
      %827 = vst [vmem:[%s808] ss:$9 sm:$0xff] %v391
      %v828 = vld [vmem:[#allocation1] sm:$0xff]
      %829 = vst [vmem:[#allocation1] ss:$9 sm:$0xff] %v394
      %830 = vst [vmem:[%s791] ss:$9 sm:$0xff] %v397
      %831 = vst [vmem:[%s794] ss:$9 sm:$0xff] %v400
      %832 = vst [vmem:[%s797] ss:$9 sm:$0xff] %v403
      %833 = vst [vmem:[%s799] ss:$9 sm:$0xff] %v406
      %834 = vst [vmem:[%s802] ss:$9 sm:$0xff] %v409
      %835 = vst [vmem:[%s805] ss:$9 sm:$0xff] %v412
      %836 = vst [vmem:[%s808] ss:$9 sm:$0xff] %v415
      %v837 = vld [vmem:[#allocation1] sm:$0xff]
      %838 = vst [vmem:[#allocation1] ss:$9 sm:$0xff] %v418
      %839 = vst [vmem:[%s791] ss:$9 sm:$0xff] %v421
      %840 = vst [vmem:[%s794] ss:$9 sm:$0xff] %v424
      %841 = vst [vmem:[%s797] ss:$9 sm:$0xff] %v427
      %842 = vst [vmem:[%s799] ss:$9 sm:$0xff] %v430
      %843 = vst [vmem:[%s802] ss:$9 sm:$0xff] %v433
      %844 = vst [vmem:[%s805] ss:$9 sm:$0xff] %v436
      %845 = vst [vmem:[%s808] ss:$9 sm:$0xff] %v439
      %v846 = vld [vmem:[#allocation1] sm:$0xff]
      %847 = vst [vmem:[#allocation1] ss:$9 sm:$0xff] %v442
      %848 = vst [vmem:[%s791] ss:$9 sm:$0xff] %v445
      %849 = vst [vmem:[%s794] ss:$9 sm:$0xff] %v448
      %850 = vst [vmem:[%s797] ss:$9 sm:$0xff] %v451
      %851 = vst [vmem:[%s799] ss:$9 sm:$0xff] %v454
      %852 = vst [vmem:[%s802] ss:$9 sm:$0xff] %v457
      %853 = vst [vmem:[%s805] ss:$9 sm:$0xff] %v460
      %854 = vst [vmem:[%s808] ss:$9 sm:$0xff] %v463
      %v855 = vld [vmem:[#allocation1] sm:$0xff]
      %856 = vst [vmem:[#allocation1] ss:$9 sm:$0xff] %v466
      %857 = vst [vmem:[%s791] ss:$9 sm:$0xff] %v469
      %858 = vst [vmem:[%s794] ss:$9 sm:$0xff] %v472
      %859 = vst [vmem:[%s797] ss:$9 sm:$0xff] %v475
      %860 = vst [vmem:[%s799] ss:$9 sm:$0xff] %v478
      %861 = vst [vmem:[%s802] ss:$9 sm:$0xff] %v481
      %862 = vst [vmem:[%s805] ss:$9 sm:$0xff] %v484
      %863 = vst [vmem:[%s808] ss:$9 sm:$0xff] %v487
      %v864 = vld [vmem:[#allocation1] sm:$0xff]
      %865 = vst [vmem:[#allocation1] ss:$9 sm:$0xff] %v490
      %866 = vst [vmem:[%s791] ss:$9 sm:$0xff] %v493
      %867 = vst [vmem:[%s794] ss:$9 sm:$0xff] %v496
      %868 = vst [vmem:[%s797] ss:$9 sm:$0xff] %v499
      %869 = vst [vmem:[%s799] ss:$9 sm:$0xff] %v502
      %870 = vst [vmem:[%s802] ss:$9 sm:$0xff] %v505
      %871 = vst [vmem:[%s805] ss:$9 sm:$0xff] %v508
      %872 = vst [vmem:[%s808] ss:$9 sm:$0xff] %v511
      %v873 = vld [vmem:[#allocation1] sm:$0xff]
      %874 = vst [vmem:[#allocation1] ss:$9 sm:$0xff] %v514
      %875 = vst [vmem:[%s791] ss:$9 sm:$0xff] %v517
      %876 = vst [vmem:[%s794] ss:$9 sm:$0xff] %v520
      %877 = vst [vmem:[%s797] ss:$9 sm:$0xff] %v523
      %878 = vst [vmem:[%s799] ss:$9 sm:$0xff] %v526
      %879 = vst [vmem:[%s802] ss:$9 sm:$0xff] %v529
      %880 = vst [vmem:[%s805] ss:$9 sm:$0xff] %v532
      %881 = vst [vmem:[%s808] ss:$9 sm:$0xff] %v535
      %v882 = vld [vmem:[#allocation1] sm:$0xff]
      %v883 = vsel %vm712, %v810, 0
      %v885 = vsel %vm712, %v819, 0
      %v887 = vsel %vm712, %v828, 0
      %v889 = vsel %vm712, %v837, 0
      %v891 = vsel %vm712, %v846, 0
      %v893 = vsel %vm712, %v855, 0
      %v895 = vsel %vm712, %v864, 0
      %v897 = vsel %vm712, %v873, 0
      %v899 = vsel %vm712, %v882, 0
      %v902 = vsel %vm731, %v536, 0
      %904 = vmatpush.bf16.msra.mxu0 0
      %905 = vmatpush.bf16.msra.mxu0 0
      %906 = vmatpush.bf16.msra.mxu0 0
      %907 = vmatpush.bf16.msra.mxu0 0
      %908 = vmatpush.bf16.msra.mxu0 0
      %909 = vmatpush.bf16.msra.mxu0 0
      %910 = vmatpush.bf16.msra.mxu0 0
      %911 = vmatpush.bf16.msra.mxu0 %v902
      %912 = vmatmul.bf16.gmra.mxu0 %v883
      %v913 = vpop.f32.mrf.mxu0
      %v914 = vadd.f32 %v745, %v913
      %v915 = vpop.f32.mrf.mxu0
      %v916 = vadd.f32 %v747, %v915
      %917 = vmatmul.bf16.gmra.mxu0 %v885
      %v918 = vpop.f32.mrf.mxu0
      %v919 = vadd.f32 %v750, %v918
      %v920 = vpop.f32.mrf.mxu0
      %v921 = vadd.f32 %v752, %v920
      %922 = vmatmul.bf16.gmra.mxu0 %v887
      %v923 = vpop.f32.mrf.mxu0
      %v924 = vadd.f32 %v755, %v923
      %v925 = vpop.f32.mrf.mxu0
      %v926 = vadd.f32 %v757, %v925
      %927 = vmatmul.bf16.gmra.mxu0 %v889
      %v928 = vpop.f32.mrf.mxu0
      %v929 = vadd.f32 %v760, %v928
      %v930 = vpop.f32.mrf.mxu0
      %v931 = vadd.f32 %v762, %v930
      %932 = vmatmul.bf16.gmra.mxu0 %v891
      %v933 = vpop.f32.mrf.mxu0
      %v934 = vadd.f32 %v765, %v933
      %v935 = vpop.f32.mrf.mxu0
      %v936 = vadd.f32 %v767, %v935
      %937 = vmatmul.bf16.gmra.mxu0 %v893
      %v938 = vpop.f32.mrf.mxu0
      %v939 = vadd.f32 %v770, %v938
      %v940 = vpop.f32.mrf.mxu0
      %v941 = vadd.f32 %v772, %v940
      %942 = vmatmul.bf16.gmra.mxu0 %v895
      %v943 = vpop.f32.mrf.mxu0
      %v944 = vadd.f32 %v775, %v943
      %v945 = vpop.f32.mrf.mxu0
      %v946 = vadd.f32 %v777, %v945
      %947 = vmatmul.bf16.gmra.mxu0 %v897
      %v948 = vpop.f32.mrf.mxu0
      %v949 = vadd.f32 %v780, %v948
      %v950 = vpop.f32.mrf.mxu0
      %v951 = vadd.f32 %v782, %v950
      %952 = vmatmul.bf16.gmra.mxu0 %v899
      %v953 = vpop.f32.mrf.mxu0
      %v954 = vadd.f32 %v785, %v953
      %v955 = vpop.f32.mrf.mxu0
      %v956 = vadd.f32 %v787, %v955
      %957 = vdwg.mxu0
      %s958 = scalar_lea.vmem %s1, 16
      %v959 = vld [vmem:[%s958] sm:$0xf]
      %960 = vst [vmem:[#allocation1] ss:$9 sm:$0xff] %v349
      %s961 = scalar_lea.vmem [#allocation1], 1
      %962 = vst [vmem:[%s961] ss:$9 sm:$0xff] %v352
      %s963 = scalar_lea.vmem [#allocation1], 2
      %964 = vst [vmem:[%s963] ss:$9 sm:$0xff] %v355
      %s965 = scalar_lea.vmem [#allocation1], 3
      %966 = vst [vmem:[%s965] ss:$9 sm:$0xff] %v358
      %s967 = scalar_lea.vmem [#allocation1], 4
      %968 = vst [vmem:[%s967] ss:$9 sm:$0xff] %v361
      %s969 = scalar_lea.vmem [#allocation1], 5
      %970 = vst [vmem:[%s969] ss:$9 sm:$0xff] %v364
      %s971 = scalar_lea.vmem [#allocation1], 6
      %972 = vst [vmem:[%s971] ss:$9 sm:$0xff] %v367
      %s973 = scalar_lea.vmem [#allocation1], 7
      %974 = vst [vmem:[%s973] ss:$9 sm:$0xff] %v370
      %v975 = vld [vmem:[#allocation1] sm:$0xff]
      %976 = vst [vmem:[#allocation1] ss:$9 sm:$0xff] %v373
      %977 = vst [vmem:[%s961] ss:$9 sm:$0xff] %v376
      %978 = vst [vmem:[%s963] ss:$9 sm:$0xff] %v379
      %979 = vst [vmem:[%s965] ss:$9 sm:$0xff] %v382
      %980 = vst [vmem:[%s967] ss:$9 sm:$0xff] %v385
      %981 = vst [vmem:[%s969] ss:$9 sm:$0xff] %v388
      %982 = vst [vmem:[%s971] ss:$9 sm:$0xff] %v391
      %983 = vst [vmem:[%s973] ss:$9 sm:$0xff] %v394
      %v984 = vld [vmem:[#allocation1] sm:$0xff]
      %985 = vst [vmem:[#allocation1] ss:$9 sm:$0xff] %v397
      %986 = vst [vmem:[%s961] ss:$9 sm:$0xff] %v400
      %987 = vst [vmem:[%s963] ss:$9 sm:$0xff] %v403
      %988 = vst [vmem:[%s965] ss:$9 sm:$0xff] %v406
      %989 = vst [vmem:[%s967] ss:$9 sm:$0xff] %v409
      %990 = vst [vmem:[%s969] ss:$9 sm:$0xff] %v412
      %991 = vst [vmem:[%s971] ss:$9 sm:$0xff] %v415
      %992 = vst [vmem:[%s973] ss:$9 sm:$0xff] %v418
      %v993 = vld [vmem:[#allocation1] sm:$0xff]
      %994 = vst [vmem:[#allocation1] ss:$9 sm:$0xff] %v421
      %995 = vst [vmem:[%s961] ss:$9 sm:$0xff] %v424
      %996 = vst [vmem:[%s963] ss:$9 sm:$0xff] %v427
      %997 = vst [vmem:[%s965] ss:$9 sm:$0xff] %v430
      %998 = vst [vmem:[%s967] ss:$9 sm:$0xff] %v433
      %999 = vst [vmem:[%s969] ss:$9 sm:$0xff] %v436
      %1000 = vst [vmem:[%s971] ss:$9 sm:$0xff] %v439
      %1001 = vst [vmem:[%s973] ss:$9 sm:$0xff] %v442
      %v1002 = vld [vmem:[#allocation1] sm:$0xff]
      %1003 = vst [vmem:[#allocation1] ss:$9 sm:$0xff] %v445
      %1004 = vst [vmem:[%s961] ss:$9 sm:$0xff] %v448
      %1005 = vst [vmem:[%s963] ss:$9 sm:$0xff] %v451
      %1006 = vst [vmem:[%s965] ss:$9 sm:$0xff] %v454
      %1007 = vst [vmem:[%s967] ss:$9 sm:$0xff] %v457
      %1008 = vst [vmem:[%s969] ss:$9 sm:$0xff] %v460
      %1009 = vst [vmem:[%s971] ss:$9 sm:$0xff] %v463
      %1010 = vst [vmem:[%s973] ss:$9 sm:$0xff] %v466
      %v1011 = vld [vmem:[#allocation1] sm:$0xff]
      %1012 = vst [vmem:[#allocation1] ss:$9 sm:$0xff] %v469
      %1013 = vst [vmem:[%s961] ss:$9 sm:$0xff] %v472
      %1014 = vst [vmem:[%s963] ss:$9 sm:$0xff] %v475
      %1015 = vst [vmem:[%s965] ss:$9 sm:$0xff] %v478
      %1016 = vst [vmem:[%s967] ss:$9 sm:$0xff] %v481
      %1017 = vst [vmem:[%s969] ss:$9 sm:$0xff] %v484
      %1018 = vst [vmem:[%s971] ss:$9 sm:$0xff] %v487
      %1019 = vst [vmem:[%s973] ss:$9 sm:$0xff] %v490
      %v1020 = vld [vmem:[#allocation1] sm:$0xff]
      %1021 = vst [vmem:[#allocation1] ss:$9 sm:$0xff] %v493
      %1022 = vst [vmem:[%s961] ss:$9 sm:$0xff] %v496
      %1023 = vst [vmem:[%s963] ss:$9 sm:$0xff] %v499
      %1024 = vst [vmem:[%s965] ss:$9 sm:$0xff] %v502
      %1025 = vst [vmem:[%s967] ss:$9 sm:$0xff] %v505
      %1026 = vst [vmem:[%s969] ss:$9 sm:$0xff] %v508
      %1027 = vst [vmem:[%s971] ss:$9 sm:$0xff] %v511
      %1028 = vst [vmem:[%s973] ss:$9 sm:$0xff] %v514
      %v1029 = vld [vmem:[#allocation1] sm:$0xff]
      %1030 = vst [vmem:[#allocation1] ss:$9 sm:$0xff] %v517
      %1031 = vst [vmem:[%s961] ss:$9 sm:$0xff] %v520
      %1032 = vst [vmem:[%s963] ss:$9 sm:$0xff] %v523
      %1033 = vst [vmem:[%s965] ss:$9 sm:$0xff] %v526
      %1034 = vst [vmem:[%s967] ss:$9 sm:$0xff] %v529
      %1035 = vst [vmem:[%s969] ss:$9 sm:$0xff] %v532
      %1036 = vst [vmem:[%s971] ss:$9 sm:$0xff] %v535
      %1037 = vst [vmem:[%s973] ss:$9 sm:$0xff] %v549
      %v1038 = vld [vmem:[#allocation1] sm:$0xff]
      %1039 = vst [vmem:[#allocation1] ss:$9 sm:$0xff] %v552
      %1040 = vst [vmem:[%s961] ss:$9 sm:$0xff] %v555
      %1041 = vst [vmem:[%s963] ss:$9 sm:$0xff] %v558
      %1042 = vst [vmem:[%s965] ss:$9 sm:$0xff] %v561
      %1043 = vst [vmem:[%s967] ss:$9 sm:$0xff] %v564
      %1044 = vst [vmem:[%s969] ss:$9 sm:$0xff] %v567
      %1045 = vst [vmem:[%s971] ss:$9 sm:$0xff] %v570
      %1046 = vst [vmem:[%s973] ss:$9 sm:$0xff] %v573
      %v1047 = vld [vmem:[#allocation1] sm:$0xff]
      %v1048 = vsel %vm712, %v975, 0
      %v1050 = vsel %vm712, %v984, 0
      %v1052 = vsel %vm712, %v993, 0
      %v1054 = vsel %vm712, %v1002, 0
      %v1056 = vsel %vm712, %v1011, 0
      %v1058 = vsel %vm712, %v1020, 0
      %v1060 = vsel %vm712, %v1029, 0
      %v1062 = vsel %vm712, %v1038, 0
      %v1064 = vsel %vm712, %v1047, 0
      %v1067 = vsel %vm731, %v959, 0
      %1069 = vmatpush.bf16.msra.mxu0 0
      %1070 = vmatpush.bf16.msra.mxu0 0
      %1071 = vmatpush.bf16.msra.mxu0 0
      %1072 = vmatpush.bf16.msra.mxu0 0
      %1073 = vmatpush.bf16.msra.mxu0 0
      %1074 = vmatpush.bf16.msra.mxu0 0
      %1075 = vmatpush.bf16.msra.mxu0 0
      %1076 = vmatpush.bf16.msra.mxu0 %v1067
      %1077 = vmatmul.bf16.gmra.mxu0 %v1048
      %v1078 = vpop.f32.mrf.mxu0
      %v1079 = vadd.f32 0.0, %v1078
      %v1080 = vpop.f32.mrf.mxu0
      %v1081 = vadd.f32 0.0, %v1080
      %1082 = vmatmul.bf16.gmra.mxu0 %v1050
      %v1083 = vpop.f32.mrf.mxu0
      %v1084 = vadd.f32 0.0, %v1083
      %v1085 = vpop.f32.mrf.mxu0
      %v1086 = vadd.f32 0.0, %v1085
      %1087 = vmatmul.bf16.gmra.mxu0 %v1052
      %v1088 = vpop.f32.mrf.mxu0
      %v1089 = vadd.f32 0.0, %v1088
      %v1090 = vpop.f32.mrf.mxu0
      %v1091 = vadd.f32 0.0, %v1090
      %1092 = vmatmul.bf16.gmra.mxu0 %v1054
      %v1093 = vpop.f32.mrf.mxu0
      %v1094 = vadd.f32 0.0, %v1093
      %v1095 = vpop.f32.mrf.mxu0
      %v1096 = vadd.f32 0.0, %v1095
      %1097 = vmatmul.bf16.gmra.mxu0 %v1056
      %v1098 = vpop.f32.mrf.mxu0
      %v1099 = vadd.f32 0.0, %v1098
      %v1100 = vpop.f32.mrf.mxu0
      %v1101 = vadd.f32 0.0, %v1100
      %1102 = vmatmul.bf16.gmra.mxu0 %v1058
      %v1103 = vpop.f32.mrf.mxu0
      %v1104 = vadd.f32 0.0, %v1103
      %v1105 = vpop.f32.mrf.mxu0
      %v1106 = vadd.f32 0.0, %v1105
      %1107 = vmatmul.bf16.gmra.mxu0 %v1060
      %v1108 = vpop.f32.mrf.mxu0
      %v1109 = vadd.f32 0.0, %v1108
      %v1110 = vpop.f32.mrf.mxu0
      %v1111 = vadd.f32 0.0, %v1110
      %1112 = vmatmul.bf16.gmra.mxu0 %v1062
      %v1113 = vpop.f32.mrf.mxu0
      %v1114 = vadd.f32 0.0, %v1113
      %v1115 = vpop.f32.mrf.mxu0
      %v1116 = vadd.f32 0.0, %v1115
      %1117 = vmatmul.bf16.gmra.mxu0 %v1064
      %v1118 = vpop.f32.mrf.mxu0
      %v1119 = vadd.f32 0.0, %v1118
      %v1120 = vpop.f32.mrf.mxu0
      %v1121 = vadd.f32 0.0, %v1120
      %1122 = vdwg.mxu0
      %1123 = vst [vmem:[#allocation1] ss:$9 sm:$0xff] %v319
      %s1124 = scalar_lea.vmem [#allocation1], 1
      %1125 = vst [vmem:[%s1124] ss:$9 sm:$0xff] %v323
      %s1126 = scalar_lea.vmem [#allocation1], 2
      %1127 = vst [vmem:[%s1126] ss:$9 sm:$0xff] %v327
      %s1128 = scalar_lea.vmem [#allocation1], 3
      %1129 = vst [vmem:[%s1128] ss:$9 sm:$0xff] %v331
      %s1130 = scalar_lea.vmem [#allocation1], 4
      %1131 = vst [vmem:[%s1130] ss:$9 sm:$0xff] %v334
      %s1132 = scalar_lea.vmem [#allocation1], 5
      %1133 = vst [vmem:[%s1132] ss:$9 sm:$0xff] %v337
      %s1134 = scalar_lea.vmem [#allocation1], 6
      %1135 = vst [vmem:[%s1134] ss:$9 sm:$0xff] %v340
      %s1136 = scalar_lea.vmem [#allocation1], 7
      %1137 = vst [vmem:[%s1136] ss:$9 sm:$0xff] %v343
      %v1138 = vld [vmem:[#allocation1] sm:$0xff]
      %1139 = vst [vmem:[#allocation1] ss:$9 sm:$0xff] %v346
      %1140 = vst [vmem:[%s1124] ss:$9 sm:$0xff] %v349
      %1141 = vst [vmem:[%s1126] ss:$9 sm:$0xff] %v352
      %1142 = vst [vmem:[%s1128] ss:$9 sm:$0xff] %v355
      %1143 = vst [vmem:[%s1130] ss:$9 sm:$0xff] %v358
      %1144 = vst [vmem:[%s1132] ss:$9 sm:$0xff] %v361
      %1145 = vst [vmem:[%s1134] ss:$9 sm:$0xff] %v364
      %1146 = vst [vmem:[%s1136] ss:$9 sm:$0xff] %v367
      %v1147 = vld [vmem:[#allocation1] sm:$0xff]
      %1148 = vst [vmem:[#allocation1] ss:$9 sm:$0xff] %v370
      %1149 = vst [vmem:[%s1124] ss:$9 sm:$0xff] %v373
      %1150 = vst [vmem:[%s1126] ss:$9 sm:$0xff] %v376
      %1151 = vst [vmem:[%s1128] ss:$9 sm:$0xff] %v379
      %1152 = vst [vmem:[%s1130] ss:$9 sm:$0xff] %v382
      %1153 = vst [vmem:[%s1132] ss:$9 sm:$0xff] %v385
      %1154 = vst [vmem:[%s1134] ss:$9 sm:$0xff] %v388
      %1155 = vst [vmem:[%s1136] ss:$9 sm:$0xff] %v391
      %v1156 = vld [vmem:[#allocation1] sm:$0xff]
      %1157 = vst [vmem:[#allocation1] ss:$9 sm:$0xff] %v394
      %1158 = vst [vmem:[%s1124] ss:$9 sm:$0xff] %v397
      %1159 = vst [vmem:[%s1126] ss:$9 sm:$0xff] %v400
      %1160 = vst [vmem:[%s1128] ss:$9 sm:$0xff] %v403
      %1161 = vst [vmem:[%s1130] ss:$9 sm:$0xff] %v406
      %1162 = vst [vmem:[%s1132] ss:$9 sm:$0xff] %v409
      %1163 = vst [vmem:[%s1134] ss:$9 sm:$0xff] %v412
      %1164 = vst [vmem:[%s1136] ss:$9 sm:$0xff] %v415
      %v1165 = vld [vmem:[#allocation1] sm:$0xff]
      %1166 = vst [vmem:[#allocation1] ss:$9 sm:$0xff] %v418
      %1167 = vst [vmem:[%s1124] ss:$9 sm:$0xff] %v421
      %1168 = vst [vmem:[%s1126] ss:$9 sm:$0xff] %v424
      %1169 = vst [vmem:[%s1128] ss:$9 sm:$0xff] %v427
      %1170 = vst [vmem:[%s1130] ss:$9 sm:$0xff] %v430
      %1171 = vst [vmem:[%s1132] ss:$9 sm:$0xff] %v433
      %1172 = vst [vmem:[%s1134] ss:$9 sm:$0xff] %v436
      %1173 = vst [vmem:[%s1136] ss:$9 sm:$0xff] %v439
      %v1174 = vld [vmem:[#allocation1] sm:$0xff]
      %1175 = vst [vmem:[#allocation1] ss:$9 sm:$0xff] %v442
      %1176 = vst [vmem:[%s1124] ss:$9 sm:$0xff] %v445
      %1177 = vst [vmem:[%s1126] ss:$9 sm:$0xff] %v448
      %1178 = vst [vmem:[%s1128] ss:$9 sm:$0xff] %v451
      %1179 = vst [vmem:[%s1130] ss:$9 sm:$0xff] %v454
      %1180 = vst [vmem:[%s1132] ss:$9 sm:$0xff] %v457
      %1181 = vst [vmem:[%s1134] ss:$9 sm:$0xff] %v460
      %1182 = vst [vmem:[%s1136] ss:$9 sm:$0xff] %v463
      %v1183 = vld [vmem:[#allocation1] sm:$0xff]
      %1184 = vst [vmem:[#allocation1] ss:$9 sm:$0xff] %v466
      %1185 = vst [vmem:[%s1124] ss:$9 sm:$0xff] %v469
      %1186 = vst [vmem:[%s1126] ss:$9 sm:$0xff] %v472
      %1187 = vst [vmem:[%s1128] ss:$9 sm:$0xff] %v475
      %1188 = vst [vmem:[%s1130] ss:$9 sm:$0xff] %v478
      %1189 = vst [vmem:[%s1132] ss:$9 sm:$0xff] %v481
      %1190 = vst [vmem:[%s1134] ss:$9 sm:$0xff] %v484
      %1191 = vst [vmem:[%s1136] ss:$9 sm:$0xff] %v487
      %v1192 = vld [vmem:[#allocation1] sm:$0xff]
      %1193 = vst [vmem:[#allocation1] ss:$9 sm:$0xff] %v490
      %1194 = vst [vmem:[%s1124] ss:$9 sm:$0xff] %v493
      %1195 = vst [vmem:[%s1126] ss:$9 sm:$0xff] %v496
      %1196 = vst [vmem:[%s1128] ss:$9 sm:$0xff] %v499
      %1197 = vst [vmem:[%s1130] ss:$9 sm:$0xff] %v502
      %1198 = vst [vmem:[%s1132] ss:$9 sm:$0xff] %v505
      %1199 = vst [vmem:[%s1134] ss:$9 sm:$0xff] %v508
      %1200 = vst [vmem:[%s1136] ss:$9 sm:$0xff] %v511
      %v1201 = vld [vmem:[#allocation1] sm:$0xff]
      %1202 = vst [vmem:[#allocation1] ss:$9 sm:$0xff] %v514
      %1203 = vst [vmem:[%s1124] ss:$9 sm:$0xff] %v517
      %1204 = vst [vmem:[%s1126] ss:$9 sm:$0xff] %v520
      %1205 = vst [vmem:[%s1128] ss:$9 sm:$0xff] %v523
      %1206 = vst [vmem:[%s1130] ss:$9 sm:$0xff] %v526
      %1207 = vst [vmem:[%s1132] ss:$9 sm:$0xff] %v529
      %1208 = vst [vmem:[%s1134] ss:$9 sm:$0xff] %v532
      %1209 = vst [vmem:[%s1136] ss:$9 sm:$0xff] %v535
      %v1210 = vld [vmem:[#allocation1] sm:$0xff]
      %v1211 = vsel %vm712, %v1138, 0
      %v1213 = vsel %vm712, %v1147, 0
      %v1215 = vsel %vm712, %v1156, 0
      %v1217 = vsel %vm712, %v1165, 0
      %v1219 = vsel %vm712, %v1174, 0
      %v1221 = vsel %vm712, %v1183, 0
      %v1223 = vsel %vm712, %v1192, 0
      %v1225 = vsel %vm712, %v1201, 0
      %v1227 = vsel %vm712, %v1210, 0
      %v1230 = vsel %vm731, %v538, 0
      %1232 = vmatpush.bf16.msra.mxu0 0
      %1233 = vmatpush.bf16.msra.mxu0 0
      %1234 = vmatpush.bf16.msra.mxu0 0
      %1235 = vmatpush.bf16.msra.mxu0 0
      %1236 = vmatpush.bf16.msra.mxu0 0
      %1237 = vmatpush.bf16.msra.mxu0 0
      %1238 = vmatpush.bf16.msra.mxu0 0
      %1239 = vmatpush.bf16.msra.mxu0 %v1230
      %1240 = vmatmul.bf16.gmra.mxu0 %v1211
      %v1241 = vpop.f32.mrf.mxu0
      %v1242 = vadd.f32 %v1079, %v1241
      %v1243 = vpop.f32.mrf.mxu0
      %v1244 = vadd.f32 %v1081, %v1243
      %1245 = vmatmul.bf16.gmra.mxu0 %v1213
      %v1246 = vpop.f32.mrf.mxu0
      %v1247 = vadd.f32 %v1084, %v1246
      %v1248 = vpop.f32.mrf.mxu0
      %v1249 = vadd.f32 %v1086, %v1248
      %1250 = vmatmul.bf16.gmra.mxu0 %v1215
      %v1251 = vpop.f32.mrf.mxu0
      %v1252 = vadd.f32 %v1089, %v1251
      %v1253 = vpop.f32.mrf.mxu0
      %v1254 = vadd.f32 %v1091, %v1253
      %1255 = vmatmul.bf16.gmra.mxu0 %v1217
      %v1256 = vpop.f32.mrf.mxu0
      %v1257 = vadd.f32 %v1094, %v1256
      %v1258 = vpop.f32.mrf.mxu0
      %v1259 = vadd.f32 %v1096, %v1258
      %1260 = vmatmul.bf16.gmra.mxu0 %v1219
      %v1261 = vpop.f32.mrf.mxu0
      %v1262 = vadd.f32 %v1099, %v1261
      %v1263 = vpop.f32.mrf.mxu0
      %v1264 = vadd.f32 %v1101, %v1263
      %1265 = vmatmul.bf16.gmra.mxu0 %v1221
      %v1266 = vpop.f32.mrf.mxu0
      %v1267 = vadd.f32 %v1104, %v1266
      %v1268 = vpop.f32.mrf.mxu0
      %v1269 = vadd.f32 %v1106, %v1268
      %1270 = vmatmul.bf16.gmra.mxu0 %v1223
      %v1271 = vpop.f32.mrf.mxu0
      %v1272 = vadd.f32 %v1109, %v1271
      %v1273 = vpop.f32.mrf.mxu0
      %v1274 = vadd.f32 %v1111, %v1273
      %1275 = vmatmul.bf16.gmra.mxu0 %v1225
      %v1276 = vpop.f32.mrf.mxu0
      %v1277 = vadd.f32 %v1114, %v1276
      %v1278 = vpop.f32.mrf.mxu0
      %v1279 = vadd.f32 %v1116, %v1278
      %1280 = vmatmul.bf16.gmra.mxu0 %v1227
      %v1281 = vpop.f32.mrf.mxu0
      %v1282 = vadd.f32 %v1119, %v1281
      %v1283 = vpop.f32.mrf.mxu0
      %v1284 = vadd.f32 %v1121, %v1283
      %1285 = vdwg.mxu0
      %s1286 = scalar_lea.vmem %s1, 20
      %v1287 = vld [vmem:[%s1286] sm:$0xf]
      %1288 = vst [vmem:[#allocation1] ss:$9 sm:$0xff] %v349
      %s1289 = scalar_lea.vmem [#allocation1], 1
      %1290 = vst [vmem:[%s1289] ss:$9 sm:$0xff] %v352
      %s1291 = scalar_lea.vmem [#allocation1], 2
      %1292 = vst [vmem:[%s1291] ss:$9 sm:$0xff] %v355
      %s1293 = scalar_lea.vmem [#allocation1], 3
      %1294 = vst [vmem:[%s1293] ss:$9 sm:$0xff] %v358
      %s1295 = scalar_lea.vmem [#allocation1], 4
      %1296 = vst [vmem:[%s1295] ss:$9 sm:$0xff] %v361
      %s1297 = scalar_lea.vmem [#allocation1], 5
      %1298 = vst [vmem:[%s1297] ss:$9 sm:$0xff] %v364
      %s1299 = scalar_lea.vmem [#allocation1], 6
      %1300 = vst [vmem:[%s1299] ss:$9 sm:$0xff] %v367
      %s1301 = scalar_lea.vmem [#allocation1], 7
      %1302 = vst [vmem:[%s1301] ss:$9 sm:$0xff] %v370
      %v1303 = vld [vmem:[#allocation1] sm:$0xff]
      %1304 = vst [vmem:[#allocation1] ss:$9 sm:$0xff] %v373
      %1305 = vst [vmem:[%s1289] ss:$9 sm:$0xff] %v376
      %1306 = vst [vmem:[%s1291] ss:$9 sm:$0xff] %v379
      %1307 = vst [vmem:[%s1293] ss:$9 sm:$0xff] %v382
      %1308 = vst [vmem:[%s1295] ss:$9 sm:$0xff] %v385
      %1309 = vst [vmem:[%s1297] ss:$9 sm:$0xff] %v388
      %1310 = vst [vmem:[%s1299] ss:$9 sm:$0xff] %v391
      %1311 = vst [vmem:[%s1301] ss:$9 sm:$0xff] %v394
      %v1312 = vld [vmem:[#allocation1] sm:$0xff]
      %1313 = vst [vmem:[#allocation1] ss:$9 sm:$0xff] %v397
      %1314 = vst [vmem:[%s1289] ss:$9 sm:$0xff] %v400
      %1315 = vst [vmem:[%s1291] ss:$9 sm:$0xff] %v403
      %1316 = vst [vmem:[%s1293] ss:$9 sm:$0xff] %v406
      %1317 = vst [vmem:[%s1295] ss:$9 sm:$0xff] %v409
      %1318 = vst [vmem:[%s1297] ss:$9 sm:$0xff] %v412
      %1319 = vst [vmem:[%s1299] ss:$9 sm:$0xff] %v415
      %1320 = vst [vmem:[%s1301] ss:$9 sm:$0xff] %v418
      %v1321 = vld [vmem:[#allocation1] sm:$0xff]
      %1322 = vst [vmem:[#allocation1] ss:$9 sm:$0xff] %v421
      %1323 = vst [vmem:[%s1289] ss:$9 sm:$0xff] %v424
      %1324 = vst [vmem:[%s1291] ss:$9 sm:$0xff] %v427
      %1325 = vst [vmem:[%s1293] ss:$9 sm:$0xff] %v430
      %1326 = vst [vmem:[%s1295] ss:$9 sm:$0xff] %v433
      %1327 = vst [vmem:[%s1297] ss:$9 sm:$0xff] %v436
      %1328 = vst [vmem:[%s1299] ss:$9 sm:$0xff] %v439
      %1329 = vst [vmem:[%s1301] ss:$9 sm:$0xff] %v442
      %v1330 = vld [vmem:[#allocation1] sm:$0xff]
      %1331 = vst [vmem:[#allocation1] ss:$9 sm:$0xff] %v445
      %1332 = vst [vmem:[%s1289] ss:$9 sm:$0xff] %v448
      %1333 = vst [vmem:[%s1291] ss:$9 sm:$0xff] %v451
      %1334 = vst [vmem:[%s1293] ss:$9 sm:$0xff] %v454
      %1335 = vst [vmem:[%s1295] ss:$9 sm:$0xff] %v457
      %1336 = vst [vmem:[%s1297] ss:$9 sm:$0xff] %v460
      %1337 = vst [vmem:[%s1299] ss:$9 sm:$0xff] %v463
      %1338 = vst [vmem:[%s1301] ss:$9 sm:$0xff] %v466
      %v1339 = vld [vmem:[#allocation1] sm:$0xff]
      %1340 = vst [vmem:[#allocation1] ss:$9 sm:$0xff] %v469
      %1341 = vst [vmem:[%s1289] ss:$9 sm:$0xff] %v472
      %1342 = vst [vmem:[%s1291] ss:$9 sm:$0xff] %v475
      %1343 = vst [vmem:[%s1293] ss:$9 sm:$0xff] %v478
      %1344 = vst [vmem:[%s1295] ss:$9 sm:$0xff] %v481
      %1345 = vst [vmem:[%s1297] ss:$9 sm:$0xff] %v484
      %1346 = vst [vmem:[%s1299] ss:$9 sm:$0xff] %v487
      %1347 = vst [vmem:[%s1301] ss:$9 sm:$0xff] %v490
      %v1348 = vld [vmem:[#allocation1] sm:$0xff]
      %1349 = vst [vmem:[#allocation1] ss:$9 sm:$0xff] %v493
      %1350 = vst [vmem:[%s1289] ss:$9 sm:$0xff] %v496
      %1351 = vst [vmem:[%s1291] ss:$9 sm:$0xff] %v499
      %1352 = vst [vmem:[%s1293] ss:$9 sm:$0xff] %v502
      %1353 = vst [vmem:[%s1295] ss:$9 sm:$0xff] %v505
      %1354 = vst [vmem:[%s1297] ss:$9 sm:$0xff] %v508
      %1355 = vst [vmem:[%s1299] ss:$9 sm:$0xff] %v511
      %1356 = vst [vmem:[%s1301] ss:$9 sm:$0xff] %v514
      %v1357 = vld [vmem:[#allocation1] sm:$0xff]
      %1358 = vst [vmem:[#allocation1] ss:$9 sm:$0xff] %v517
      %1359 = vst [vmem:[%s1289] ss:$9 sm:$0xff] %v520
      %1360 = vst [vmem:[%s1291] ss:$9 sm:$0xff] %v523
      %1361 = vst [vmem:[%s1293] ss:$9 sm:$0xff] %v526
      %1362 = vst [vmem:[%s1295] ss:$9 sm:$0xff] %v529
      %1363 = vst [vmem:[%s1297] ss:$9 sm:$0xff] %v532
      %1364 = vst [vmem:[%s1299] ss:$9 sm:$0xff] %v535
      %1365 = vst [vmem:[%s1301] ss:$9 sm:$0xff] %v549
      %v1366 = vld [vmem:[#allocation1] sm:$0xff]
      %1367 = vst [vmem:[#allocation1] ss:$9 sm:$0xff] %v552
      %1368 = vst [vmem:[%s1289] ss:$9 sm:$0xff] %v555
      %1369 = vst [vmem:[%s1291] ss:$9 sm:$0xff] %v558
      %1370 = vst [vmem:[%s1293] ss:$9 sm:$0xff] %v561
      %1371 = vst [vmem:[%s1295] ss:$9 sm:$0xff] %v564
      %1372 = vst [vmem:[%s1297] ss:$9 sm:$0xff] %v567
      %1373 = vst [vmem:[%s1299] ss:$9 sm:$0xff] %v570
      %1374 = vst [vmem:[%s1301] ss:$9 sm:$0xff] %v573
      %v1375 = vld [vmem:[#allocation1] sm:$0xff]
      %v1376 = vsel %vm712, %v1303, 0
      %v1378 = vsel %vm712, %v1312, 0
      %v1380 = vsel %vm712, %v1321, 0
      %v1382 = vsel %vm712, %v1330, 0
      %v1384 = vsel %vm712, %v1339, 0
      %v1386 = vsel %vm712, %v1348, 0
      %v1388 = vsel %vm712, %v1357, 0
      %v1390 = vsel %vm712, %v1366, 0
      %v1392 = vsel %vm712, %v1375, 0
      %v1395 = vsel %vm731, %v1287, 0
      %1397 = vmatpush.bf16.msra.mxu0 0
      %1398 = vmatpush.bf16.msra.mxu0 0
      %1399 = vmatpush.bf16.msra.mxu0 0
      %1400 = vmatpush.bf16.msra.mxu0 0
      %1401 = vmatpush.bf16.msra.mxu0 0
      %1402 = vmatpush.bf16.msra.mxu0 0
      %1403 = vmatpush.bf16.msra.mxu0 0
      %1404 = vmatpush.bf16.msra.mxu0 %v1395
      %1405 = vmatmul.bf16.gmra.mxu0 %v1376
      %v1406 = vpop.f32.mrf.mxu0
      %v1407 = vadd.f32 0.0, %v1406
      %v1408 = vpop.f32.mrf.mxu0
      %v1409 = vadd.f32 0.0, %v1408
      %1410 = vmatmul.bf16.gmra.mxu0 %v1378
      %v1411 = vpop.f32.mrf.mxu0
      %v1412 = vadd.f32 0.0, %v1411
      %v1413 = vpop.f32.mrf.mxu0
      %v1414 = vadd.f32 0.0, %v1413
      %1415 = vmatmul.bf16.gmra.mxu0 %v1380
      %v1416 = vpop.f32.mrf.mxu0
      %v1417 = vadd.f32 0.0, %v1416
      %v1418 = vpop.f32.mrf.mxu0
      %v1419 = vadd.f32 0.0, %v1418
      %1420 = vmatmul.bf16.gmra.mxu0 %v1382
      %v1421 = vpop.f32.mrf.mxu0
      %v1422 = vadd.f32 0.0, %v1421
      %v1423 = vpop.f32.mrf.mxu0
      %v1424 = vadd.f32 0.0, %v1423
      %1425 = vmatmul.bf16.gmra.mxu0 %v1384
      %v1426 = vpop.f32.mrf.mxu0
      %v1427 = vadd.f32 0.0, %v1426
      %v1428 = vpop.f32.mrf.mxu0
      %v1429 = vadd.f32 0.0, %v1428
      %1430 = vmatmul.bf16.gmra.mxu0 %v1386
      %v1431 = vpop.f32.mrf.mxu0
      %v1432 = vadd.f32 0.0, %v1431
      %v1433 = vpop.f32.mrf.mxu0
      %v1434 = vadd.f32 0.0, %v1433
      %1435 = vmatmul.bf16.gmra.mxu0 %v1388
      %v1436 = vpop.f32.mrf.mxu0
      %v1437 = vadd.f32 0.0, %v1436
      %v1438 = vpop.f32.mrf.mxu0
      %v1439 = vadd.f32 0.0, %v1438
      %1440 = vmatmul.bf16.gmra.mxu0 %v1390
      %v1441 = vpop.f32.mrf.mxu0
      %v1442 = vadd.f32 0.0, %v1441
      %v1443 = vpop.f32.mrf.mxu0
      %v1444 = vadd.f32 0.0, %v1443
      %1445 = vmatmul.bf16.gmra.mxu0 %v1392
      %v1446 = vpop.f32.mrf.mxu0
      %v1447 = vadd.f32 0.0, %v1446
      %v1448 = vpop.f32.mrf.mxu0
      %v1449 = vadd.f32 0.0, %v1448
      %1450 = vdwg.mxu0
      %1451 = vst [vmem:[#allocation1] ss:$9 sm:$0xff] %v319
      %s1452 = scalar_lea.vmem [#allocation1], 1
      %1453 = vst [vmem:[%s1452] ss:$9 sm:$0xff] %v323
      %s1454 = scalar_lea.vmem [#allocation1], 2
      %1455 = vst [vmem:[%s1454] ss:$9 sm:$0xff] %v327
      %s1456 = scalar_lea.vmem [#allocation1], 3
      %1457 = vst [vmem:[%s1456] ss:$9 sm:$0xff] %v331
      %s1458 = scalar_lea.vmem [#allocation1], 4
      %1459 = vst [vmem:[%s1458] ss:$9 sm:$0xff] %v334
      %s1460 = scalar_lea.vmem [#allocation1], 5
      %1461 = vst [vmem:[%s1460] ss:$9 sm:$0xff] %v337
      %s1462 = scalar_lea.vmem [#allocation1], 6
      %1463 = vst [vmem:[%s1462] ss:$9 sm:$0xff] %v340
      %s1464 = scalar_lea.vmem [#allocation1], 7
      %1465 = vst [vmem:[%s1464] ss:$9 sm:$0xff] %v343
      %v1466 = vld [vmem:[#allocation1] sm:$0xff]
      %1467 = vst [vmem:[#allocation1] ss:$9 sm:$0xff] %v346
      %1468 = vst [vmem:[%s1452] ss:$9 sm:$0xff] %v349
      %1469 = vst [vmem:[%s1454] ss:$9 sm:$0xff] %v352
      %1470 = vst [vmem:[%s1456] ss:$9 sm:$0xff] %v355
      %1471 = vst [vmem:[%s1458] ss:$9 sm:$0xff] %v358
      %1472 = vst [vmem:[%s1460] ss:$9 sm:$0xff] %v361
      %1473 = vst [vmem:[%s1462] ss:$9 sm:$0xff] %v364
      %1474 = vst [vmem:[%s1464] ss:$9 sm:$0xff] %v367
      %v1475 = vld [vmem:[#allocation1] sm:$0xff]
      %1476 = vst [vmem:[#allocation1] ss:$9 sm:$0xff] %v370
      %1477 = vst [vmem:[%s1452] ss:$9 sm:$0xff] %v373
      %1478 = vst [vmem:[%s1454] ss:$9 sm:$0xff] %v376
      %1479 = vst [vmem:[%s1456] ss:$9 sm:$0xff] %v379
      %1480 = vst [vmem:[%s1458] ss:$9 sm:$0xff] %v382
      %1481 = vst [vmem:[%s1460] ss:$9 sm:$0xff] %v385
      %1482 = vst [vmem:[%s1462] ss:$9 sm:$0xff] %v388
      %1483 = vst [vmem:[%s1464] ss:$9 sm:$0xff] %v391
      %v1484 = vld [vmem:[#allocation1] sm:$0xff]
      %1485 = vst [vmem:[#allocation1] ss:$9 sm:$0xff] %v394
      %1486 = vst [vmem:[%s1452] ss:$9 sm:$0xff] %v397
      %1487 = vst [vmem:[%s1454] ss:$9 sm:$0xff] %v400
      %1488 = vst [vmem:[%s1456] ss:$9 sm:$0xff] %v403
      %1489 = vst [vmem:[%s1458] ss:$9 sm:$0xff] %v406
      %1490 = vst [vmem:[%s1460] ss:$9 sm:$0xff] %v409
      %1491 = vst [vmem:[%s1462] ss:$9 sm:$0xff] %v412
      %1492 = vst [vmem:[%s1464] ss:$9 sm:$0xff] %v415
      %v1493 = vld [vmem:[#allocation1] sm:$0xff]
      %1494 = vst [vmem:[#allocation1] ss:$9 sm:$0xff] %v418
      %1495 = vst [vmem:[%s1452] ss:$9 sm:$0xff] %v421
      %1496 = vst [vmem:[%s1454] ss:$9 sm:$0xff] %v424
      %1497 = vst [vmem:[%s1456] ss:$9 sm:$0xff] %v427
      %1498 = vst [vmem:[%s1458] ss:$9 sm:$0xff] %v430
      %1499 = vst [vmem:[%s1460] ss:$9 sm:$0xff] %v433
      %1500 = vst [vmem:[%s1462] ss:$9 sm:$0xff] %v436
      %1501 = vst [vmem:[%s1464] ss:$9 sm:$0xff] %v439
      %v1502 = vld [vmem:[#allocation1] sm:$0xff]
      %1503 = vst [vmem:[#allocation1] ss:$9 sm:$0xff] %v442
      %1504 = vst [vmem:[%s1452] ss:$9 sm:$0xff] %v445
      %1505 = vst [vmem:[%s1454] ss:$9 sm:$0xff] %v448
      %1506 = vst [vmem:[%s1456] ss:$9 sm:$0xff] %v451
      %1507 = vst [vmem:[%s1458] ss:$9 sm:$0xff] %v454
      %1508 = vst [vmem:[%s1460] ss:$9 sm:$0xff] %v457
      %1509 = vst [vmem:[%s1462] ss:$9 sm:$0xff] %v460
      %1510 = vst [vmem:[%s1464] ss:$9 sm:$0xff] %v463
      %v1511 = vld [vmem:[#allocation1] sm:$0xff]
      %1512 = vst [vmem:[#allocation1] ss:$9 sm:$0xff] %v466
      %1513 = vst [vmem:[%s1452] ss:$9 sm:$0xff] %v469
      %1514 = vst [vmem:[%s1454] ss:$9 sm:$0xff] %v472
      %1515 = vst [vmem:[%s1456] ss:$9 sm:$0xff] %v475
      %1516 = vst [vmem:[%s1458] ss:$9 sm:$0xff] %v478
      %1517 = vst [vmem:[%s1460] ss:$9 sm:$0xff] %v481
      %1518 = vst [vmem:[%s1462] ss:$9 sm:$0xff] %v484
      %1519 = vst [vmem:[%s1464] ss:$9 sm:$0xff] %v487
      %v1520 = vld [vmem:[#allocation1] sm:$0xff]
      %1521 = vst [vmem:[#allocation1] ss:$9 sm:$0xff] %v490
      %1522 = vst [vmem:[%s1452] ss:$9 sm:$0xff] %v493
      %1523 = vst [vmem:[%s1454] ss:$9 sm:$0xff] %v496
      %1524 = vst [vmem:[%s1456] ss:$9 sm:$0xff] %v499
      %1525 = vst [vmem:[%s1458] ss:$9 sm:$0xff] %v502
      %1526 = vst [vmem:[%s1460] ss:$9 sm:$0xff] %v505
      %1527 = vst [vmem:[%s1462] ss:$9 sm:$0xff] %v508
      %1528 = vst [vmem:[%s1464] ss:$9 sm:$0xff] %v511
      %v1529 = vld [vmem:[#allocation1] sm:$0xff]
      %1530 = vst [vmem:[#allocation1] ss:$9 sm:$0xff] %v514
      %1531 = vst [vmem:[%s1452] ss:$9 sm:$0xff] %v517
      %1532 = vst [vmem:[%s1454] ss:$9 sm:$0xff] %v520
      %1533 = vst [vmem:[%s1456] ss:$9 sm:$0xff] %v523
      %1534 = vst [vmem:[%s1458] ss:$9 sm:$0xff] %v526
      %1535 = vst [vmem:[%s1460] ss:$9 sm:$0xff] %v529
      %1536 = vst [vmem:[%s1462] ss:$9 sm:$0xff] %v532
      %1537 = vst [vmem:[%s1464] ss:$9 sm:$0xff] %v535
      %v1538 = vld [vmem:[#allocation1] sm:$0xff]
      %v1539 = vsel %vm712, %v1466, 0
      %v1541 = vsel %vm712, %v1475, 0
      %v1543 = vsel %vm712, %v1484, 0
      %v1545 = vsel %vm712, %v1493, 0
      %v1547 = vsel %vm712, %v1502, 0
      %v1549 = vsel %vm712, %v1511, 0
      %v1551 = vsel %vm712, %v1520, 0
      %v1553 = vsel %vm712, %v1529, 0
      %v1555 = vsel %vm712, %v1538, 0
      %v1558 = vsel %vm731, %v540, 0
      %1560 = vmatpush.bf16.msra.mxu0 0
      %1561 = vmatpush.bf16.msra.mxu0 0
      %1562 = vmatpush.bf16.msra.mxu0 0
      %1563 = vmatpush.bf16.msra.mxu0 0
      %1564 = vmatpush.bf16.msra.mxu0 0
      %1565 = vmatpush.bf16.msra.mxu0 0
      %1566 = vmatpush.bf16.msra.mxu0 0
      %1567 = vmatpush.bf16.msra.mxu0 %v1558
      %1568 = vmatmul.bf16.gmra.mxu0 %v1539
      %v1569 = vpop.f32.mrf.mxu0
      %v1570 = vadd.f32 %v1407, %v1569
      %v1571 = vpop.f32.mrf.mxu0
      %v1572 = vadd.f32 %v1409, %v1571
      %1573 = vmatmul.bf16.gmra.mxu0 %v1541
      %v1574 = vpop.f32.mrf.mxu0
      %v1575 = vadd.f32 %v1412, %v1574
      %v1576 = vpop.f32.mrf.mxu0
      %v1577 = vadd.f32 %v1414, %v1576
      %1578 = vmatmul.bf16.gmra.mxu0 %v1543
      %v1579 = vpop.f32.mrf.mxu0
      %v1580 = vadd.f32 %v1417, %v1579
      %v1581 = vpop.f32.mrf.mxu0
      %v1582 = vadd.f32 %v1419, %v1581
      %1583 = vmatmul.bf16.gmra.mxu0 %v1545
      %v1584 = vpop.f32.mrf.mxu0
      %v1585 = vadd.f32 %v1422, %v1584
      %v1586 = vpop.f32.mrf.mxu0
      %v1587 = vadd.f32 %v1424, %v1586
      %1588 = vmatmul.bf16.gmra.mxu0 %v1547
      %v1589 = vpop.f32.mrf.mxu0
      %v1590 = vadd.f32 %v1427, %v1589
      %v1591 = vpop.f32.mrf.mxu0
      %v1592 = vadd.f32 %v1429, %v1591
      %1593 = vmatmul.bf16.gmra.mxu0 %v1549
      %v1594 = vpop.f32.mrf.mxu0
      %v1595 = vadd.f32 %v1432, %v1594
      %v1596 = vpop.f32.mrf.mxu0
      %v1597 = vadd.f32 %v1434, %v1596
      %1598 = vmatmul.bf16.gmra.mxu0 %v1551
      %v1599 = vpop.f32.mrf.mxu0
      %v1600 = vadd.f32 %v1437, %v1599
      %v1601 = vpop.f32.mrf.mxu0
      %v1602 = vadd.f32 %v1439, %v1601
      %1603 = vmatmul.bf16.gmra.mxu0 %v1553
      %v1604 = vpop.f32.mrf.mxu0
      %v1605 = vadd.f32 %v1442, %v1604
      %v1606 = vpop.f32.mrf.mxu0
      %v1607 = vadd.f32 %v1444, %v1606
      %1608 = vmatmul.bf16.gmra.mxu0 %v1555
      %v1609 = vpop.f32.mrf.mxu0
      %v1610 = vadd.f32 %v1447, %v1609
      %v1611 = vpop.f32.mrf.mxu0
      %v1612 = vadd.f32 %v1449, %v1611
      %1613 = vdwg.mxu0
      %v1617 = vrot.slane %v265, 3
      %v1618 = vrot.slane %v266, 3
      %v1619 = vrot.slane %v267, 3
      %v1622 = vsel %vm316, %v265, %v1617
      %v1623 = vsel %vm320, %v265, %v1617
      %v1625 = vrot.slane %v1623, 1
      %v1626 = vsel %vm324, %v265, %v1617
      %v1628 = vrot.slane %v1626, 2
      %v1629 = vsel %vm328, %v265, %v1617
      %v1631 = vrot.slane %v1629, 3
      %v1634 = vsel %vm316, %v266, %v1618
      %v1635 = vsel %vm320, %v266, %v1618
      %v1637 = vrot.slane %v1635, 1
      %v1638 = vsel %vm324, %v266, %v1618
      %v1640 = vrot.slane %v1638, 2
      %v1641 = vsel %vm328, %v266, %v1618
      %v1643 = vrot.slane %v1641, 3
      %v1646 = vsel %vm316, %v267, %v1619
      %s1647 = scalar_lea.vmem %s1, 24
      %v1648 = vld [vmem:[%s1647] sm:$0xf]
      %1649 = vst [vmem:[#allocation1] ss:$9 sm:$0xff] %v376
      %s1650 = scalar_lea.vmem [#allocation1], 1
      %1651 = vst [vmem:[%s1650] ss:$9 sm:$0xff] %v379
      %s1652 = scalar_lea.vmem [#allocation1], 2
      %1653 = vst [vmem:[%s1652] ss:$9 sm:$0xff] %v382
      %s1654 = scalar_lea.vmem [#allocation1], 3
      %1655 = vst [vmem:[%s1654] ss:$9 sm:$0xff] %v385
      %s1656 = scalar_lea.vmem [#allocation1], 4
      %1657 = vst [vmem:[%s1656] ss:$9 sm:$0xff] %v388
      %s1658 = scalar_lea.vmem [#allocation1], 5
      %1659 = vst [vmem:[%s1658] ss:$9 sm:$0xff] %v391
      %s1660 = scalar_lea.vmem [#allocation1], 6
      %1661 = vst [vmem:[%s1660] ss:$9 sm:$0xff] %v394
      %s1662 = scalar_lea.vmem [#allocation1], 7
      %1663 = vst [vmem:[%s1662] ss:$9 sm:$0xff] %v397
      %v1664 = vld [vmem:[#allocation1] sm:$0xff]
      %1665 = vst [vmem:[#allocation1] ss:$9 sm:$0xff] %v400
      %1666 = vst [vmem:[%s1650] ss:$9 sm:$0xff] %v403
      %1667 = vst [vmem:[%s1652] ss:$9 sm:$0xff] %v406
      %1668 = vst [vmem:[%s1654] ss:$9 sm:$0xff] %v409
      %1669 = vst [vmem:[%s1656] ss:$9 sm:$0xff] %v412
      %1670 = vst [vmem:[%s1658] ss:$9 sm:$0xff] %v415
      %1671 = vst [vmem:[%s1660] ss:$9 sm:$0xff] %v418
      %1672 = vst [vmem:[%s1662] ss:$9 sm:$0xff] %v421
      %v1673 = vld [vmem:[#allocation1] sm:$0xff]
      %1674 = vst [vmem:[#allocation1] ss:$9 sm:$0xff] %v424
      %1675 = vst [vmem:[%s1650] ss:$9 sm:$0xff] %v427
      %1676 = vst [vmem:[%s1652] ss:$9 sm:$0xff] %v430
      %1677 = vst [vmem:[%s1654] ss:$9 sm:$0xff] %v433
      %1678 = vst [vmem:[%s1656] ss:$9 sm:$0xff] %v436
      %1679 = vst [vmem:[%s1658] ss:$9 sm:$0xff] %v439
      %1680 = vst [vmem:[%s1660] ss:$9 sm:$0xff] %v442
      %1681 = vst [vmem:[%s1662] ss:$9 sm:$0xff] %v445
      %v1682 = vld [vmem:[#allocation1] sm:$0xff]
      %1683 = vst [vmem:[#allocation1] ss:$9 sm:$0xff] %v448
      %1684 = vst [vmem:[%s1650] ss:$9 sm:$0xff] %v451
      %1685 = vst [vmem:[%s1652] ss:$9 sm:$0xff] %v454
      %1686 = vst [vmem:[%s1654] ss:$9 sm:$0xff] %v457
      %1687 = vst [vmem:[%s1656] ss:$9 sm:$0xff] %v460
      %1688 = vst [vmem:[%s1658] ss:$9 sm:$0xff] %v463
      %1689 = vst [vmem:[%s1660] ss:$9 sm:$0xff] %v466
      %1690 = vst [vmem:[%s1662] ss:$9 sm:$0xff] %v469
      %v1691 = vld [vmem:[#allocation1] sm:$0xff]
      %1692 = vst [vmem:[#allocation1] ss:$9 sm:$0xff] %v472
      %1693 = vst [vmem:[%s1650] ss:$9 sm:$0xff] %v475
      %1694 = vst [vmem:[%s1652] ss:$9 sm:$0xff] %v478
      %1695 = vst [vmem:[%s1654] ss:$9 sm:$0xff] %v481
      %1696 = vst [vmem:[%s1656] ss:$9 sm:$0xff] %v484
      %1697 = vst [vmem:[%s1658] ss:$9 sm:$0xff] %v487
      %1698 = vst [vmem:[%s1660] ss:$9 sm:$0xff] %v490
      %1699 = vst [vmem:[%s1662] ss:$9 sm:$0xff] %v493
      %v1700 = vld [vmem:[#allocation1] sm:$0xff]
      %1701 = vst [vmem:[#allocation1] ss:$9 sm:$0xff] %v496
      %1702 = vst [vmem:[%s1650] ss:$9 sm:$0xff] %v499
      %1703 = vst [vmem:[%s1652] ss:$9 sm:$0xff] %v502
      %1704 = vst [vmem:[%s1654] ss:$9 sm:$0xff] %v505
      %1705 = vst [vmem:[%s1656] ss:$9 sm:$0xff] %v508
      %1706 = vst [vmem:[%s1658] ss:$9 sm:$0xff] %v511
      %1707 = vst [vmem:[%s1660] ss:$9 sm:$0xff] %v514
      %1708 = vst [vmem:[%s1662] ss:$9 sm:$0xff] %v517
      %v1709 = vld [vmem:[#allocation1] sm:$0xff]
      %1710 = vst [vmem:[#allocation1] ss:$9 sm:$0xff] %v520
      %1711 = vst [vmem:[%s1650] ss:$9 sm:$0xff] %v523
      %1712 = vst [vmem:[%s1652] ss:$9 sm:$0xff] %v526
      %1713 = vst [vmem:[%s1654] ss:$9 sm:$0xff] %v529
      %1714 = vst [vmem:[%s1656] ss:$9 sm:$0xff] %v532
      %1715 = vst [vmem:[%s1658] ss:$9 sm:$0xff] %v535
      %1716 = vst [vmem:[%s1660] ss:$9 sm:$0xff] %v549
      %1717 = vst [vmem:[%s1662] ss:$9 sm:$0xff] %v552
      %v1718 = vld [vmem:[#allocation1] sm:$0xff]
      %1719 = vst [vmem:[#allocation1] ss:$9 sm:$0xff] %v555
      %1720 = vst [vmem:[%s1650] ss:$9 sm:$0xff] %v558
      %1721 = vst [vmem:[%s1652] ss:$9 sm:$0xff] %v561
      %1722 = vst [vmem:[%s1654] ss:$9 sm:$0xff] %v564
      %1723 = vst [vmem:[%s1656] ss:$9 sm:$0xff] %v567
      %1724 = vst [vmem:[%s1658] ss:$9 sm:$0xff] %v570
      %1725 = vst [vmem:[%s1660] ss:$9 sm:$0xff] %v573
      %1726 = vst [vmem:[%s1662] ss:$9 sm:$0xff] %v1622
      %v1727 = vld [vmem:[#allocation1] sm:$0xff]
      %1729 = vst [vmem:[#allocation1] ss:$9 sm:$0xff] %v1625
      %1731 = vst [vmem:[%s1650] ss:$9 sm:$0xff] %v1628
      %1733 = vst [vmem:[%s1652] ss:$9 sm:$0xff] %v1631
      %1734 = vst [vmem:[%s1654] ss:$9 sm:$0xff] %v1634
      %1736 = vst [vmem:[%s1656] ss:$9 sm:$0xff] %v1637
      %1738 = vst [vmem:[%s1658] ss:$9 sm:$0xff] %v1640
      %1740 = vst [vmem:[%s1660] ss:$9 sm:$0xff] %v1643
      %1741 = vst [vmem:[%s1662] ss:$9 sm:$0xff] %v1646
      %v1742 = vld [vmem:[#allocation1] sm:$0xff]
      %v1743 = vsel %vm712, %v1664, 0
      %v1745 = vsel %vm712, %v1673, 0
      %v1747 = vsel %vm712, %v1682, 0
      %v1749 = vsel %vm712, %v1691, 0
      %v1751 = vsel %vm712, %v1700, 0
      %v1753 = vsel %vm712, %v1709, 0
      %v1755 = vsel %vm712, %v1718, 0
      %v1757 = vsel %vm712, %v1727, 0
      %v1759 = vsel %vm712, %v1742, 0
      %v1762 = vsel %vm731, %v1648, 0
      %1764 = vmatpush.bf16.msra.mxu0 0
      %1765 = vmatpush.bf16.msra.mxu0 0
      %1766 = vmatpush.bf16.msra.mxu0 0
      %1767 = vmatpush.bf16.msra.mxu0 0
      %1768 = vmatpush.bf16.msra.mxu0 0
      %1769 = vmatpush.bf16.msra.mxu0 0
      %1770 = vmatpush.bf16.msra.mxu0 0
      %1771 = vmatpush.bf16.msra.mxu0 %v1762
      %1772 = vmatmul.bf16.gmra.mxu0 %v1743
      %v1773 = vpop.f32.mrf.mxu0
      %v1774 = vadd.f32 0.0, %v1773
      %v1775 = vpop.f32.mrf.mxu0
      %v1776 = vadd.f32 0.0, %v1775
      %1777 = vmatmul.bf16.gmra.mxu0 %v1745
      %v1778 = vpop.f32.mrf.mxu0
      %v1779 = vadd.f32 0.0, %v1778
      %v1780 = vpop.f32.mrf.mxu0
      %v1781 = vadd.f32 0.0, %v1780
      %1782 = vmatmul.bf16.gmra.mxu0 %v1747
      %v1783 = vpop.f32.mrf.mxu0
      %v1784 = vadd.f32 0.0, %v1783
      %v1785 = vpop.f32.mrf.mxu0
      %v1786 = vadd.f32 0.0, %v1785
      %1787 = vmatmul.bf16.gmra.mxu0 %v1749
      %v1788 = vpop.f32.mrf.mxu0
      %v1789 = vadd.f32 0.0, %v1788
      %v1790 = vpop.f32.mrf.mxu0
      %v1791 = vadd.f32 0.0, %v1790
      %1792 = vmatmul.bf16.gmra.mxu0 %v1751
      %v1793 = vpop.f32.mrf.mxu0
      %v1794 = vadd.f32 0.0, %v1793
      %v1795 = vpop.f32.mrf.mxu0
      %v1796 = vadd.f32 0.0, %v1795
      %1797 = vmatmul.bf16.gmra.mxu0 %v1753
      %v1798 = vpop.f32.mrf.mxu0
      %v1799 = vadd.f32 0.0, %v1798
      %v1800 = vpop.f32.mrf.mxu0
      %v1801 = vadd.f32 0.0, %v1800
      %1802 = vmatmul.bf16.gmra.mxu0 %v1755
      %v1803 = vpop.f32.mrf.mxu0
      %v1804 = vadd.f32 0.0, %v1803
      %v1805 = vpop.f32.mrf.mxu0
      %v1806 = vadd.f32 0.0, %v1805
      %1807 = vmatmul.bf16.gmra.mxu0 %v1757
      %v1808 = vpop.f32.mrf.mxu0
      %v1809 = vadd.f32 0.0, %v1808
      %v1810 = vpop.f32.mrf.mxu0
      %v1811 = vadd.f32 0.0, %v1810
      %1812 = vmatmul.bf16.gmra.mxu0 %v1759
      %v1813 = vpop.f32.mrf.mxu0
      %v1814 = vadd.f32 0.0, %v1813
      %v1815 = vpop.f32.mrf.mxu0
      %v1816 = vadd.f32 0.0, %v1815
      %1817 = vdwg.mxu0
      %v1818 = vadd.f32 %v914, %v1774
      %v1819 = vadd.f32 %v916, %v1776
      %v1820 = vadd.f32 %v919, %v1779
      %v1821 = vadd.f32 %v921, %v1781
      %v1822 = vadd.f32 %v924, %v1784
      %v1823 = vadd.f32 %v926, %v1786
      %v1824 = vadd.f32 %v929, %v1789
      %v1825 = vadd.f32 %v931, %v1791
      %v1826 = vadd.f32 %v934, %v1794
      %v1827 = vadd.f32 %v936, %v1796
      %v1828 = vadd.f32 %v939, %v1799
      %v1829 = vadd.f32 %v941, %v1801
      %v1830 = vadd.f32 %v944, %v1804
      %v1831 = vadd.f32 %v946, %v1806
      %v1832 = vadd.f32 %v949, %v1809
      %v1833 = vadd.f32 %v951, %v1811
      %v1834 = vadd.f32 %v954, %v1814
      %v1835 = vadd.f32 %v956, %v1816
      %s1836 = scalar_lea.vmem %s1, 28
      %v1837 = vld [vmem:[%s1836] sm:$0xf]
      %1838 = vst [vmem:[#allocation1] ss:$9 sm:$0xff] %v376
      %s1839 = scalar_lea.vmem [#allocation1], 1
      %1840 = vst [vmem:[%s1839] ss:$9 sm:$0xff] %v379
      %s1841 = scalar_lea.vmem [#allocation1], 2
      %1842 = vst [vmem:[%s1841] ss:$9 sm:$0xff] %v382
      %s1843 = scalar_lea.vmem [#allocation1], 3
      %1844 = vst [vmem:[%s1843] ss:$9 sm:$0xff] %v385
      %s1845 = scalar_lea.vmem [#allocation1], 4
      %1846 = vst [vmem:[%s1845] ss:$9 sm:$0xff] %v388
      %s1847 = scalar_lea.vmem [#allocation1], 5
      %1848 = vst [vmem:[%s1847] ss:$9 sm:$0xff] %v391
      %s1849 = scalar_lea.vmem [#allocation1], 6
      %1850 = vst [vmem:[%s1849] ss:$9 sm:$0xff] %v394
      %s1851 = scalar_lea.vmem [#allocation1], 7
      %1852 = vst [vmem:[%s1851] ss:$9 sm:$0xff] %v397
      %v1853 = vld [vmem:[#allocation1] sm:$0xff]
      %1854 = vst [vmem:[#allocation1] ss:$9 sm:$0xff] %v400
      %1855 = vst [vmem:[%s1839] ss:$9 sm:$0xff] %v403
      %1856 = vst [vmem:[%s1841] ss:$9 sm:$0xff] %v406
      %1857 = vst [vmem:[%s1843] ss:$9 sm:$0xff] %v409
      %1858 = vst [vmem:[%s1845] ss:$9 sm:$0xff] %v412
      %1859 = vst [vmem:[%s1847] ss:$9 sm:$0xff] %v415
      %1860 = vst [vmem:[%s1849] ss:$9 sm:$0xff] %v418
      %1861 = vst [vmem:[%s1851] ss:$9 sm:$0xff] %v421
      %v1862 = vld [vmem:[#allocation1] sm:$0xff]
      %1863 = vst [vmem:[#allocation1] ss:$9 sm:$0xff] %v424
      %1864 = vst [vmem:[%s1839] ss:$9 sm:$0xff] %v427
      %1865 = vst [vmem:[%s1841] ss:$9 sm:$0xff] %v430
      %1866 = vst [vmem:[%s1843] ss:$9 sm:$0xff] %v433
      %1867 = vst [vmem:[%s1845] ss:$9 sm:$0xff] %v436
      %1868 = vst [vmem:[%s1847] ss:$9 sm:$0xff] %v439
      %1869 = vst [vmem:[%s1849] ss:$9 sm:$0xff] %v442
      %1870 = vst [vmem:[%s1851] ss:$9 sm:$0xff] %v445
      %v1871 = vld [vmem:[#allocation1] sm:$0xff]
      %1872 = vst [vmem:[#allocation1] ss:$9 sm:$0xff] %v448
      %1873 = vst [vmem:[%s1839] ss:$9 sm:$0xff] %v451
      %1874 = vst [vmem:[%s1841] ss:$9 sm:$0xff] %v454
      %1875 = vst [vmem:[%s1843] ss:$9 sm:$0xff] %v457
      %1876 = vst [vmem:[%s1845] ss:$9 sm:$0xff] %v460
      %1877 = vst [vmem:[%s1847] ss:$9 sm:$0xff] %v463
      %1878 = vst [vmem:[%s1849] ss:$9 sm:$0xff] %v466
      %1879 = vst [vmem:[%s1851] ss:$9 sm:$0xff] %v469
      %v1880 = vld [vmem:[#allocation1] sm:$0xff]
      %1881 = vst [vmem:[#allocation1] ss:$9 sm:$0xff] %v472
      %1882 = vst [vmem:[%s1839] ss:$9 sm:$0xff] %v475
      %1883 = vst [vmem:[%s1841] ss:$9 sm:$0xff] %v478
      %1884 = vst [vmem:[%s1843] ss:$9 sm:$0xff] %v481
      %1885 = vst [vmem:[%s1845] ss:$9 sm:$0xff] %v484
      %1886 = vst [vmem:[%s1847] ss:$9 sm:$0xff] %v487
      %1887 = vst [vmem:[%s1849] ss:$9 sm:$0xff] %v490
      %1888 = vst [vmem:[%s1851] ss:$9 sm:$0xff] %v493
      %v1889 = vld [vmem:[#allocation1] sm:$0xff]
      %1890 = vst [vmem:[#allocation1] ss:$9 sm:$0xff] %v496
      %1891 = vst [vmem:[%s1839] ss:$9 sm:$0xff] %v499
      %1892 = vst [vmem:[%s1841] ss:$9 sm:$0xff] %v502
      %1893 = vst [vmem:[%s1843] ss:$9 sm:$0xff] %v505
      %1894 = vst [vmem:[%s1845] ss:$9 sm:$0xff] %v508
      %1895 = vst [vmem:[%s1847] ss:$9 sm:$0xff] %v511
      %1896 = vst [vmem:[%s1849] ss:$9 sm:$0xff] %v514
      %1897 = vst [vmem:[%s1851] ss:$9 sm:$0xff] %v517
      %v1898 = vld [vmem:[#allocation1] sm:$0xff]
      %1899 = vst [vmem:[#allocation1] ss:$9 sm:$0xff] %v520
      %1900 = vst [vmem:[%s1839] ss:$9 sm:$0xff] %v523
      %1901 = vst [vmem:[%s1841] ss:$9 sm:$0xff] %v526
      %1902 = vst [vmem:[%s1843] ss:$9 sm:$0xff] %v529
      %1903 = vst [vmem:[%s1845] ss:$9 sm:$0xff] %v532
      %1904 = vst [vmem:[%s1847] ss:$9 sm:$0xff] %v535
      %1905 = vst [vmem:[%s1849] ss:$9 sm:$0xff] %v549
      %1906 = vst [vmem:[%s1851] ss:$9 sm:$0xff] %v552
      %v1907 = vld [vmem:[#allocation1] sm:$0xff]
      %1908 = vst [vmem:[#allocation1] ss:$9 sm:$0xff] %v555
      %1909 = vst [vmem:[%s1839] ss:$9 sm:$0xff] %v558
      %1910 = vst [vmem:[%s1841] ss:$9 sm:$0xff] %v561
      %1911 = vst [vmem:[%s1843] ss:$9 sm:$0xff] %v564
      %1912 = vst [vmem:[%s1845] ss:$9 sm:$0xff] %v567
      %1913 = vst [vmem:[%s1847] ss:$9 sm:$0xff] %v570
      %1914 = vst [vmem:[%s1849] ss:$9 sm:$0xff] %v573
      %1915 = vst [vmem:[%s1851] ss:$9 sm:$0xff] %v1622
      %v1916 = vld [vmem:[#allocation1] sm:$0xff]
      %1917 = vst [vmem:[#allocation1] ss:$9 sm:$0xff] %v1625
      %1918 = vst [vmem:[%s1839] ss:$9 sm:$0xff] %v1628
      %1919 = vst [vmem:[%s1841] ss:$9 sm:$0xff] %v1631
      %1920 = vst [vmem:[%s1843] ss:$9 sm:$0xff] %v1634
      %1921 = vst [vmem:[%s1845] ss:$9 sm:$0xff] %v1637
      %1922 = vst [vmem:[%s1847] ss:$9 sm:$0xff] %v1640
      %1923 = vst [vmem:[%s1849] ss:$9 sm:$0xff] %v1643
      %1924 = vst [vmem:[%s1851] ss:$9 sm:$0xff] %v1646
      %v1925 = vld [vmem:[#allocation1] sm:$0xff]
      %v1926 = vsel %vm712, %v1853, 0
      %v1928 = vsel %vm712, %v1862, 0
      %v1930 = vsel %vm712, %v1871, 0
      %v1932 = vsel %vm712, %v1880, 0
      %v1934 = vsel %vm712, %v1889, 0
      %v1936 = vsel %vm712, %v1898, 0
      %v1938 = vsel %vm712, %v1907, 0
      %v1940 = vsel %vm712, %v1916, 0
      %v1942 = vsel %vm712, %v1925, 0
      %v1945 = vsel %vm731, %v1837, 0
      %1947 = vmatpush.bf16.msra.mxu0 0
      %1948 = vmatpush.bf16.msra.mxu0 0
      %1949 = vmatpush.bf16.msra.mxu0 0
      %1950 = vmatpush.bf16.msra.mxu0 0
      %1951 = vmatpush.bf16.msra.mxu0 0
      %1952 = vmatpush.bf16.msra.mxu0 0
      %1953 = vmatpush.bf16.msra.mxu0 0
      %1954 = vmatpush.bf16.msra.mxu0 %v1945
      %1955 = vmatmul.bf16.gmra.mxu0 %v1926
      %v1956 = vpop.f32.mrf.mxu0
      %v1957 = vadd.f32 0.0, %v1956
      %v1958 = vpop.f32.mrf.mxu0
      %v1959 = vadd.f32 0.0, %v1958
      %1960 = vmatmul.bf16.gmra.mxu0 %v1928
      %v1961 = vpop.f32.mrf.mxu0
      %v1962 = vadd.f32 0.0, %v1961
      %v1963 = vpop.f32.mrf.mxu0
      %v1964 = vadd.f32 0.0, %v1963
      %1965 = vmatmul.bf16.gmra.mxu0 %v1930
      %v1966 = vpop.f32.mrf.mxu0
      %v1967 = vadd.f32 0.0, %v1966
      %v1968 = vpop.f32.mrf.mxu0
      %v1969 = vadd.f32 0.0, %v1968
      %1970 = vmatmul.bf16.gmra.mxu0 %v1932
      %v1971 = vpop.f32.mrf.mxu0
      %v1972 = vadd.f32 0.0, %v1971
      %v1973 = vpop.f32.mrf.mxu0
      %v1974 = vadd.f32 0.0, %v1973
      %1975 = vmatmul.bf16.gmra.mxu0 %v1934
      %v1976 = vpop.f32.mrf.mxu0
      %v1977 = vadd.f32 0.0, %v1976
      %v1978 = vpop.f32.mrf.mxu0
      %v1979 = vadd.f32 0.0, %v1978
      %1980 = vmatmul.bf16.gmra.mxu0 %v1936
      %v1981 = vpop.f32.mrf.mxu0
      %v1982 = vadd.f32 0.0, %v1981
      %v1983 = vpop.f32.mrf.mxu0
      %v1984 = vadd.f32 0.0, %v1983
      %1985 = vmatmul.bf16.gmra.mxu0 %v1938
      %v1986 = vpop.f32.mrf.mxu0
      %v1987 = vadd.f32 0.0, %v1986
      %v1988 = vpop.f32.mrf.mxu0
      %v1989 = vadd.f32 0.0, %v1988
      %1990 = vmatmul.bf16.gmra.mxu0 %v1940
      %v1991 = vpop.f32.mrf.mxu0
      %v1992 = vadd.f32 0.0, %v1991
      %v1993 = vpop.f32.mrf.mxu0
      %v1994 = vadd.f32 0.0, %v1993
      %1995 = vmatmul.bf16.gmra.mxu0 %v1942
      %v1996 = vpop.f32.mrf.mxu0
      %v1997 = vadd.f32 0.0, %v1996
      %v1998 = vpop.f32.mrf.mxu0
      %v1999 = vadd.f32 0.0, %v1998
      %2000 = vdwg.mxu0
      %v2001 = vadd.f32 %v1242, %v1957
      %v2002 = vadd.f32 %v1244, %v1959
      %v2003 = vadd.f32 %v1247, %v1962
      %v2004 = vadd.f32 %v1249, %v1964
      %v2005 = vadd.f32 %v1252, %v1967
      %v2006 = vadd.f32 %v1254, %v1969
      %v2007 = vadd.f32 %v1257, %v1972
      %v2008 = vadd.f32 %v1259, %v1974
      %v2009 = vadd.f32 %v1262, %v1977
      %v2010 = vadd.f32 %v1264, %v1979
      %v2011 = vadd.f32 %v1267, %v1982
      %v2012 = vadd.f32 %v1269, %v1984
      %v2013 = vadd.f32 %v1272, %v1987
      %v2014 = vadd.f32 %v1274, %v1989
      %v2015 = vadd.f32 %v1277, %v1992
      %v2016 = vadd.f32 %v1279, %v1994
      %v2017 = vadd.f32 %v1282, %v1997
      %v2018 = vadd.f32 %v1284, %v1999
      %s2019 = scalar_lea.vmem %s1, 32
      %v2020 = vld [vmem:[%s2019] sm:$0xf]
      %2021 = vst [vmem:[#allocation1] ss:$9 sm:$0xff] %v376
      %s2022 = scalar_lea.vmem [#allocation1], 1
      %2023 = vst [vmem:[%s2022] ss:$9 sm:$0xff] %v379
      %s2024 = scalar_lea.vmem [#allocation1], 2
      %2025 = vst [vmem:[%s2024] ss:$9 sm:$0xff] %v382
      %s2026 = scalar_lea.vmem [#allocation1], 3
      %2027 = vst [vmem:[%s2026] ss:$9 sm:$0xff] %v385
      %s2028 = scalar_lea.vmem [#allocation1], 4
      %2029 = vst [vmem:[%s2028] ss:$9 sm:$0xff] %v388
      %s2030 = scalar_lea.vmem [#allocation1], 5
      %2031 = vst [vmem:[%s2030] ss:$9 sm:$0xff] %v391
      %s2032 = scalar_lea.vmem [#allocation1], 6
      %2033 = vst [vmem:[%s2032] ss:$9 sm:$0xff] %v394
      %s2034 = scalar_lea.vmem [#allocation1], 7
      %2035 = vst [vmem:[%s2034] ss:$9 sm:$0xff] %v397
      %v2036 = vld [vmem:[#allocation1] sm:$0xff]
      %2037 = vst [vmem:[#allocation1] ss:$9 sm:$0xff] %v400
      %2038 = vst [vmem:[%s2022] ss:$9 sm:$0xff] %v403
      %2039 = vst [vmem:[%s2024] ss:$9 sm:$0xff] %v406
      %2040 = vst [vmem:[%s2026] ss:$9 sm:$0xff] %v409
      %2041 = vst [vmem:[%s2028] ss:$9 sm:$0xff] %v412
      %2042 = vst [vmem:[%s2030] ss:$9 sm:$0xff] %v415
      %2043 = vst [vmem:[%s2032] ss:$9 sm:$0xff] %v418
      %2044 = vst [vmem:[%s2034] ss:$9 sm:$0xff] %v421
      %v2045 = vld [vmem:[#allocation1] sm:$0xff]
      %2046 = vst [vmem:[#allocation1] ss:$9 sm:$0xff] %v424
      %2047 = vst [vmem:[%s2022] ss:$9 sm:$0xff] %v427
      %2048 = vst [vmem:[%s2024] ss:$9 sm:$0xff] %v430
      %2049 = vst [vmem:[%s2026] ss:$9 sm:$0xff] %v433
      %2050 = vst [vmem:[%s2028] ss:$9 sm:$0xff] %v436
      %2051 = vst [vmem:[%s2030] ss:$9 sm:$0xff] %v439
      %2052 = vst [vmem:[%s2032] ss:$9 sm:$0xff] %v442
      %2053 = vst [vmem:[%s2034] ss:$9 sm:$0xff] %v445
      %v2054 = vld [vmem:[#allocation1] sm:$0xff]
      %2055 = vst [vmem:[#allocation1] ss:$9 sm:$0xff] %v448
      %2056 = vst [vmem:[%s2022] ss:$9 sm:$0xff] %v451
      %2057 = vst [vmem:[%s2024] ss:$9 sm:$0xff] %v454
      %2058 = vst [vmem:[%s2026] ss:$9 sm:$0xff] %v457
      %2059 = vst [vmem:[%s2028] ss:$9 sm:$0xff] %v460
      %2060 = vst [vmem:[%s2030] ss:$9 sm:$0xff] %v463
      %2061 = vst [vmem:[%s2032] ss:$9 sm:$0xff] %v466
      %2062 = vst [vmem:[%s2034] ss:$9 sm:$0xff] %v469
      %v2063 = vld [vmem:[#allocation1] sm:$0xff]
      %2064 = vst [vmem:[#allocation1] ss:$9 sm:$0xff] %v472
      %2065 = vst [vmem:[%s2022] ss:$9 sm:$0xff] %v475
      %2066 = vst [vmem:[%s2024] ss:$9 sm:$0xff] %v478
      %2067 = vst [vmem:[%s2026] ss:$9 sm:$0xff] %v481
      %2068 = vst [vmem:[%s2028] ss:$9 sm:$0xff] %v484
      %2069 = vst [vmem:[%s2030] ss:$9 sm:$0xff] %v487
      %2070 = vst [vmem:[%s2032] ss:$9 sm:$0xff] %v490
      %2071 = vst [vmem:[%s2034] ss:$9 sm:$0xff] %v493
      %v2072 = vld [vmem:[#allocation1] sm:$0xff]
      %2073 = vst [vmem:[#allocation1] ss:$9 sm:$0xff] %v496
      %2074 = vst [vmem:[%s2022] ss:$9 sm:$0xff] %v499
      %2075 = vst [vmem:[%s2024] ss:$9 sm:$0xff] %v502
      %2076 = vst [vmem:[%s2026] ss:$9 sm:$0xff] %v505
      %2077 = vst [vmem:[%s2028] ss:$9 sm:$0xff] %v508
      %2078 = vst [vmem:[%s2030] ss:$9 sm:$0xff] %v511
      %2079 = vst [vmem:[%s2032] ss:$9 sm:$0xff] %v514
      %2080 = vst [vmem:[%s2034] ss:$9 sm:$0xff] %v517
      %v2081 = vld [vmem:[#allocation1] sm:$0xff]
      %2082 = vst [vmem:[#allocation1] ss:$9 sm:$0xff] %v520
      %2083 = vst [vmem:[%s2022] ss:$9 sm:$0xff] %v523
      %2084 = vst [vmem:[%s2024] ss:$9 sm:$0xff] %v526
      %2085 = vst [vmem:[%s2026] ss:$9 sm:$0xff] %v529
      %2086 = vst [vmem:[%s2028] ss:$9 sm:$0xff] %v532
      %2087 = vst [vmem:[%s2030] ss:$9 sm:$0xff] %v535
      %2088 = vst [vmem:[%s2032] ss:$9 sm:$0xff] %v549
      %2089 = vst [vmem:[%s2034] ss:$9 sm:$0xff] %v552
      %v2090 = vld [vmem:[#allocation1] sm:$0xff]
      %2091 = vst [vmem:[#allocation1] ss:$9 sm:$0xff] %v555
      %2092 = vst [vmem:[%s2022] ss:$9 sm:$0xff] %v558
      %2093 = vst [vmem:[%s2024] ss:$9 sm:$0xff] %v561
      %2094 = vst [vmem:[%s2026] ss:$9 sm:$0xff] %v564
      %2095 = vst [vmem:[%s2028] ss:$9 sm:$0xff] %v567
      %2096 = vst [vmem:[%s2030] ss:$9 sm:$0xff] %v570
      %2097 = vst [vmem:[%s2032] ss:$9 sm:$0xff] %v573
      %2098 = vst [vmem:[%s2034] ss:$9 sm:$0xff] %v1622
      %v2099 = vld [vmem:[#allocation1] sm:$0xff]
      %2100 = vst [vmem:[#allocation1] ss:$9 sm:$0xff] %v1625
      %2101 = vst [vmem:[%s2022] ss:$9 sm:$0xff] %v1628
      %2102 = vst [vmem:[%s2024] ss:$9 sm:$0xff] %v1631
      %2103 = vst [vmem:[%s2026] ss:$9 sm:$0xff] %v1634
      %2104 = vst [vmem:[%s2028] ss:$9 sm:$0xff] %v1637
      %2105 = vst [vmem:[%s2030] ss:$9 sm:$0xff] %v1640
      %2106 = vst [vmem:[%s2032] ss:$9 sm:$0xff] %v1643
      %2107 = vst [vmem:[%s2034] ss:$9 sm:$0xff] %v1646
      %v2108 = vld [vmem:[#allocation1] sm:$0xff]
      %v2109 = vsel %vm712, %v2036, 0
      %v2111 = vsel %vm712, %v2045, 0
      %v2113 = vsel %vm712, %v2054, 0
      %v2115 = vsel %vm712, %v2063, 0
      %v2117 = vsel %vm712, %v2072, 0
      %v2119 = vsel %vm712, %v2081, 0
      %v2121 = vsel %vm712, %v2090, 0
      %v2123 = vsel %vm712, %v2099, 0
      %v2125 = vsel %vm712, %v2108, 0
      %v2128 = vsel %vm731, %v2020, 0
      %2130 = vmatpush.bf16.msra.mxu0 0
      %2131 = vmatpush.bf16.msra.mxu0 0
      %2132 = vmatpush.bf16.msra.mxu0 0
      %2133 = vmatpush.bf16.msra.mxu0 0
      %2134 = vmatpush.bf16.msra.mxu0 0
      %2135 = vmatpush.bf16.msra.mxu0 0
      %2136 = vmatpush.bf16.msra.mxu0 0
      %2137 = vmatpush.bf16.msra.mxu0 %v2128
      %2138 = vmatmul.bf16.gmra.mxu0 %v2109
      %v2139 = vpop.f32.mrf.mxu0
      %v2140 = vadd.f32 0.0, %v2139
      %v2141 = vpop.f32.mrf.mxu0
      %v2142 = vadd.f32 0.0, %v2141
      %2143 = vmatmul.bf16.gmra.mxu0 %v2111
      %v2144 = vpop.f32.mrf.mxu0
      %v2145 = vadd.f32 0.0, %v2144
      %v2146 = vpop.f32.mrf.mxu0
      %v2147 = vadd.f32 0.0, %v2146
      %2148 = vmatmul.bf16.gmra.mxu0 %v2113
      %v2149 = vpop.f32.mrf.mxu0
      %v2150 = vadd.f32 0.0, %v2149
      %v2151 = vpop.f32.mrf.mxu0
      %v2152 = vadd.f32 0.0, %v2151
      %2153 = vmatmul.bf16.gmra.mxu0 %v2115
      %v2154 = vpop.f32.mrf.mxu0
      %v2155 = vadd.f32 0.0, %v2154
      %v2156 = vpop.f32.mrf.mxu0
      %v2157 = vadd.f32 0.0, %v2156
      %2158 = vmatmul.bf16.gmra.mxu0 %v2117
      %v2159 = vpop.f32.mrf.mxu0
      %v2160 = vadd.f32 0.0, %v2159
      %v2161 = vpop.f32.mrf.mxu0
      %v2162 = vadd.f32 0.0, %v2161
      %2163 = vmatmul.bf16.gmra.mxu0 %v2119
      %v2164 = vpop.f32.mrf.mxu0
      %v2165 = vadd.f32 0.0, %v2164
      %v2166 = vpop.f32.mrf.mxu0
      %v2167 = vadd.f32 0.0, %v2166
      %2168 = vmatmul.bf16.gmra.mxu0 %v2121
      %v2169 = vpop.f32.mrf.mxu0
      %v2170 = vadd.f32 0.0, %v2169
      %v2171 = vpop.f32.mrf.mxu0
      %v2172 = vadd.f32 0.0, %v2171
      %2173 = vmatmul.bf16.gmra.mxu0 %v2123
      %v2174 = vpop.f32.mrf.mxu0
      %v2175 = vadd.f32 0.0, %v2174
      %v2176 = vpop.f32.mrf.mxu0
      %v2177 = vadd.f32 0.0, %v2176
      %2178 = vmatmul.bf16.gmra.mxu0 %v2125
      %v2179 = vpop.f32.mrf.mxu0
      %v2180 = vadd.f32 0.0, %v2179
      %v2181 = vpop.f32.mrf.mxu0
      %v2182 = vadd.f32 0.0, %v2181
      %2183 = vdwg.mxu0
      %v2184 = vadd.f32 %v1570, %v2140
      %v2185 = vadd.f32 %v1572, %v2142
      %v2186 = vadd.f32 %v1575, %v2145
      %v2187 = vadd.f32 %v1577, %v2147
      %v2188 = vadd.f32 %v1580, %v2150
      %v2189 = vadd.f32 %v1582, %v2152
      %v2190 = vadd.f32 %v1585, %v2155
      %v2191 = vadd.f32 %v1587, %v2157
      %v2192 = vadd.f32 %v1590, %v2160
      %v2193 = vadd.f32 %v1592, %v2162
      %v2194 = vadd.f32 %v1595, %v2165
      %v2195 = vadd.f32 %v1597, %v2167
      %v2196 = vadd.f32 %v1600, %v2170
      %v2197 = vadd.f32 %v1602, %v2172
      %v2198 = vadd.f32 %v1605, %v2175
      %v2199 = vadd.f32 %v1607, %v2177
      %v2200 = vadd.f32 %v1610, %v2180
      %v2201 = vadd.f32 %v1612, %v2182
      %v2220 = vrot.slane %v1818, 2
      %v2221 = vrot.slane %v1818, 4
      %v2222 = vrot.slane %v1818, 6
      %v2223 = vrot.slane %v1819, 2
      %v2224 = vrot.slane %v1819, 4
      %v2225 = vrot.slane %v1819, 6
      %v2226 = vrot.slane %v1820, 2
      %v2227 = vrot.slane %v1820, 4
      %v2228 = vrot.slane %v1820, 6
      %v2229 = vrot.slane %v1821, 2
      %v2230 = vrot.slane %v1821, 4
      %v2231 = vrot.slane %v1821, 6
      %v2232 = vrot.slane %v1822, 4
      %v2233 = vrot.slane %v1822, 6
      %v2234 = vrot.slane %v1823, 2
      %v2235 = vrot.slane %v1823, 4
      %v2236 = vrot.slane %v1823, 6
      %v2237 = vrot.slane %v1824, 2
      %v2238 = vrot.slane %v1824, 6
      %v2239 = vrot.slane %v1825, 2
      %v2240 = vrot.slane %v1825, 4
      %v2241 = vrot.slane %v1825, 6
      %v2242 = vrot.slane %v1826, 2
      %v2243 = vrot.slane %v1826, 4
      %v2244 = vrot.slane %v1827, 2
      %v2245 = vrot.slane %v1827, 4
      %v2246 = vrot.slane %v1827, 6
      %v2247 = vrot.slane %v1828, 2
      %v2248 = vrot.slane %v1828, 4
      %v2249 = vrot.slane %v1828, 6
      %v2250 = vrot.slane %v1829, 2
      %v2251 = vrot.slane %v1829, 4
      %v2252 = vrot.slane %v1829, 6
      %v2253 = vrot.slane %v1830, 2
      %v2254 = vrot.slane %v1830, 4
      %v2255 = vrot.slane %v1830, 6
      %v2256 = vrot.slane %v1831, 4
      %v2257 = vrot.slane %v1831, 6
      %v2258 = vrot.slane %v1832, 2
      %v2259 = vrot.slane %v1832, 4
      %v2260 = vrot.slane %v1832, 6
      %v2261 = vrot.slane %v1833, 2
      %v2262 = vrot.slane %v1833, 6
      %v2263 = vrot.slane %v1834, 2
      %v2264 = vrot.slane %v1834, 4
      %v2265 = vrot.slane %v1834, 6
      %v2266 = vrot.slane %v1835, 2
      %v2267 = vrot.slane %v1835, 4
      %v2334 = vrot.slane %v2001, 2
      %v2335 = vrot.slane %v2001, 4
      %v2336 = vrot.slane %v2001, 6
      %v2337 = vrot.slane %v2002, 2
      %v2338 = vrot.slane %v2002, 4
      %v2339 = vrot.slane %v2002, 6
      %v2340 = vrot.slane %v2003, 2
      %v2341 = vrot.slane %v2003, 4
      %v2342 = vrot.slane %v2003, 6
      %v2343 = vrot.slane %v2004, 2
      %v2344 = vrot.slane %v2004, 4
      %v2345 = vrot.slane %v2004, 6
      %v2346 = vrot.slane %v2005, 2
      %v2347 = vrot.slane %v2005, 4
      %v2348 = vrot.slane %v2005, 6
      %v2349 = vrot.slane %v2006, 2
      %v2350 = vrot.slane %v2006, 4
      %v2351 = vrot.slane %v2006, 6
      %v2352 = vrot.slane %v2007, 2
      %v2353 = vrot.slane %v2007, 4
      %v2354 = vrot.slane %v2007, 6
      %v2355 = vrot.slane %v2008, 2
      %v2356 = vrot.slane %v2008, 4
      %v2357 = vrot.slane %v2008, 6
      %v2358 = vrot.slane %v2009, 2
      %v2359 = vrot.slane %v2009, 4
      %v2360 = vrot.slane %v2009, 6
      %v2361 = vrot.slane %v2010, 2
      %v2362 = vrot.slane %v2010, 4
      %v2363 = vrot.slane %v2010, 6
      %v2364 = vrot.slane %v2011, 2
      %v2365 = vrot.slane %v2011, 4
      %v2366 = vrot.slane %v2011, 6
      %v2367 = vrot.slane %v2012, 2
      %v2368 = vrot.slane %v2012, 4
      %v2369 = vrot.slane %v2012, 6
      %v2370 = vrot.slane %v2013, 2
      %v2371 = vrot.slane %v2013, 4
      %v2372 = vrot.slane %v2013, 6
      %v2373 = vrot.slane %v2014, 2
      %v2374 = vrot.slane %v2014, 4
      %v2375 = vrot.slane %v2014, 6
      %v2376 = vrot.slane %v2015, 2
      %v2377 = vrot.slane %v2015, 4
      %v2378 = vrot.slane %v2015, 6
      %v2379 = vrot.slane %v2016, 2
      %v2380 = vrot.slane %v2016, 4
      %v2381 = vrot.slane %v2016, 6
      %v2382 = vrot.slane %v2017, 2
      %v2383 = vrot.slane %v2017, 4
      %v2384 = vrot.slane %v2017, 6
      %v2385 = vrot.slane %v2018, 2
      %v2386 = vrot.slane %v2018, 4
      %v2387 = vrot.slane %v2018, 6
      %v2406 = vrot.slane %v2184, 2
      %v2407 = vrot.slane %v2184, 4
      %v2408 = vrot.slane %v2184, 6
      %v2409 = vrot.slane %v2185, 2
      %v2410 = vrot.slane %v2185, 4
      %v2411 = vrot.slane %v2185, 6
      %v2412 = vrot.slane %v2186, 4
      %v2413 = vrot.slane %v2186, 6
      %v2414 = vrot.slane %v2187, 2
      %v2415 = vrot.slane %v2187, 4
      %v2416 = vrot.slane %v2187, 6
      %v2417 = vrot.slane %v2188, 2
      %v2418 = vrot.slane %v2188, 6
      %v2419 = vrot.slane %v2189, 2
      %v2420 = vrot.slane %v2189, 4
      %v2421 = vrot.slane %v2189, 6
      %v2422 = vrot.slane %v2190, 2
      %v2423 = vrot.slane %v2190, 4
      %v2424 = vrot.slane %v2191, 2
      %v2425 = vrot.slane %v2191, 4
      %v2426 = vrot.slane %v2191, 6
      %v2427 = vrot.slane %v2192, 2
      %v2428 = vrot.slane %v2192, 4
      %v2429 = vrot.slane %v2192, 6
      %v2430 = vrot.slane %v2193, 2
      %v2431 = vrot.slane %v2193, 4
      %v2432 = vrot.slane %v2193, 6
      %v2433 = vrot.slane %v2194, 2
      %v2434 = vrot.slane %v2194, 4
      %v2435 = vrot.slane %v2194, 6
      %v2436 = vrot.slane %v2195, 4
      %v2437 = vrot.slane %v2195, 6
      %v2438 = vrot.slane %v2196, 2
      %v2439 = vrot.slane %v2196, 4
      %v2440 = vrot.slane %v2196, 6
      %v2441 = vrot.slane %v2197, 2
      %v2442 = vrot.slane %v2197, 6
      %v2443 = vrot.slane %v2198, 2
      %v2444 = vrot.slane %v2198, 4
      %v2445 = vrot.slane %v2198, 6
      %v2446 = vrot.slane %v2199, 2
      %v2447 = vrot.slane %v2199, 4
      %v2448 = vrot.slane %v2200, 2
      %v2449 = vrot.slane %v2200, 4
      %v2450 = vrot.slane %v2200, 6
      %v2451 = vrot.slane %v2201, 2
      %v2452 = vrot.slane %v2201, 4
      %v2453 = vrot.slane %v2201, 6
      %vm2502 = vmor %vm316, %vm324
      %vm2503 = vcmask 1044484
      %vm2504 = vmor %vm2502, %vm2503
      %vm2505 = vcmask 1046534
      %vm2506 = vmor %vm2504, %vm2505
      %v2507 = vrot.slane %v2001, 7
      %v2508 = vrot.slane %v2507, 2
      %v2509 = vrot.slane %v2334, 7
      %v2510 = vsel %vm2506, %v2508, %v2509
      %v2511 = vrot.slane %v2509, 2
      %v2512 = vrot.slane %v2335, 7
      %v2513 = vsel %vm2506, %v2511, %v2512
      %v2514 = vrot.slane %v2512, 2
      %v2515 = vrot.slane %v2336, 7
      %v2516 = vsel %vm2506, %v2514, %v2515
      %v2517 = vrot.slane %v2515, 2
      %v2518 = vrot.slane %v2002, 7
      %v2519 = vsel %vm2506, %v2517, %v2518
      %v2520 = vrot.slane %v2518, 2
      %v2521 = vrot.slane %v2337, 7
      %v2522 = vsel %vm2506, %v2520, %v2521
      %v2523 = vrot.slane %v2521, 2
      %v2524 = vrot.slane %v2338, 7
      %v2525 = vsel %vm2506, %v2523, %v2524
      %v2526 = vrot.slane %v2524, 2
      %v2527 = vrot.slane %v2339, 7
      %v2528 = vsel %vm2506, %v2526, %v2527
      %v2529 = vrot.slane %v2527, 2
      %v2530 = vrot.slane %v2003, 7
      %v2531 = vsel %vm2506, %v2529, %v2530
      %v2532 = vrot.slane %v2340, 7
      %v2533 = vrot.slane %v2532, 2
      %v2534 = vrot.slane %v2341, 7
      %v2535 = vsel %vm2506, %v2533, %v2534
      %v2536 = vrot.slane %v2534, 2
      %v2537 = vrot.slane %v2342, 7
      %v2538 = vsel %vm2506, %v2536, %v2537
      %v2539 = vrot.slane %v2537, 2
      %v2540 = vrot.slane %v2004, 7
      %v2541 = vsel %vm2506, %v2539, %v2540
      %v2542 = vrot.slane %v2540, 2
      %v2543 = vrot.slane %v2343, 7
      %v2544 = vsel %vm2506, %v2542, %v2543
      %v2545 = vrot.slane %v2543, 2
      %v2546 = vrot.slane %v2344, 7
      %v2547 = vsel %vm2506, %v2545, %v2546
      %v2548 = vrot.slane %v2546, 2
      %v2549 = vrot.slane %v2345, 7
      %v2550 = vsel %vm2506, %v2548, %v2549
      %v2551 = vrot.slane %v2549, 2
      %v2552 = vrot.slane %v2005, 7
      %v2553 = vsel %vm2506, %v2551, %v2552
      %v2554 = vrot.slane %v2552, 2
      %v2555 = vrot.slane %v2346, 7
      %v2556 = vsel %vm2506, %v2554, %v2555
      %v2557 = vrot.slane %v2347, 7
      %v2558 = vrot.slane %v2557, 2
      %v2559 = vrot.slane %v2348, 7
      %v2560 = vsel %vm2506, %v2558, %v2559
      %v2561 = vrot.slane %v2559, 2
      %v2562 = vrot.slane %v2006, 7
      %v2563 = vsel %vm2506, %v2561, %v2562
      %v2564 = vrot.slane %v2562, 2
      %v2565 = vrot.slane %v2349, 7
      %v2566 = vsel %vm2506, %v2564, %v2565
      %v2567 = vrot.slane %v2565, 2
      %v2568 = vrot.slane %v2350, 7
      %v2569 = vsel %vm2506, %v2567, %v2568
      %v2570 = vrot.slane %v2568, 2
      %v2571 = vrot.slane %v2351, 7
      %v2572 = vsel %vm2506, %v2570, %v2571
      %v2573 = vrot.slane %v2571, 2
      %v2574 = vrot.slane %v2007, 7
      %v2575 = vsel %vm2506, %v2573, %v2574
      %v2576 = vrot.slane %v2574, 2
      %v2577 = vrot.slane %v2352, 7
      %v2578 = vsel %vm2506, %v2576, %v2577
      %v2579 = vrot.slane %v2577, 2
      %v2580 = vrot.slane %v2353, 7
      %v2581 = vsel %vm2506, %v2579, %v2580
      %v2582 = vrot.slane %v2354, 7
      %v2583 = vrot.slane %v2582, 2
      %v2584 = vrot.slane %v2008, 7
      %v2585 = vsel %vm2506, %v2583, %v2584
      %v2586 = vrot.slane %v2584, 2
      %v2587 = vrot.slane %v2355, 7
      %v2588 = vsel %vm2506, %v2586, %v2587
      %v2589 = vrot.slane %v2587, 2
      %v2590 = vrot.slane %v2356, 7
      %v2591 = vsel %vm2506, %v2589, %v2590
      %v2592 = vrot.slane %v2590, 2
      %v2593 = vrot.slane %v2357, 7
      %v2594 = vsel %vm2506, %v2592, %v2593
      %v2595 = vrot.slane %v2593, 2
      %v2596 = vrot.slane %v2009, 7
      %v2597 = vsel %vm2506, %v2595, %v2596
      %v2598 = vrot.slane %v2596, 2
      %v2599 = vrot.slane %v2358, 7
      %v2600 = vsel %vm2506, %v2598, %v2599
      %v2601 = vrot.slane %v2599, 2
      %v2602 = vrot.slane %v2359, 7
      %v2603 = vsel %vm2506, %v2601, %v2602
      %v2604 = vrot.slane %v2602, 2
      %v2605 = vrot.slane %v2360, 7
      %v2606 = vsel %vm2506, %v2604, %v2605
      %v2607 = vrot.slane %v2010, 7
      %v2608 = vrot.slane %v2607, 2
      %v2609 = vrot.slane %v2361, 7
      %v2610 = vsel %vm2506, %v2608, %v2609
      %v2611 = vrot.slane %v2609, 2
      %v2612 = vrot.slane %v2362, 7
      %v2613 = vsel %vm2506, %v2611, %v2612
      %v2614 = vrot.slane %v2612, 2
      %v2615 = vrot.slane %v2363, 7
      %v2616 = vsel %vm2506, %v2614, %v2615
      %v2617 = vrot.slane %v2615, 2
      %v2618 = vrot.slane %v2011, 7
      %v2619 = vsel %vm2506, %v2617, %v2618
      %v2620 = vrot.slane %v2618, 2
      %v2621 = vrot.slane %v2364, 7
      %v2622 = vsel %vm2506, %v2620, %v2621
      %v2623 = vrot.slane %v2621, 2
      %v2624 = vrot.slane %v2365, 7
      %v2625 = vsel %vm2506, %v2623, %v2624
      %v2626 = vrot.slane %v2624, 2
      %v2627 = vrot.slane %v2366, 7
      %v2628 = vsel %vm2506, %v2626, %v2627
      %v2629 = vrot.slane %v2627, 2
      %v2630 = vrot.slane %v2012, 7
      %v2631 = vsel %vm2506, %v2629, %v2630
      %v2632 = vrot.slane %v2367, 7
      %v2633 = vrot.slane %v2632, 2
      %v2634 = vrot.slane %v2368, 7
      %v2635 = vsel %vm2506, %v2633, %v2634
      %v2636 = vrot.slane %v2634, 2
      %v2637 = vrot.slane %v2369, 7
      %v2638 = vsel %vm2506, %v2636, %v2637
      %v2639 = vrot.slane %v2637, 2
      %v2640 = vrot.slane %v2013, 7
      %v2641 = vsel %vm2506, %v2639, %v2640
      %v2642 = vrot.slane %v2640, 2
      %v2643 = vrot.slane %v2370, 7
      %v2644 = vsel %vm2506, %v2642, %v2643
      %v2645 = vrot.slane %v2643, 2
      %v2646 = vrot.slane %v2371, 7
      %v2647 = vsel %vm2506, %v2645, %v2646
      %v2648 = vrot.slane %v2646, 2
      %v2649 = vrot.slane %v2372, 7
      %v2650 = vsel %vm2506, %v2648, %v2649
      %v2651 = vrot.slane %v2649, 2
      %v2652 = vrot.slane %v2014, 7
      %v2653 = vsel %vm2506, %v2651, %v2652
      %v2654 = vrot.slane %v2652, 2
      %v2655 = vrot.slane %v2373, 7
      %v2656 = vsel %vm2506, %v2654, %v2655
      %v2657 = vrot.slane %v2374, 7
      %v2658 = vrot.slane %v2657, 2
      %v2659 = vrot.slane %v2375, 7
      %v2660 = vsel %vm2506, %v2658, %v2659
      %v2661 = vrot.slane %v2659, 2
      %v2662 = vrot.slane %v2015, 7
      %v2663 = vsel %vm2506, %v2661, %v2662
      %v2664 = vrot.slane %v2662, 2
      %v2665 = vrot.slane %v2376, 7
      %v2666 = vsel %vm2506, %v2664, %v2665
      %v2667 = vrot.slane %v2665, 2
      %v2668 = vrot.slane %v2377, 7
      %v2669 = vsel %vm2506, %v2667, %v2668
      %v2670 = vrot.slane %v2668, 2
      %v2671 = vrot.slane %v2378, 7
      %v2672 = vsel %vm2506, %v2670, %v2671
      %v2673 = vrot.slane %v2671, 2
      %v2674 = vrot.slane %v2016, 7
      %v2675 = vsel %vm2506, %v2673, %v2674
      %v2676 = vrot.slane %v2674, 2
      %v2677 = vrot.slane %v2379, 7
      %v2678 = vsel %vm2506, %v2676, %v2677
      %v2679 = vrot.slane %v2677, 2
      %v2680 = vrot.slane %v2380, 7
      %v2681 = vsel %vm2506, %v2679, %v2680
      %v2682 = vrot.slane %v2381, 7
      %v2683 = vrot.slane %v2682, 2
      %v2684 = vrot.slane %v2017, 7
      %v2685 = vsel %vm2506, %v2683, %v2684
      %v2686 = vrot.slane %v2684, 2
      %v2687 = vrot.slane %v2382, 7
      %v2688 = vsel %vm2506, %v2686, %v2687
      %v2689 = vrot.slane %v2687, 2
      %v2690 = vrot.slane %v2383, 7
      %v2691 = vsel %vm2506, %v2689, %v2690
      %v2692 = vrot.slane %v2690, 2
      %v2693 = vrot.slane %v2384, 7
      %v2694 = vsel %vm2506, %v2692, %v2693
      %v2695 = vrot.slane %v2693, 2
      %v2696 = vrot.slane %v2018, 7
      %v2697 = vsel %vm2506, %v2695, %v2696
      %v2698 = vrot.slane %v2696, 2
      %v2699 = vrot.slane %v2385, 7
      %v2700 = vsel %vm2506, %v2698, %v2699
      %v2701 = vrot.slane %v2699, 2
      %v2702 = vrot.slane %v2386, 7
      %v2703 = vsel %vm2506, %v2701, %v2702
      %v2704 = vrot.slane %v2702, 2
      %v2705 = vrot.slane %v2387, 7
      %v2706 = vsel %vm2506, %v2704, %v2705
      %v2771 = vadd.f32 %v1818, %v2510
      %v2772 = vadd.f32 %v2220, %v2513
      %v2773 = vadd.f32 %v2221, %v2516
      %v2774 = vadd.f32 %v2222, %v2519
      %v2775 = vadd.f32 %v1819, %v2522
      %v2776 = vadd.f32 %v2223, %v2525
      %v2777 = vadd.f32 %v2224, %v2528
      %v2778 = vadd.f32 %v2225, %v2531
      %v2779 = vadd.f32 %v2226, %v2535
      %v2780 = vadd.f32 %v2227, %v2538
      %v2781 = vadd.f32 %v2228, %v2541
      %v2782 = vadd.f32 %v1821, %v2544
      %v2783 = vadd.f32 %v2229, %v2547
      %v2784 = vadd.f32 %v2230, %v2550
      %v2785 = vadd.f32 %v2231, %v2553
      %v2786 = vadd.f32 %v1822, %v2556
      %v2787 = vadd.f32 %v2232, %v2560
      %v2788 = vadd.f32 %v2233, %v2563
      %v2789 = vadd.f32 %v1823, %v2566
      %v2790 = vadd.f32 %v2234, %v2569
      %v2791 = vadd.f32 %v2235, %v2572
      %v2792 = vadd.f32 %v2236, %v2575
      %v2793 = vadd.f32 %v1824, %v2578
      %v2794 = vadd.f32 %v2237, %v2581
      %v2795 = vadd.f32 %v2238, %v2585
      %v2796 = vadd.f32 %v1825, %v2588
      %v2797 = vadd.f32 %v2239, %v2591
      %v2798 = vadd.f32 %v2240, %v2594
      %v2799 = vadd.f32 %v2241, %v2597
      %v2800 = vadd.f32 %v1826, %v2600
      %v2801 = vadd.f32 %v2242, %v2603
      %v2802 = vadd.f32 %v2243, %v2606
      %v2803 = vadd.f32 %v1827, %v2610
      %v2804 = vadd.f32 %v2244, %v2613
      %v2805 = vadd.f32 %v2245, %v2616
      %v2806 = vadd.f32 %v2246, %v2619
      %v2807 = vadd.f32 %v1828, %v2622
      %v2808 = vadd.f32 %v2247, %v2625
      %v2809 = vadd.f32 %v2248, %v2628
      %v2810 = vadd.f32 %v2249, %v2631
      %v2811 = vadd.f32 %v2250, %v2635
      %v2812 = vadd.f32 %v2251, %v2638
      %v2813 = vadd.f32 %v2252, %v2641
      %v2814 = vadd.f32 %v1830, %v2644
      %v2815 = vadd.f32 %v2253, %v2647
      %v2816 = vadd.f32 %v2254, %v2650
      %v2817 = vadd.f32 %v2255, %v2653
      %v2818 = vadd.f32 %v1831, %v2656
      %v2819 = vadd.f32 %v2256, %v2660
      %v2820 = vadd.f32 %v2257, %v2663
      %v2821 = vadd.f32 %v1832, %v2666
      %v2822 = vadd.f32 %v2258, %v2669
      %v2823 = vadd.f32 %v2259, %v2672
      %v2824 = vadd.f32 %v2260, %v2675
      %v2825 = vadd.f32 %v1833, %v2678
      %v2826 = vadd.f32 %v2261, %v2681
      %v2827 = vadd.f32 %v2262, %v2685
      %v2828 = vadd.f32 %v1834, %v2688
      %v2829 = vadd.f32 %v2263, %v2691
      %v2830 = vadd.f32 %v2264, %v2694
      %v2831 = vadd.f32 %v2265, %v2697
      %v2832 = vadd.f32 %v1835, %v2700
      %v2833 = vadd.f32 %v2266, %v2703
      %v2834 = vadd.f32 %v2267, %v2706
      %v2835 = vadd.f32 %v2771, %v2406
      %v2836 = vadd.f32 %v2772, %v2407
      %v2837 = vadd.f32 %v2773, %v2408
      %v2838 = vadd.f32 %v2774, %v2185
      %v2839 = vadd.f32 %v2775, %v2409
      %v2840 = vadd.f32 %v2776, %v2410
      %v2841 = vadd.f32 %v2777, %v2411
      %v2842 = vadd.f32 %v2778, %v2186
      %v2843 = vadd.f32 %v2779, %v2412
      %v2844 = vadd.f32 %v2780, %v2413
      %v2845 = vadd.f32 %v2781, %v2187
      %v2846 = vadd.f32 %v2782, %v2414
      %v2847 = vadd.f32 %v2783, %v2415
      %v2848 = vadd.f32 %v2784, %v2416
      %v2849 = vadd.f32 %v2785, %v2188
      %v2850 = vadd.f32 %v2786, %v2417
      %v2851 = vadd.f32 %v2787, %v2418
      %v2852 = vadd.f32 %v2788, %v2189
      %v2853 = vadd.f32 %v2789, %v2419
      %v2854 = vadd.f32 %v2790, %v2420
      %v2855 = vadd.f32 %v2791, %v2421
      %v2856 = vadd.f32 %v2792, %v2190
      %v2857 = vadd.f32 %v2793, %v2422
      %v2858 = vadd.f32 %v2794, %v2423
      %v2859 = vadd.f32 %v2795, %v2191
      %v2860 = vadd.f32 %v2796, %v2424
      %v2861 = vadd.f32 %v2797, %v2425
      %v2862 = vadd.f32 %v2798, %v2426
      %v2863 = vadd.f32 %v2799, %v2192
      %v2864 = vadd.f32 %v2800, %v2427
      %v2865 = vadd.f32 %v2801, %v2428
      %v2866 = vadd.f32 %v2802, %v2429
      %v2867 = vadd.f32 %v2803, %v2430
      %v2868 = vadd.f32 %v2804, %v2431
      %v2869 = vadd.f32 %v2805, %v2432
      %v2870 = vadd.f32 %v2806, %v2194
      %v2871 = vadd.f32 %v2807, %v2433
      %v2872 = vadd.f32 %v2808, %v2434
      %v2873 = vadd.f32 %v2809, %v2435
      %v2874 = vadd.f32 %v2810, %v2195
      %v2875 = vadd.f32 %v2811, %v2436
      %v2876 = vadd.f32 %v2812, %v2437
      %v2877 = vadd.f32 %v2813, %v2196
      %v2878 = vadd.f32 %v2814, %v2438
      %v2879 = vadd.f32 %v2815, %v2439
      %v2880 = vadd.f32 %v2816, %v2440
      %v2881 = vadd.f32 %v2817, %v2197
      %v2882 = vadd.f32 %v2818, %v2441
      %v2883 = vadd.f32 %v2819, %v2442
      %v2884 = vadd.f32 %v2820, %v2198
      %v2885 = vadd.f32 %v2821, %v2443
      %v2886 = vadd.f32 %v2822, %v2444
      %v2887 = vadd.f32 %v2823, %v2445
      %v2888 = vadd.f32 %v2824, %v2199
      %v2889 = vadd.f32 %v2825, %v2446
      %v2890 = vadd.f32 %v2826, %v2447
      %v2891 = vadd.f32 %v2827, %v2200
      %v2892 = vadd.f32 %v2828, %v2448
      %v2893 = vadd.f32 %v2829, %v2449
      %v2894 = vadd.f32 %v2830, %v2450
      %v2895 = vadd.f32 %v2831, %v2201
      %v2896 = vadd.f32 %v2832, %v2451
      %v2897 = vadd.f32 %v2833, %v2452
      %v2898 = vadd.f32 %v2834, %v2453
      %v2899 = vld [vmem:[%s2] sm:$0x1]
      %v2901 = vperm.slane %v2899, 0
      %v2903 = vrot.slane %v2901, 2
      %v2904 = vrot.slane %v2901, 4
      %v2905 = vrot.slane %v2901, 6
      %v2909 = vmul.f32 %v2835, %v2901
      %v2910 = vmul.f32 %v2836, %v2903
      %v2911 = vmul.f32 %v2837, %v2904
      %v2912 = vmul.f32 %v2838, %v2905
      %v2913 = vmul.f32 %v2839, %v2901
      %v2914 = vmul.f32 %v2840, %v2903
      %v2915 = vmul.f32 %v2841, %v2904
      %v2916 = vmul.f32 %v2842, %v2905
      %v2917 = vmul.f32 %v2843, %v2901
      %v2918 = vmul.f32 %v2844, %v2903
      %v2919 = vmul.f32 %v2845, %v2904
      %v2920 = vmul.f32 %v2846, %v2905
      %v2921 = vmul.f32 %v2847, %v2901
      %v2922 = vmul.f32 %v2848, %v2903
      %v2923 = vmul.f32 %v2849, %v2904
      %v2924 = vmul.f32 %v2850, %v2905
      %v2925 = vmul.f32 %v2851, %v2901
      %v2926 = vmul.f32 %v2852, %v2903
      %v2927 = vmul.f32 %v2853, %v2904
      %v2928 = vmul.f32 %v2854, %v2905
      %v2929 = vmul.f32 %v2855, %v2901
      %v2930 = vmul.f32 %v2856, %v2903
      %v2931 = vmul.f32 %v2857, %v2904
      %v2932 = vmul.f32 %v2858, %v2905
      %v2933 = vmul.f32 %v2859, %v2901
      %v2934 = vmul.f32 %v2860, %v2903
      %v2935 = vmul.f32 %v2861, %v2904
      %v2936 = vmul.f32 %v2862, %v2905
      %v2937 = vmul.f32 %v2863, %v2901
      %v2938 = vmul.f32 %v2864, %v2903
      %v2939 = vmul.f32 %v2865, %v2904
      %v2940 = vmul.f32 %v2866, %v2905
      %v2941 = vmul.f32 %v2867, %v2901
      %v2942 = vmul.f32 %v2868, %v2903
      %v2943 = vmul.f32 %v2869, %v2904
      %v2944 = vmul.f32 %v2870, %v2905
      %v2945 = vmul.f32 %v2871, %v2901
      %v2946 = vmul.f32 %v2872, %v2903
      %v2947 = vmul.f32 %v2873, %v2904
      %v2948 = vmul.f32 %v2874, %v2905
      %v2949 = vmul.f32 %v2875, %v2901
      %v2950 = vmul.f32 %v2876, %v2903
      %v2951 = vmul.f32 %v2877, %v2904
      %v2952 = vmul.f32 %v2878, %v2905
      %v2953 = vmul.f32 %v2879, %v2901
      %v2954 = vmul.f32 %v2880, %v2903
      %v2955 = vmul.f32 %v2881, %v2904
      %v2956 = vmul.f32 %v2882, %v2905
      %v2957 = vmul.f32 %v2883, %v2901
      %v2958 = vmul.f32 %v2884, %v2903
      %v2959 = vmul.f32 %v2885, %v2904
      %v2960 = vmul.f32 %v2886, %v2905
      %v2961 = vmul.f32 %v2887, %v2901
      %v2962 = vmul.f32 %v2888, %v2903
      %v2963 = vmul.f32 %v2889, %v2904
      %v2964 = vmul.f32 %v2890, %v2905
      %v2965 = vmul.f32 %v2891, %v2901
      %v2966 = vmul.f32 %v2892, %v2903
      %v2967 = vmul.f32 %v2893, %v2904
      %v2968 = vmul.f32 %v2894, %v2905
      %v2969 = vmul.f32 %v2895, %v2901
      %v2970 = vmul.f32 %v2896, %v2903
      %v2971 = vmul.f32 %v2897, %v2904
      %v2972 = vmul.f32 %v2898, %v2905
      %v2973 = vld [vmem:[%s3] sm:$0x1]
      %v2975 = vperm.slane %v2973, 0
      %v2977 = vrot.slane %v2975, 2
      %v2978 = vrot.slane %v2975, 4
      %v2979 = vrot.slane %v2975, 6
      %v2983 = vadd.f32 %v2909, %v2975
      %v2984 = vadd.f32 %v2910, %v2977
      %v2985 = vadd.f32 %v2911, %v2978
      %v2986 = vadd.f32 %v2912, %v2979
      %v2987 = vadd.f32 %v2913, %v2975
      %v2988 = vadd.f32 %v2914, %v2977
      %v2989 = vadd.f32 %v2915, %v2978
      %v2990 = vadd.f32 %v2916, %v2979
      %v2991 = vadd.f32 %v2917, %v2975
      %v2992 = vadd.f32 %v2918, %v2977
      %v2993 = vadd.f32 %v2919, %v2978
      %v2994 = vadd.f32 %v2920, %v2979
      %v2995 = vadd.f32 %v2921, %v2975
      %v2996 = vadd.f32 %v2922, %v2977
      %v2997 = vadd.f32 %v2923, %v2978
      %v2998 = vadd.f32 %v2924, %v2979
      %v2999 = vadd.f32 %v2925, %v2975
      %v3000 = vadd.f32 %v2926, %v2977
      %v3001 = vadd.f32 %v2927, %v2978
      %v3002 = vadd.f32 %v2928, %v2979
      %v3003 = vadd.f32 %v2929, %v2975
      %v3004 = vadd.f32 %v2930, %v2977
      %v3005 = vadd.f32 %v2931, %v2978
      %v3006 = vadd.f32 %v2932, %v2979
      %v3007 = vadd.f32 %v2933, %v2975
      %v3008 = vadd.f32 %v2934, %v2977
      %v3009 = vadd.f32 %v2935, %v2978
      %v3010 = vadd.f32 %v2936, %v2979
      %v3011 = vadd.f32 %v2937, %v2975
      %v3012 = vadd.f32 %v2938, %v2977
      %v3013 = vadd.f32 %v2939, %v2978
      %v3014 = vadd.f32 %v2940, %v2979
      %v3015 = vadd.f32 %v2941, %v2975
      %v3016 = vadd.f32 %v2942, %v2977
      %v3017 = vadd.f32 %v2943, %v2978
      %v3018 = vadd.f32 %v2944, %v2979
      %v3019 = vadd.f32 %v2945, %v2975
      %v3020 = vadd.f32 %v2946, %v2977
      %v3021 = vadd.f32 %v2947, %v2978
      %v3022 = vadd.f32 %v2948, %v2979
      %v3023 = vadd.f32 %v2949, %v2975
      %v3024 = vadd.f32 %v2950, %v2977
      %v3025 = vadd.f32 %v2951, %v2978
      %v3026 = vadd.f32 %v2952, %v2979
      %v3027 = vadd.f32 %v2953, %v2975
      %v3028 = vadd.f32 %v2954, %v2977
      %v3029 = vadd.f32 %v2955, %v2978
      %v3030 = vadd.f32 %v2956, %v2979
      %v3031 = vadd.f32 %v2957, %v2975
      %v3032 = vadd.f32 %v2958, %v2977
      %v3033 = vadd.f32 %v2959, %v2978
      %v3034 = vadd.f32 %v2960, %v2979
      %v3035 = vadd.f32 %v2961, %v2975
      %v3036 = vadd.f32 %v2962, %v2977
      %v3037 = vadd.f32 %v2963, %v2978
      %v3038 = vadd.f32 %v2964, %v2979
      %v3039 = vadd.f32 %v2965, %v2975
      %v3040 = vadd.f32 %v2966, %v2977
      %v3041 = vadd.f32 %v2967, %v2978
      %v3042 = vadd.f32 %v2968, %v2979
      %v3043 = vadd.f32 %v2969, %v2975
      %v3044 = vadd.f32 %v2970, %v2977
      %v3045 = vadd.f32 %v2971, %v2978
      %v3046 = vadd.f32 %v2972, %v2979
      %v3047 = vmax.f32 %v2983, 0.0
      %v3048 = vmax.f32 %v2984, 0.0
      %v3049 = vmax.f32 %v2985, 0.0
      %v3050 = vmax.f32 %v2986, 0.0
      %v3051 = vmax.f32 %v2987, 0.0
      %v3052 = vmax.f32 %v2988, 0.0
      %v3053 = vmax.f32 %v2989, 0.0
      %v3054 = vmax.f32 %v2990, 0.0
      %v3055 = vmax.f32 %v2991, 0.0
      %v3056 = vmax.f32 %v2992, 0.0
      %v3057 = vmax.f32 %v2993, 0.0
      %v3058 = vmax.f32 %v2994, 0.0
      %v3059 = vmax.f32 %v2995, 0.0
      %v3060 = vmax.f32 %v2996, 0.0
      %v3061 = vmax.f32 %v2997, 0.0
      %v3062 = vmax.f32 %v2998, 0.0
      %v3063 = vmax.f32 %v2999, 0.0
      %v3064 = vmax.f32 %v3000, 0.0
      %v3065 = vmax.f32 %v3001, 0.0
      %v3066 = vmax.f32 %v3002, 0.0
      %v3067 = vmax.f32 %v3003, 0.0
      %v3068 = vmax.f32 %v3004, 0.0
      %v3069 = vmax.f32 %v3005, 0.0
      %v3070 = vmax.f32 %v3006, 0.0
      %v3071 = vmax.f32 %v3007, 0.0
      %v3072 = vmax.f32 %v3008, 0.0
      %v3073 = vmax.f32 %v3009, 0.0
      %v3074 = vmax.f32 %v3010, 0.0
      %v3075 = vmax.f32 %v3011, 0.0
      %v3076 = vmax.f32 %v3012, 0.0
      %v3077 = vmax.f32 %v3013, 0.0
      %v3078 = vmax.f32 %v3014, 0.0
      %v3079 = vmax.f32 %v3015, 0.0
      %v3080 = vmax.f32 %v3016, 0.0
      %v3081 = vmax.f32 %v3017, 0.0
      %v3082 = vmax.f32 %v3018, 0.0
      %v3083 = vmax.f32 %v3019, 0.0
      %v3084 = vmax.f32 %v3020, 0.0
      %v3085 = vmax.f32 %v3021, 0.0
      %v3086 = vmax.f32 %v3022, 0.0
      %v3087 = vmax.f32 %v3023, 0.0
      %v3088 = vmax.f32 %v3024, 0.0
      %v3089 = vmax.f32 %v3025, 0.0
      %v3090 = vmax.f32 %v3026, 0.0
      %v3091 = vmax.f32 %v3027, 0.0
      %v3092 = vmax.f32 %v3028, 0.0
      %v3093 = vmax.f32 %v3029, 0.0
      %v3094 = vmax.f32 %v3030, 0.0
      %v3095 = vmax.f32 %v3031, 0.0
      %v3096 = vmax.f32 %v3032, 0.0
      %v3097 = vmax.f32 %v3033, 0.0
      %v3098 = vmax.f32 %v3034, 0.0
      %v3099 = vmax.f32 %v3035, 0.0
      %v3100 = vmax.f32 %v3036, 0.0
      %v3101 = vmax.f32 %v3037, 0.0
      %v3102 = vmax.f32 %v3038, 0.0
      %v3103 = vmax.f32 %v3039, 0.0
      %v3104 = vmax.f32 %v3040, 0.0
      %v3105 = vmax.f32 %v3041, 0.0
      %v3106 = vmax.f32 %v3042, 0.0
      %v3107 = vmax.f32 %v3043, 0.0
      %v3108 = vmax.f32 %v3044, 0.0
      %v3109 = vmax.f32 %v3045, 0.0
      %v3110 = vmax.f32 %v3046, 0.0
      %3175 = vst [vmem:[#allocation1] ss:$4 sm:$0xff] %v3047
      %s3176 = scalar_lea.vmem [#allocation1], 1
      %3177 = vst [vmem:[%s3176] ss:$4 sm:$0xff] %v3048
      %s3178 = scalar_lea.vmem [#allocation1], 2
      %3179 = vst [vmem:[%s3178] ss:$4 sm:$0xff] %v3049
      %s3180 = scalar_lea.vmem [#allocation1], 3
      %3181 = vst [vmem:[%s3180] ss:$4 sm:$0xff] %v3050
      %s3182 = scalar_lea.vmem [#allocation1], 32
      %3183 = vst [vmem:[%s3182] ss:$4 sm:$0xff] %v3051
      %s3184 = scalar_lea.vmem [#allocation1], 33
      %3185 = vst [vmem:[%s3184] ss:$4 sm:$0xff] %v3052
      %s3186 = scalar_lea.vmem [#allocation1], 34
      %3187 = vst [vmem:[%s3186] ss:$4 sm:$0xff] %v3053
      %s3188 = scalar_lea.vmem [#allocation1], 35
      %3189 = vst [vmem:[%s3188] ss:$4 sm:$0xff] %v3054
      %v3190 = vld.sshfl [vmem:[#allocation1] sm:$0xff pattern:$0x73625140]
      %v3191 = vld.sshfl [vmem:[#allocation1 + $0x20] sm:$0xff pattern:$0x73625140]
      %3192 = vst [vmem:[#allocation1] ss:$4 sm:$0xff] %v3055
      %3193 = vst [vmem:[%s3176] ss:$4 sm:$0xff] %v3056
      %3194 = vst [vmem:[%s3178] ss:$4 sm:$0xff] %v3057
      %3195 = vst [vmem:[%s3180] ss:$4 sm:$0xff] %v3058
      %3196 = vst [vmem:[%s3182] ss:$4 sm:$0xff] %v3059
      %3197 = vst [vmem:[%s3184] ss:$4 sm:$0xff] %v3060
      %3198 = vst [vmem:[%s3186] ss:$4 sm:$0xff] %v3061
      %3199 = vst [vmem:[%s3188] ss:$4 sm:$0xff] %v3062
      %v3200 = vld.sshfl [vmem:[#allocation1] sm:$0xff pattern:$0x73625140]
      %v3201 = vld.sshfl [vmem:[#allocation1 + $0x20] sm:$0xff pattern:$0x73625140]
      %3202 = vst [vmem:[#allocation1] ss:$4 sm:$0xff] %v3063
      %3203 = vst [vmem:[%s3176] ss:$4 sm:$0xff] %v3064
      %3204 = vst [vmem:[%s3178] ss:$4 sm:$0xff] %v3065
      %3205 = vst [vmem:[%s3180] ss:$4 sm:$0xff] %v3066
      %3206 = vst [vmem:[%s3182] ss:$4 sm:$0xff] %v3067
      %3207 = vst [vmem:[%s3184] ss:$4 sm:$0xff] %v3068
      %3208 = vst [vmem:[%s3186] ss:$4 sm:$0xff] %v3069
      %3209 = vst [vmem:[%s3188] ss:$4 sm:$0xff] %v3070
      %v3210 = vld.sshfl [vmem:[#allocation1] sm:$0xff pattern:$0x73625140]
      %v3211 = vld.sshfl [vmem:[#allocation1 + $0x20] sm:$0xff pattern:$0x73625140]
      %3212 = vst [vmem:[#allocation1] ss:$4 sm:$0xff] %v3071
      %3213 = vst [vmem:[%s3176] ss:$4 sm:$0xff] %v3072
      %3214 = vst [vmem:[%s3178] ss:$4 sm:$0xff] %v3073
      %3215 = vst [vmem:[%s3180] ss:$4 sm:$0xff] %v3074
      %3216 = vst [vmem:[%s3182] ss:$4 sm:$0xff] %v3075
      %3217 = vst [vmem:[%s3184] ss:$4 sm:$0xff] %v3076
      %3218 = vst [vmem:[%s3186] ss:$4 sm:$0xff] %v3077
      %3219 = vst [vmem:[%s3188] ss:$4 sm:$0xff] %v3078
      %v3220 = vld.sshfl [vmem:[#allocation1] sm:$0xff pattern:$0x73625140]
      %v3221 = vld.sshfl [vmem:[#allocation1 + $0x20] sm:$0xff pattern:$0x73625140]
      %3222 = vst [vmem:[#allocation1] ss:$4 sm:$0xff] %v3079
      %3223 = vst [vmem:[%s3176] ss:$4 sm:$0xff] %v3080
      %3224 = vst [vmem:[%s3178] ss:$4 sm:$0xff] %v3081
      %3225 = vst [vmem:[%s3180] ss:$4 sm:$0xff] %v3082
      %3226 = vst [vmem:[%s3182] ss:$4 sm:$0xff] %v3083
      %3227 = vst [vmem:[%s3184] ss:$4 sm:$0xff] %v3084
      %3228 = vst [vmem:[%s3186] ss:$4 sm:$0xff] %v3085
      %3229 = vst [vmem:[%s3188] ss:$4 sm:$0xff] %v3086
      %v3230 = vld.sshfl [vmem:[#allocation1] sm:$0xff pattern:$0x73625140]
      %v3231 = vld.sshfl [vmem:[#allocation1 + $0x20] sm:$0xff pattern:$0x73625140]
      %3232 = vst [vmem:[#allocation1] ss:$4 sm:$0xff] %v3087
      %3233 = vst [vmem:[%s3176] ss:$4 sm:$0xff] %v3088
      %3234 = vst [vmem:[%s3178] ss:$4 sm:$0xff] %v3089
      %3235 = vst [vmem:[%s3180] ss:$4 sm:$0xff] %v3090
      %3236 = vst [vmem:[%s3182] ss:$4 sm:$0xff] %v3091
      %3237 = vst [vmem:[%s3184] ss:$4 sm:$0xff] %v3092
      %3238 = vst [vmem:[%s3186] ss:$4 sm:$0xff] %v3093
      %3239 = vst [vmem:[%s3188] ss:$4 sm:$0xff] %v3094
      %v3240 = vld.sshfl [vmem:[#allocation1] sm:$0xff pattern:$0x73625140]
      %v3241 = vld.sshfl [vmem:[#allocation1 + $0x20] sm:$0xff pattern:$0x73625140]
      %3242 = vst [vmem:[#allocation1] ss:$4 sm:$0xff] %v3095
      %3243 = vst [vmem:[%s3176] ss:$4 sm:$0xff] %v3096
      %3244 = vst [vmem:[%s3178] ss:$4 sm:$0xff] %v3097
      %3245 = vst [vmem:[%s3180] ss:$4 sm:$0xff] %v3098
      %3246 = vst [vmem:[%s3182] ss:$4 sm:$0xff] %v3099
      %3247 = vst [vmem:[%s3184] ss:$4 sm:$0xff] %v3100
      %3248 = vst [vmem:[%s3186] ss:$4 sm:$0xff] %v3101
      %3249 = vst [vmem:[%s3188] ss:$4 sm:$0xff] %v3102
      %v3250 = vld.sshfl [vmem:[#allocation1] sm:$0xff pattern:$0x73625140]
      %v3251 = vld.sshfl [vmem:[#allocation1 + $0x20] sm:$0xff pattern:$0x73625140]
      %3252 = vst [vmem:[#allocation1] ss:$4 sm:$0xff] %v3103
      %3253 = vst [vmem:[%s3176] ss:$4 sm:$0xff] %v3104
      %3254 = vst [vmem:[%s3178] ss:$4 sm:$0xff] %v3105
      %3255 = vst [vmem:[%s3180] ss:$4 sm:$0xff] %v3106
      %3256 = vst [vmem:[%s3182] ss:$4 sm:$0xff] %v3107
      %3257 = vst [vmem:[%s3184] ss:$4 sm:$0xff] %v3108
      %3258 = vst [vmem:[%s3186] ss:$4 sm:$0xff] %v3109
      %3259 = vst [vmem:[%s3188] ss:$4 sm:$0xff] %v3110
      %v3260 = vld.sshfl [vmem:[#allocation1] sm:$0xff pattern:$0x73625140]
      %v3261 = vld.sshfl [vmem:[#allocation1 + $0x20] sm:$0xff pattern:$0x73625140]
      %v3278 = vpack.c.bf16 %v3190, %v3190
      %v3279 = vpack.c.bf16 %v3191, %v3191
      %v3280 = vpack.c.bf16 %v3200, %v3200
      %v3281 = vpack.c.bf16 %v3201, %v3201
      %v3282 = vpack.c.bf16 %v3210, %v3210
      %v3283 = vpack.c.bf16 %v3211, %v3211
      %v3284 = vpack.c.bf16 %v3220, %v3220
      %v3285 = vpack.c.bf16 %v3221, %v3221
      %v3286 = vpack.c.bf16 %v3230, %v3230
      %v3287 = vpack.c.bf16 %v3231, %v3231
      %v3288 = vpack.c.bf16 %v3240, %v3240
      %v3289 = vpack.c.bf16 %v3241, %v3241
      %v3290 = vpack.c.bf16 %v3250, %v3250
      %v3291 = vpack.c.bf16 %v3251, %v3251
      %v3292 = vpack.c.bf16 %v3260, %v3260
      %v3293 = vpack.c.bf16 %v3261, %v3261
      %vm3294 = vcmask 60416
      %3295 = vst.msk [vmem:[%s235] sm:$0xf] %vm3294, %v3278
      %3296 = vst.msk [vmem:[%s235 + $0x4] sm:$0xf] %vm3294, %v3279
      %3297 = vst.msk [vmem:[%s235 + $0x8] sm:$0xf] %vm3294, %v3280
      %3298 = vst.msk [vmem:[%s235 + $0xc] sm:$0xf] %vm3294, %v3281
      %3299 = vst.msk [vmem:[%s235 + $0x10] sm:$0xf] %vm3294, %v3282
      %3300 = vst.msk [vmem:[%s235 + $0x14] sm:$0xf] %vm3294, %v3283
      %3301 = vst.msk [vmem:[%s235 + $0x18] sm:$0xf] %vm3294, %v3284
      %3302 = vst.msk [vmem:[%s235 + $0x1c] sm:$0xf] %vm3294, %v3285
      %3303 = vst.msk [vmem:[%s235 + $0x20] sm:$0xf] %vm3294, %v3286
      %3304 = vst.msk [vmem:[%s235 + $0x24] sm:$0xf] %vm3294, %v3287
      %3305 = vst.msk [vmem:[%s235 + $0x28] sm:$0xf] %vm3294, %v3288
      %3306 = vst.msk [vmem:[%s235 + $0x2c] sm:$0xf] %vm3294, %v3289
      %3307 = vst.msk [vmem:[%s235 + $0x30] sm:$0xf] %vm3294, %v3290
      %3308 = vst.msk [vmem:[%s235 + $0x34] sm:$0xf] %vm3294, %v3291
      %3309 = vst.msk [vmem:[%s235 + $0x38] sm:$0xf] %vm3294, %v3292
      %3310 = vst.msk [vmem:[%s235 + $0x3c] sm:$0xf] %vm3294, %v3293
      %s3311 = smul.u32 8, %s20
      %p3312 = scmp.lt.s32.totalorder %s19, 1
      %s3313 = scalar_select %p3312, %s19, 1
      %p3314 = scmp.lt.s32.totalorder %s3311, 15
      %s3315 = scalar_select %p3314, %s3311, 15
      %s3316 = smul.addr %s3315, 2
      %s3317 = smul.addr %s3313, 32
      %s3318 = sadd.s32 %s3316, %s3317
      %s3319 = smul.addr %s3318, 4
      %s3320 = scalar_lea.vmem %s4, %s3319
      // Predicated region
      $region37: #{dappm_forward.9} parent=35 // pred_check
        %p3321 = pneg %p138
      $region38: #{dappm_forward.9} parent=35 // pred_check_branch
        %3323 = sbr.rel (%p3321) target = $region40
      $region39: #{dappm_forward.9} parent=35 // pred_region
        %s3324 = smul.u32 8, %s20
      $region40: #{dappm_forward.9} parent=35 // pred_fallthru
        _
    $region36: #{dappm_forward.9} parent=5 // pred_fallthru
      _
    %p3325 = scmp.le.s32.totalorder 2, %s10
    // Predicated region
    $region41: #{dappm_forward.9} parent=5 // pred_check
      %p3326 = pneg %p3325
    $region42: #{dappm_forward.9} parent=5 // pred_check_branch
      %3328 = sbr.rel (%p3326) target = $region44
    $region43: #{dappm_forward.9} parent=5 // pred_region
      %s3329 = ssub.s32 %s10, 2
      // Predicated region
      $region45: #{dappm_forward.9} parent=43 // pred_check
        %p3330 = pneg %p144
      $region46: #{dappm_forward.9} parent=43 // pred_check_branch
        %3332 = sbr.rel (%p3330) target = $region48
      $region47: #{dappm_forward.9} parent=43 // pred_region
        %s3333 = smul.u32 8, %s22
        %p3334 = scmp.lt.s32.totalorder %s21, 1
        %s3335 = scalar_select %p3334, %s21, 1
        %p3336 = scmp.lt.s32.totalorder %s3333, 15
        %s3337 = scalar_select %p3336, %s3333, 15
        %s3338 = smul.addr %s3337, 2
        %s3339 = smul.addr %s3335, 32
        %s3340 = sadd.s32 %s3338, %s3339
        %s3341 = smul.addr %s3340, 4
        %s3342 = scalar_lea.vmem %s4, %s3341
      $region48: #{dappm_forward.9} parent=43 // pred_fallthru
        _
    $region44: #{dappm_forward.9} parent=5 // pred_fallthru
      _
  $region6: #{dappm_forward.9} parent=0 // loop_footer
    %s14 = sadd.s32 1, %s10
  $region7: #{dappm_forward.9} parent=0 // loop_footer_branch
    %9 = sbr.rel target = $region3
  $region8: #{dappm_forward.9} parent=0 // loop_exit
    _

</llo_original>
